<compile_context>
chip_gen: v7x
topology: tpu7x:2x2x1
jax: 0.10.0
libtpu: 0.0.40
codegen_flags: <defaults>
</compile_context>

<pallas_src>
import math

import jax
import jax.numpy as jnp
import numpy as np
from jax.experimental import pallas as pl
from jax.experimental.pallas import tpu as pltpu


# ----------------------------- config -----------------------------

class Cfg:
    vocab_size = 100
    max_pos = 32
    type_vocab = 2
    text_hidden = 32
    text_layers = 2
    text_heads = 2
    text_ffn = 64
    img_size = 16
    img_channels = 3
    patch = 8
    vit_hidden = 32
    vit_layers = 2
    vit_heads = 2
    vit_ffn = 64
    n_classes = 3
    ln_eps = 1e-12
    # lane-padded sizes (everything the MXU / stores touch is 128 lanes wide)
    HP = 128   # padded hidden
    FP = 128   # padded ffn
    CP = 128   # padded classes


LAYER_KEYS = ("w_qkv", "b_qkv", "w_o", "b_o", "ln1_g", "ln1_b",
              "w_i", "b_i", "w_fo", "b_fo", "ln2_g", "ln2_b")


# ----------------------------- in-kernel math helpers -----------------------------

def _gelu(x):
    # TODO(synk): PyTorch nn.GELU default is the exact erf form; tanh approximation used here
    # (matches BERT's original gelu; difference is ~1e-3).
    return 0.5 * x * (1.0 + jnp.tanh(0.7978845608028654 * (x + 0.044715 * x * x * x)))


def _ln(x, g, b, inv_h, eps):
    """LayerNorm over the last (lane-padded) axis.  Padded lanes of x are zero, so
    sum(x)/H and sum(x^2)/H are the true statistics; zero-padded gamma/beta keep
    the padded lanes exactly zero in the output."""
    mu = jnp.sum(x, axis=-1, keepdims=True) * inv_h
    ms = jnp.sum(x * x, axis=-1, keepdims=True) * inv_h
    var = ms - mu * mu
    return (x - mu) * jax.lax.rsqrt(var + eps) * g + b


def _mha(x, mask, wd, *, nh, hd, H, S, B):
    """Batched multi-head self-attention on the folded [B*S, HP] slab.

    All (head, batch) pairs are stacked along the sublane axis, so the whole layer's attention
    is one QK^T ([nh*B*S, nh*B*S]) and one PV matmul; `mask` is the precomputed block-diagonal
    additive mask (cross-block = -1e9, within-block = key-padding mask)."""
    scale = 1.0 / math.sqrt(hd)
    qkv = jnp.dot(x.astype(jnp.bfloat16), wd["w_qkv"],
                  preferred_element_type=jnp.float32) + wd["b_qkv"]          # [B*S, HP]
    q = jnp.concatenate([qkv[:, h * hd:(h + 1) * hd] for h in range(nh)],
                        axis=0).astype(jnp.bfloat16)                         # [nh*B*S, hd]
    k = jnp.concatenate([qkv[:, H + h * hd:H + (h + 1) * hd] for h in range(nh)],
                        axis=0).astype(jnp.bfloat16)
    v = jnp.concatenate([qkv[:, 2 * H + h * hd:2 * H + (h + 1) * hd] for h in range(nh)],
                        axis=0).astype(jnp.bfloat16)
    s = jax.lax.dot_general(q, k, (((1,), (1,)), ((), ())),
                            preferred_element_type=jnp.float32) * scale      # [nh*B*S, nh*B*S]
    s = s + mask
    s = s - jnp.max(s, axis=-1, keepdims=True)
    p = jnp.exp(s)
    p = p * pl.reciprocal(jnp.sum(p, axis=-1, keepdims=True), approx=True)
    ctx = jnp.dot(p.astype(jnp.bfloat16), v, preferred_element_type=jnp.float32)   # [nh*B*S, hd]
    ctx_cat = jnp.concatenate([ctx[h * B * S:(h + 1) * B * S, :] for h in range(nh)],
                              axis=1)                                        # [B*S, H]
    return jnp.dot(ctx_cat.astype(jnp.bfloat16), wd["w_o"],
                   preferred_element_type=jnp.float32) + wd["b_o"]           # [B*S, HP]


def _ffn(x, wd):
    ff = jnp.dot(x.astype(jnp.bfloat16), wd["w_i"],
                 preferred_element_type=jnp.float32) + wd["b_i"]
    ff = _gelu(ff)
    return jnp.dot(ff.astype(jnp.bfloat16), wd["w_fo"],
                   preferred_element_type=jnp.float32) + wd["b_fo"]


def _transformer_layer(x, mask, wd, *, nh, hd, H, S, B, pre_ln, inv_h, eps):
    if pre_ln:   # ViT style
        x = x + _mha(_ln(x, wd["ln1_g"], wd["ln1_b"], inv_h, eps), mask, wd,
                     nh=nh, hd=hd, H=H, S=S, B=B)
        x = x + _ffn(_ln(x, wd["ln2_g"], wd["ln2_b"], inv_h, eps), wd)
    else:        # BERT post-LN style
        x = _ln(x + _mha(x, mask, wd, nh=nh, hd=hd, H=H, S=S, B=B),
                wd["ln1_g"], wd["ln1_b"], inv_h, eps)
        x = _ln(x + _ffn(x, wd), wd["ln2_g"], wd["ln2_b"], inv_h, eps)
    return x


# ----------------------------- the single fused kernel -----------------------------

def _make_fused_kernel(cfg, B, S, SV):
    Ht, Hv = cfg.text_hidden, cfg.vit_hidden
    nh_t, nh_v = cfg.text_heads, cfg.vit_heads
    hd_t, hd_v = Ht // nh_t, Hv // nh_v
    Lt, Lv = cfg.text_layers, cfg.vit_layers
    eps = cfg.ln_eps
    n_lw = len(LAYER_KEYS)

    def kernel(*refs):
        it = iter(refs)
        # --- BERT inputs ---
        xb_ref = next(it); mb_ref = next(it); eg_ref = next(it); eb_ref = next(it)
        bert_lw = [next(it) for _ in range(n_lw)]
        bpool_w = next(it); bpool_b = next(it)
        # --- ViT inputs ---
        patch_ref = next(it); patchw_ref = next(it); aadd_ref = next(it); mv_ref = next(it)
        vit_lw = [next(it) for _ in range(n_lw)]
        fg_ref = next(it); fb_ref = next(it); vpool_w = next(it); vpool_b = next(it)
        # --- fc head inputs ---
        wfc_t = next(it); wfc_v = next(it); bfc_ref = next(it)
        # --- outputs ---
        logits_ref = next(it); text_ref = next(it); img_ref = next(it)

        # ---------------- BERT tower ----------------
        inv_ht = 1.0 / Ht
        x = _ln(xb_ref[...], eg_ref[...], eb_ref[...], inv_ht, eps)          # [B*S, HP]
        mask_b = mb_ref[...]
        for l in range(Lt):                                                  # static unrolled loop
            wd = {key: r[l] for key, r in zip(LAYER_KEYS, bert_lw)}
            x = _transformer_layer(x, mask_b, wd, nh=nh_t, hd=hd_t, H=Ht, S=S, B=B,
                                   pre_ln=False, inv_h=inv_ht, eps=eps)
        cls_t = jnp.concatenate([x[b * S:b * S + 1, :] for b in range(B)], axis=0)   # [B, HP]
        text_pooled = jnp.tanh(
            jnp.dot(cls_t.astype(jnp.bfloat16), bpool_w[...],
                    preferred_element_type=jnp.float32) + bpool_b[...])

        # ---------------- ViT tower ----------------
        inv_hv = 1.0 / Hv
        # patch "conv" (kernel==stride==patch) as one lane-dense matmul plus the precomputed
        # (cls + position + patch-bias) additive slab, already tiled over the folded batch.
        x = jnp.dot(patch_ref[...], patchw_ref[...],
                    preferred_element_type=jnp.float32) + aadd_ref[...]      # [B*SV, HP]
        mask_v = mv_ref[...]
        for l in range(Lv):
            wd = {key: r[l] for key, r in zip(LAYER_KEYS, vit_lw)}
            x = _transformer_layer(x, mask_v, wd, nh=nh_v, hd=hd_v, H=Hv, S=SV, B=B,
                                   pre_ln=True, inv_h=inv_hv, eps=eps)
        cls_v = jnp.concatenate([x[b * SV:b * SV + 1, :] for b in range(B)], axis=0)  # [B, HP]
        cls_v = _ln(cls_v, fg_ref[...], fb_ref[...], inv_hv, eps)            # final LN (CLS only)
        img_pooled = jnp.tanh(
            jnp.dot(cls_v.astype(jnp.bfloat16), vpool_w[...],
                    preferred_element_type=jnp.float32) + vpool_b[...])

        # ---------------- fc head (dropout is identity in eval) ----------------
        # TODO(synk): nn.Dropout(p=0.1) is identity in eval mode; training-mode dropout would
        # need pltpu.prng_seed / prng_random_bits masking.
        logits_ref[...] = (jnp.dot(text_pooled.astype(jnp.bfloat16), wfc_t[...],
                                   preferred_element_type=jnp.float32)
                           + jnp.dot(img_pooled.astype(jnp.bfloat16), wfc_v[...],
                                     preferred_element_type=jnp.float32)
                           + bfc_ref[...])
        text_ref[...] = text_pooled
        img_ref[...] = img_pooled

    return kernel


def _full_spec(a):
    nd = a.ndim
    return pl.BlockSpec(a.shape, lambda i, _nd=nd: (0,) * _nd)


def fused_forward_call(packed, x_bert, mask_t, patches_fold, a_fold, mask_v, cfg, B, S, SV):
    bp, vp = packed["bert"], packed["vit"]
    HP, CP = cfg.HP, cfg.CP
    kernel = _make_fused_kernel(cfg, B, S, SV)

    in_arrays = ([x_bert, mask_t, bp["emb_ln_g"], bp["emb_ln_b"]]
                 + [bp["layers"][k] for k in LAYER_KEYS]
                 + [bp["pool_w"], bp["pool_b"],
                    patches_fold, vp["patch_w"], a_fold, mask_v]
                 + [vp["layers"][k] for k in LAYER_KEYS]
                 + [vp["final_ln_g"], vp["final_ln_b"], vp["pool_w"], vp["pool_b"],
                    packed["w_fc_t"], packed["w_fc_v"], packed["b_fc"]])
    in_specs = [_full_spec(a) for a in in_arrays]

    out_shape = (jax.ShapeDtypeStruct((B, CP), jnp.float32),   # padded logits
                 jax.ShapeDtypeStruct((B, HP), jnp.float32),   # text pooled (padded)
                 jax.ShapeDtypeStruct((B, HP), jnp.float32))   # image pooled (padded)
    out_specs = (pl.BlockSpec((B, CP), lambda i: (0, 0)),
                 pl.BlockSpec((B, HP), lambda i: (0, 0)),
                 pl.BlockSpec((B, HP), lambda i: (0, 0)))

    return pl.pallas_call(
        kernel,
        grid=(1,),
        in_specs=in_specs,
        out_specs=out_specs,
        out_shape=out_shape,
        compiler_params=pltpu.CompilerParams(dimension_semantics=("arbitrary",)),
    )(*in_arrays)


# ----------------------------- raw parameter init (natural layout, f32) -----------------------------

def _dense(key, fan_in, fan_out):
    w = jax.random.normal(key, (fan_in, fan_out), jnp.float32) * 0.02
    b = jnp.zeros((fan_out,), jnp.float32)
    return w, b


def init_layer_params(key, hidden, ffn):
    ks = jax.random.split(key, 6)
    p = {}
    p["q_w"], p["q_b"] = _dense(ks[0], hidden, hidden)
    p["k_w"], p["k_b"] = _dense(ks[1], hidden, hidden)
    p["v_w"], p["v_b"] = _dense(ks[2], hidden, hidden)
    p["o_w"], p["o_b"] = _dense(ks[3], hidden, hidden)
    p["i_w"], p["i_b"] = _dense(ks[4], hidden, ffn)
    p["fo_w"], p["fo_b"] = _dense(ks[5], ffn, hidden)
    p["ln1_g"] = jnp.ones((hidden,), jnp.float32)
    p["ln1_b"] = jnp.zeros((hidden,), jnp.float32)
    p["ln2_g"] = jnp.ones((hidden,), jnp.float32)
    p["ln2_b"] = jnp.zeros((hidden,), jnp.float32)
    return p


def init_params(key, cfg):
    keys = jax.random.split(key, 12)

    bert = {}
    bert["word_emb"] = jax.random.normal(keys[0], (cfg.vocab_size, cfg.text_hidden), jnp.float32) * 0.02
    bert["pos_emb"] = jax.random.normal(keys[1], (cfg.max_pos, cfg.text_hidden), jnp.float32) * 0.02
    bert["type_emb"] = jax.random.normal(keys[2], (cfg.type_vocab, cfg.text_hidden), jnp.float32) * 0.02
    bert["emb_ln_g"] = jnp.ones((cfg.text_hidden,), jnp.float32)
    bert["emb_ln_b"] = jnp.zeros((cfg.text_hidden,), jnp.float32)
    bert["layers"] = [init_layer_params(k, cfg.text_hidden, cfg.text_ffn)
                      for k in jax.random.split(keys[3], cfg.text_layers)]
    bert["pool_w"], bert["pool_b"] = _dense(keys[4], cfg.text_hidden, cfg.text_hidden)

    vit = {}
    patch_dim = cfg.img_channels * cfg.patch * cfg.patch
    n_patches = (cfg.img_size // cfg.patch) ** 2
    vit["patch_w"], vit["patch_b"] = _dense(keys[5], patch_dim, cfg.vit_hidden)
    vit["cls"] = jax.random.normal(keys[6], (1, 1, cfg.vit_hidden), jnp.float32) * 0.02
    vit["pos_emb"] = jax.random.normal(keys[7], (n_patches + 1, cfg.vit_hidden), jnp.float32) * 0.02
    vit["layers"] = [init_layer_params(k, cfg.vit_hidden, cfg.vit_ffn)
                     for k in jax.random.split(keys[8], cfg.vit_layers)]
    vit["final_ln_g"] = jnp.ones((cfg.vit_hidden,), jnp.float32)
    vit["final_ln_b"] = jnp.zeros((cfg.vit_hidden,), jnp.float32)
    vit["pool_w"], vit["pool_b"] = _dense(keys[9], cfg.vit_hidden, cfg.vit_hidden)

    combined = cfg.text_hidden + cfg.vit_hidden
    fc_w, fc_b = _dense(keys[10], combined, cfg.n_classes)

    # registered buffers from the torch module (never consumed by forward)
    pre_features = jnp.zeros((16, combined), jnp.float32)
    pre_weight1 = jnp.ones((16, 1), jnp.float32)

    return {"bert": bert, "vit": vit, "fc_w": fc_w, "fc_b": fc_b,
            "pre_features": pre_features, "pre_weight1": pre_weight1}


# ----------------------------- one-time packing: pad lanes to 128, cast MXU weights to bf16 -----------------------------

def _pad2(a, rows, cols):
    return jnp.pad(a, ((0, rows - a.shape[0]), (0, cols - a.shape[1])))


def _pack_layer(lp, H, HP, FP):
    w_qkv = jnp.zeros((HP, HP), jnp.float32)
    w_qkv = (w_qkv.at[:H, 0:H].set(lp["q_w"])
                  .at[:H, H:2 * H].set(lp["k_w"])
                  .at[:H, 2 * H:3 * H].set(lp["v_w"]))
    b_qkv = jnp.zeros((1, HP), jnp.float32)
    b_qkv = (b_qkv.at[0, 0:H].set(lp["q_b"])
                  .at[0, H:2 * H].set(lp["k_b"])
                  .at[0, 2 * H:3 * H].set(lp["v_b"]))
    return {
        "w_qkv": w_qkv.astype(jnp.bfloat16),
        "b_qkv": b_qkv,
        "w_o": _pad2(lp["o_w"], H, HP).astype(jnp.bfloat16),   # [H, HP] single merged projection
        "b_o": _pad2(lp["o_b"][None, :], 1, HP),
        "ln1_g": _pad2(lp["ln1_g"][None, :], 1, HP),           # zero-padded gamma/beta
        "ln1_b": _pad2(lp["ln1_b"][None, :], 1, HP),
        "w_i": _pad2(lp["i_w"], HP, FP).astype(jnp.bfloat16),
        "b_i": _pad2(lp["i_b"][None, :], 1, FP),
        "w_fo": _pad2(lp["fo_w"], FP, HP).astype(jnp.bfloat16),
        "b_fo": _pad2(lp["fo_b"][None, :], 1, HP),
        "ln2_g": _pad2(lp["ln2_g"][None, :], 1, HP),
        "ln2_b": _pad2(lp["ln2_b"][None, :], 1, HP),
    }


def pack_params(raw, cfg):
    HP, FP, CP = cfg.HP, cfg.FP, cfg.CP
    Ht, Hv = cfg.text_hidden, cfg.vit_hidden

    def stack_layers(layers, H):
        per = [_pack_layer(lp, H, HP, FP) for lp in layers]
        return {k: jnp.stack([p[k] for p in per]) for k in LAYER_KEYS}

    rb, rv = raw["bert"], raw["vit"]

    bert = {
        "word_emb": rb["word_emb"], "pos_emb": rb["pos_emb"], "type_emb": rb["type_emb"],
        "emb_ln_g": _pad2(rb["emb_ln_g"][None, :], 1, HP),
        "emb_ln_b": _pad2(rb["emb_ln_b"][None, :], 1, HP),
        "layers": stack_layers(rb["layers"], Ht),
        "pool_w": _pad2(rb["pool_w"], HP, HP).astype(jnp.bfloat16),
        "pool_b": _pad2(rb["pool_b"][None, :], 1, HP),
    }

    n_patches = (cfg.img_size // cfg.patch) ** 2
    patch_dim = cfg.img_channels * cfg.patch * cfg.patch
    SV = ((n_patches + 1 + 7) // 8) * 8                 # ViT sequence padded to a sublane multiple
    PP = ((patch_dim + 127) // 128) * 128
    a_rows = jnp.concatenate([
        rv["cls"].reshape(1, Hv) + rv["pos_emb"][0:1],                       # cls token row
        rv["pos_emb"][1:1 + n_patches] + rv["patch_b"][None, :],             # patch rows
        jnp.zeros((SV - 1 - n_patches, Hv), jnp.float32),                    # padded token rows
    ], axis=0)
    vit = {
        "patch_w": _pad2(rv["patch_w"], PP, HP).astype(jnp.bfloat16),
        "a_add": jnp.pad(a_rows, ((0, 0), (0, HP - Hv))),                    # [SV, HP]
        "layers": stack_layers(rv["layers"], Hv),
        "final_ln_g": _pad2(rv["final_ln_g"][None, :], 1, HP),
        "final_ln_b": _pad2(rv["final_ln_b"][None, :], 1, HP),
        "pool_w": _pad2(rv["pool_w"], HP, HP).astype(jnp.bfloat16),
        "pool_b": _pad2(rv["pool_b"][None, :], 1, HP),
    }

    return {
        "bert": bert,
        "vit": vit,
        "w_fc_t": _pad2(raw["fc_w"][:Ht], HP, CP).astype(jnp.bfloat16),
        "w_fc_v": _pad2(raw["fc_w"][Ht:], HP, CP).astype(jnp.bfloat16),
        "b_fc": _pad2(raw["fc_b"][None, :], 1, CP),
        # registered buffers from the torch module (never consumed by forward)
        "pre_features": raw["pre_features"],
        "pre_weight1": raw["pre_weight1"],
    }


# ----------------------------- mask construction (plain JAX glue) -----------------------------

def _stacked_mask(key_add, nh):
    """Additive mask for the (head, batch)-stacked attention layout.

    key_add: [B, S] additive key-padding mask (0 valid / large negative masked).
    Returns [nh*B*S, nh*B*S]: cross-(head,batch)-block entries get -1e9, within-block entries
    get the key-padding value of the key position."""
    B, S = key_add.shape
    blk = jnp.repeat(jnp.arange(nh * B, dtype=jnp.int32), S)          # block id per stacked row
    same = blk[:, None] == blk[None, :]
    key_cols = jnp.tile(key_add, (nh, 1)).reshape(-1)                 # order (h, b, s)
    return jnp.where(same, key_cols[None, :], jnp.float32(-1e9)).astype(jnp.float32)


# ----------------------------- forward -----------------------------

def sentiment_classifier_forward(packed, input_ids, attention_mask, image, cfg):
    B, S = input_ids.shape
    bp, vp = packed["bert"], packed["vit"]
    HP = cfg.HP

    # BERT embeddings (gathers stay in JAX; no clean Pallas gather for tiny tables)
    emb = (bp["word_emb"][input_ids]
           + bp["pos_emb"][None, :S, :]
           + bp["type_emb"][0][None, None, :])
    x_bert = jnp.pad(emb, ((0, 0), (0, 0), (0, HP - cfg.text_hidden))).reshape(B * S, HP)
    key_add_t = (1.0 - attention_mask.astype(jnp.float32)) * -10000.0           # [B, S]
    mask_t = _stacked_mask(key_add_t, cfg.text_heads)                            # [B*nh*S, B*nh*S]

    # ViT patch extraction (layout glue only; projection happens inside the fused kernel)
    p = cfg.patch
    gh = cfg.img_size // p
    n_patches = gh * gh
    patch_dim = cfg.img_channels * p * p
    SV = vp["a_add"].shape[0]
    PP = vp["patch_w"].shape[0]
    patches = (image.reshape(B, cfg.img_channels, gh, p, gh, p)
               .transpose(0, 2, 4, 1, 3, 5)
               .reshape(B, n_patches, patch_dim))
    patches_pad = jnp.pad(patches, ((0, 0), (1, SV - 1 - n_patches), (0, PP - patch_dim)))
    patches_fold = patches_pad.reshape(B * SV, PP).astype(jnp.bfloat16)          # [B*SV, PP]
    a_fold = jnp.tile(vp["a_add"], (B, 1))                                       # [B*SV, HP]
    key_add_v = jnp.broadcast_to(
        jnp.where(jnp.arange(SV) < n_patches + 1, 0.0, -1e9).astype(jnp.float32)[None, :],
        (B, SV))
    mask_v = _stacked_mask(key_add_v, cfg.vit_heads)

    logits_pad, text_pooled, img_pooled = fused_forward_call(
        packed, x_bert, mask_t, patches_fold, a_fold, mask_v, cfg, B, S, SV)

    logits = logits_pad[:, :cfg.n_classes]
    combined = jnp.concatenate([text_pooled[:, :cfg.text_hidden],
                                img_pooled[:, :cfg.vit_hidden]], axis=1)
    return logits, combined


# ----------------------------- pure-JAX reference (same bf16 matmul precision) -----------------------------

def _ref_linear(x, w, b):
    return jnp.dot(x.astype(jnp.bfloat16), w.astype(jnp.bfloat16),
                   preferred_element_type=jnp.float32) + b


def _ref_ln(x, g, b, eps):
    mu = jnp.mean(x, axis=-1, keepdims=True)
    var = jnp.mean((x - mu) ** 2, axis=-1, keepdims=True)
    return (x - mu) * jax.lax.rsqrt(var + eps) * g + b


def _ref_mha(x, lp, nh, hd, mask_add):
    B, S, H = x.shape

    def split(t):
        return t.reshape(B, S, nh, hd).transpose(0, 2, 1, 3)

    q = split(_ref_linear(x, lp["q_w"], lp["q_b"]))
    k = split(_ref_linear(x, lp["k_w"], lp["k_b"]))
    v = split(_ref_linear(x, lp["v_w"], lp["v_b"]))
    s = jnp.einsum("bhqd,bhkd->bhqk", q.astype(jnp.bfloat16), k.astype(jnp.bfloat16),
                   preferred_element_type=jnp.float32) * (1.0 / math.sqrt(hd))
    s = s + mask_add
    s = s - jnp.max(s, axis=-1, keepdims=True)
    p = jnp.exp(s)
    p = p / jnp.sum(p, axis=-1, keepdims=True)
    ctx = jnp.einsum("bhqk,bhkd->bhqd", p.astype(jnp.bfloat16), v.astype(jnp.bfloat16),
                     preferred_element_type=jnp.float32)
    ctx = ctx.transpose(0, 2, 1, 3).reshape(B, S, H)
    return _ref_linear(ctx, lp["o_w"], lp["o_b"])


def _ref_bert_layer(x, lp, nh, hd, mask_add, eps):
    x = _ref_ln(x + _ref_mha(x, lp, nh, hd, mask_add), lp["ln1_g"], lp["ln1_b"], eps)
    ff = _ref_linear(_gelu(_ref_linear(x, lp["i_w"], lp["i_b"])), lp["fo_w"], lp["fo_b"])
    return _ref_ln(x + ff, lp["ln2_g"], lp["ln2_b"], eps)


def _ref_vit_layer(x, lp, nh, hd, mask_add, eps):
    x = x + _ref_mha(_ref_ln(x, lp["ln1_g"], lp["ln1_b"], eps), lp, nh, hd, mask_add)
    ff = _ref_linear(_gelu(_ref_linear(_ref_ln(x, lp["ln2_g"], lp["ln2_b"], eps),
                                       lp["i_w"], lp["i_b"])), lp["fo_w"], lp["fo_b"])
    return x + ff


def reference_forward(raw, input_ids, attention_mask, image, cfg):
    B, S = input_ids.shape
    rb, rv = raw["bert"], raw["vit"]

    x = (rb["word_emb"][input_ids] + rb["pos_emb"][None, :S, :]
         + rb["type_emb"][0][None, None, :])
    x = _ref_ln(x, rb["emb_ln_g"], rb["emb_ln_b"], cfg.ln_eps)
    mask = ((1.0 - attention_mask.astype(jnp.float32)) * -10000.0)[:, None, None, :]
    nh, hd = cfg.text_heads, cfg.text_hidden // cfg.text_heads
    for lp in rb["layers"]:
        x = _ref_bert_layer(x, lp, nh, hd, mask, cfg.ln_eps)
    text = jnp.tanh(_ref_linear(x[:, 0], rb["pool_w"], rb["pool_b"]))

    p = cfg.patch
    gh = cfg.img_size // p
    patches = (image.reshape(B, cfg.img_channels, gh, p, gh, p)
               .transpose(0, 2, 4, 1, 3, 5)
               .reshape(B, gh * gh, cfg.img_channels * p * p))
    x = _ref_linear(patches, rv["patch_w"], rv["patch_b"])
    cls = jnp.broadcast_to(rv["cls"], (B, 1, cfg.vit_hidden))
    x = jnp.concatenate([cls, x], axis=1) + rv["pos_emb"][None, :gh * gh + 1, :]
    nh, hd = cfg.vit_heads, cfg.vit_hidden // cfg.vit_heads
    zero_mask = jnp.zeros((B, 1, 1, x.shape[1]), jnp.float32)
    for lp in rv["layers"]:
        x = _ref_vit_layer(x, lp, nh, hd, zero_mask, cfg.ln_eps)
    x = _ref_ln(x, rv["final_ln_g"], rv["final_ln_b"], cfg.ln_eps)
    img = jnp.tanh(_ref_linear(x[:, 0], rv["pool_w"], rv["pool_b"]))

    comb = jnp.concatenate([text, img], axis=1)
    logits = _ref_linear(comb, raw["fc_w"], raw["fc_b"])
    return logits, comb


# ----------------------------- main -----------------------------

if __name__ == "__main__":
    cfg = Cfg()
    key = jax.random.PRNGKey(0)
    kp, kids, kimg = jax.random.split(key, 3)

    raw = init_params(kp, cfg)
    packed = pack_params(raw, cfg)

    B, S = 2, 8
    input_ids = jax.random.randint(kids, (B, S), 0, cfg.vocab_size, dtype=jnp.int32)
    attention_mask = jnp.array([[1, 1, 1, 1, 1, 1, 1, 1],
                                [1, 1, 1, 1, 1, 1, 0, 0]], dtype=jnp.int32)
    image = jax.random.normal(kimg, (B, cfg.img_channels, cfg.img_size, cfg.img_size),
                              jnp.float32)

    fwd = jax.jit(lambda pp, ids, am, img: sentiment_classifier_forward(pp, ids, am, img, cfg))
    logits, feats = jax.block_until_ready(fwd(packed, input_ids, attention_mask, image))

    assert logits.shape == (B, cfg.n_classes)
    assert feats.shape == (B, cfg.text_hidden + cfg.vit_hidden)
    assert bool(jnp.all(jnp.isfinite(logits))) and bool(jnp.all(jnp.isfinite(feats)))

    # numerical check vs a pure-JAX reference (same bf16 matmul / f32 accumulate precision)
    ref_logits, ref_feats = reference_forward(raw, input_ids, attention_mask, image, cfg)
    np.testing.assert_allclose(np.asarray(logits), np.asarray(ref_logits), rtol=5e-2, atol=5e-3)
    np.testing.assert_allclose(np.asarray(feats), np.asarray(ref_feats), rtol=5e-2, atol=5e-3)

    print("KERNEL_OK")
</pallas_src>

<mosaic_0001>
module attributes {stable_mosaic.version = 11 : i64} {
  func.func @kernel(%arg0: i32, %arg1: memref<16x128xf32, #tpu.memory_space<vmem>>, %arg2: memref<32x32xf32, #tpu.memory_space<vmem>>, %arg3: memref<1x128xf32, #tpu.memory_space<vmem>>, %arg4: memref<1x128xf32, #tpu.memory_space<vmem>>, %arg5: memref<2x128x128xbf16, #tpu.memory_space<vmem>>, %arg6: memref<2x1x128xf32, #tpu.memory_space<vmem>>, %arg7: memref<2x32x128xbf16, #tpu.memory_space<vmem>>, %arg8: memref<2x1x128xf32, #tpu.memory_space<vmem>>, %arg9: memref<2x1x128xf32, #tpu.memory_space<vmem>>, %arg10: memref<2x1x128xf32, #tpu.memory_space<vmem>>, %arg11: memref<2x128x128xbf16, #tpu.memory_space<vmem>>, %arg12: memref<2x1x128xf32, #tpu.memory_space<vmem>>, %arg13: memref<2x128x128xbf16, #tpu.memory_space<vmem>>, %arg14: memref<2x1x128xf32, #tpu.memory_space<vmem>>, %arg15: memref<2x1x128xf32, #tpu.memory_space<vmem>>, %arg16: memref<2x1x128xf32, #tpu.memory_space<vmem>>, %arg17: memref<128x128xbf16, #tpu.memory_space<vmem>>, %arg18: memref<1x128xf32, #tpu.memory_space<vmem>>, %arg19: memref<16x256xbf16, #tpu.memory_space<vmem>>, %arg20: memref<256x128xbf16, #tpu.memory_space<vmem>>, %arg21: memref<16x128xf32, #tpu.memory_space<vmem>>, %arg22: memref<32x32xf32, #tpu.memory_space<vmem>>, %arg23: memref<2x128x128xbf16, #tpu.memory_space<vmem>>, %arg24: memref<2x1x128xf32, #tpu.memory_space<vmem>>, %arg25: memref<2x32x128xbf16, #tpu.memory_space<vmem>>, %arg26: memref<2x1x128xf32, #tpu.memory_space<vmem>>, %arg27: memref<2x1x128xf32, #tpu.memory_space<vmem>>, %arg28: memref<2x1x128xf32, #tpu.memory_space<vmem>>, %arg29: memref<2x128x128xbf16, #tpu.memory_space<vmem>>, %arg30: memref<2x1x128xf32, #tpu.memory_space<vmem>>, %arg31: memref<2x128x128xbf16, #tpu.memory_space<vmem>>, %arg32: memref<2x1x128xf32, #tpu.memory_space<vmem>>, %arg33: memref<2x1x128xf32, #tpu.memory_space<vmem>>, %arg34: memref<2x1x128xf32, #tpu.memory_space<vmem>>, %arg35: memref<1x128xf32, #tpu.memory_space<vmem>>, %arg36: memref<1x128xf32, #tpu.memory_space<vmem>>, %arg37: memref<128x128xbf16, #tpu.memory_space<vmem>>, %arg38: memref<1x128xf32, #tpu.memory_space<vmem>>, %arg39: memref<128x128xbf16, #tpu.memory_space<vmem>>, %arg40: memref<128x128xbf16, #tpu.memory_space<vmem>>, %arg41: memref<1x128xf32, #tpu.memory_space<vmem>>, %arg42: memref<2x128xf32, #tpu.memory_space<vmem>>, %arg43: memref<2x128xf32, #tpu.memory_space<vmem>>, %arg44: memref<2x128xf32, #tpu.memory_space<vmem>>) attributes {dimension_semantics = [#tpu.dimension_semantics<arbitrary>], iteration_bounds = array<i64: 1>, scalar_prefetch = 0 : i64, scratch_operands = 0 : i64, tpu.core_type = #tpu.core_type<tc>, window_params = [{pipeline_mode = #tpu.pipeline_mode<synchronous>, transform_indices = @transform_0, window_bounds = array<i64: 16, 128>}, {pipeline_mode = #tpu.pipeline_mode<synchronous>, transform_indices = @transform_1, window_bounds = array<i64: 32, 32>}, {pipeline_mode = #tpu.pipeline_mode<synchronous>, transform_indices = @transform_2, window_bounds = array<i64: 1, 128>}, {pipeline_mode = #tpu.pipeline_mode<synchronous>, transform_indices = @transform_3, window_bounds = array<i64: 1, 128>}, {pipeline_mode = #tpu.pipeline_mode<synchronous>, transform_indices = @transform_4, window_bounds = array<i64: 2, 128, 128>}, {pipeline_mode = #tpu.pipeline_mode<synchronous>, transform_indices = @transform_5, window_bounds = array<i64: 2, 1, 128>}, {pipeline_mode = #tpu.pipeline_mode<synchronous>, transform_indices = @transform_6, window_bounds = array<i64: 2, 32, 128>}, {pipeline_mode = #tpu.pipeline_mode<synchronous>, transform_indices = @transform_7, window_bounds = array<i64: 2, 1, 128>}, {pipeline_mode = #tpu.pipeline_mode<synchronous>, transform_indices = @transform_8, window_bounds = array<i64: 2, 1, 128>}, {pipeline_mode = #tpu.pipeline_mode<synchronous>, transform_indices = @transform_9, window_bounds = array<i64: 2, 1, 128>}, {pipeline_mode = #tpu.pipeline_mode<synchronous>, transform_indices = @transform_10, window_bounds = array<i64: 2, 128, 128>}, {pipeline_mode = #tpu.pipeline_mode<synchronous>, transform_indices = @transform_11, window_bounds = array<i64: 2, 1, 128>}, {pipeline_mode = #tpu.pipeline_mode<synchronous>, transform_indices = @transform_12, window_bounds = array<i64: 2, 128, 128>}, {pipeline_mode = #tpu.pipeline_mode<synchronous>, transform_indices = @transform_13, window_bounds = array<i64: 2, 1, 128>}, {pipeline_mode = #tpu.pipeline_mode<synchronous>, transform_indices = @transform_14, window_bounds = array<i64: 2, 1, 128>}, {pipeline_mode = #tpu.pipeline_mode<synchronous>, transform_indices = @transform_15, window_bounds = array<i64: 2, 1, 128>}, {pipeline_mode = #tpu.pipeline_mode<synchronous>, transform_indices = @transform_16, window_bounds = array<i64: 128, 128>}, {pipeline_mode = #tpu.pipeline_mode<synchronous>, transform_indices = @transform_17, window_bounds = array<i64: 1, 128>}, {pipeline_mode = #tpu.pipeline_mode<synchronous>, transform_indices = @transform_18, window_bounds = array<i64: 16, 256>}, {pipeline_mode = #tpu.pipeline_mode<synchronous>, transform_indices = @transform_19, window_bounds = array<i64: 256, 128>}, {pipeline_mode = #tpu.pipeline_mode<synchronous>, transform_indices = @transform_20, window_bounds = array<i64: 16, 128>}, {pipeline_mode = #tpu.pipeline_mode<synchronous>, transform_indices = @transform_21, window_bounds = array<i64: 32, 32>}, {pipeline_mode = #tpu.pipeline_mode<synchronous>, transform_indices = @transform_22, window_bounds = array<i64: 2, 128, 128>}, {pipeline_mode = #tpu.pipeline_mode<synchronous>, transform_indices = @transform_23, window_bounds = array<i64: 2, 1, 128>}, {pipeline_mode = #tpu.pipeline_mode<synchronous>, transform_indices = @transform_24, window_bounds = array<i64: 2, 32, 128>}, {pipeline_mode = #tpu.pipeline_mode<synchronous>, transform_indices = @transform_25, window_bounds = array<i64: 2, 1, 128>}, {pipeline_mode = #tpu.pipeline_mode<synchronous>, transform_indices = @transform_26, window_bounds = array<i64: 2, 1, 128>}, {pipeline_mode = #tpu.pipeline_mode<synchronous>, transform_indices = @transform_27, window_bounds = array<i64: 2, 1, 128>}, {pipeline_mode = #tpu.pipeline_mode<synchronous>, transform_indices = @transform_28, window_bounds = array<i64: 2, 128, 128>}, {pipeline_mode = #tpu.pipeline_mode<synchronous>, transform_indices = @transform_29, window_bounds = array<i64: 2, 1, 128>}, {pipeline_mode = #tpu.pipeline_mode<synchronous>, transform_indices = @transform_30, window_bounds = array<i64: 2, 128, 128>}, {pipeline_mode = #tpu.pipeline_mode<synchronous>, transform_indices = @transform_31, window_bounds = array<i64: 2, 1, 128>}, {pipeline_mode = #tpu.pipeline_mode<synchronous>, transform_indices = @transform_32, window_bounds = array<i64: 2, 1, 128>}, {pipeline_mode = #tpu.pipeline_mode<synchronous>, transform_indices = @transform_33, window_bounds = array<i64: 2, 1, 128>}, {pipeline_mode = #tpu.pipeline_mode<synchronous>, transform_indices = @transform_34, window_bounds = array<i64: 1, 128>}, {pipeline_mode = #tpu.pipeline_mode<synchronous>, transform_indices = @transform_35, window_bounds = array<i64: 1, 128>}, {pipeline_mode = #tpu.pipeline_mode<synchronous>, transform_indices = @transform_36, window_bounds = array<i64: 128, 128>}, {pipeline_mode = #tpu.pipeline_mode<synchronous>, transform_indices = @transform_37, window_bounds = array<i64: 1, 128>}, {pipeline_mode = #tpu.pipeline_mode<synchronous>, transform_indices = @transform_38, window_bounds = array<i64: 128, 128>}, {pipeline_mode = #tpu.pipeline_mode<synchronous>, transform_indices = @transform_39, window_bounds = array<i64: 128, 128>}, {pipeline_mode = #tpu.pipeline_mode<synchronous>, transform_indices = @transform_40, window_bounds = array<i64: 1, 128>}, {pipeline_mode = #tpu.pipeline_mode<synchronous>, transform_indices = @transform_41, window_bounds = array<i64: 2, 128>}, {pipeline_mode = #tpu.pipeline_mode<synchronous>, transform_indices = @transform_42, window_bounds = array<i64: 2, 128>}, {pipeline_mode = #tpu.pipeline_mode<synchronous>, transform_indices = @transform_43, window_bounds = array<i64: 2, 128>}]} {
    %c0 = arith.constant 0 : index
    %c0_0 = arith.constant 0 : index
    %0 = vector.load %arg1[%c0, %c0_0] : memref<16x128xf32, #tpu.memory_space<vmem>>, vector<16x128xf32>
    %c0_1 = arith.constant 0 : index
    %c0_2 = arith.constant 0 : index
    %1 = vector.load %arg3[%c0_1, %c0_2] : memref<1x128xf32, #tpu.memory_space<vmem>>, vector<1x128xf32>
    %c0_3 = arith.constant 0 : index
    %c0_4 = arith.constant 0 : index
    %2 = vector.load %arg4[%c0_3, %c0_4] : memref<1x128xf32, #tpu.memory_space<vmem>>, vector<1x128xf32>
    %cst = arith.constant dense<0.000000e+00> : vector<16xf32>
    %3 = vector.multi_reduction <add>, %0, %cst [1] : vector<16x128xf32> to vector<16xf32>
    %4 = vector.shape_cast %3 : vector<16xf32> to vector<16x1xf32>
    %cst_5 = arith.constant 3.125000e-02 : f32
    %5 = vector.broadcast %cst_5 : f32 to vector<16x1xf32>
    %6 = arith.mulf %4, %5 : vector<16x1xf32>
    %7 = arith.mulf %0, %0 : vector<16x128xf32>
    %cst_6 = arith.constant dense<0.000000e+00> : vector<16xf32>
    %8 = vector.multi_reduction <add>, %7, %cst_6 [1] : vector<16x128xf32> to vector<16xf32>
    %9 = vector.shape_cast %8 : vector<16xf32> to vector<16x1xf32>
    %cst_7 = arith.constant 3.125000e-02 : f32
    %10 = vector.broadcast %cst_7 : f32 to vector<16x1xf32>
    %11 = arith.mulf %9, %10 : vector<16x1xf32>
    %12 = arith.mulf %6, %6 : vector<16x1xf32>
    %13 = arith.subf %11, %12 : vector<16x1xf32>
    %14 = vector.broadcast %6 : vector<16x1xf32> to vector<16x128xf32>
    %15 = arith.subf %0, %14 : vector<16x128xf32>
    %cst_8 = arith.constant 9.99999996E-13 : f32
    %16 = vector.broadcast %cst_8 : f32 to vector<16x1xf32>
    %17 = arith.addf %13, %16 : vector<16x1xf32>
    %18 = math.rsqrt %17 : vector<16x1xf32>
    %19 = vector.broadcast %18 : vector<16x1xf32> to vector<16x128xf32>
    %20 = arith.mulf %15, %19 : vector<16x128xf32>
    %21 = vector.broadcast %1 : vector<1x128xf32> to vector<16x128xf32>
    %22 = arith.mulf %20, %21 : vector<16x128xf32>
    %23 = vector.broadcast %2 : vector<1x128xf32> to vector<16x128xf32>
    %24 = arith.addf %22, %23 : vector<16x128xf32>
    %c0_9 = arith.constant 0 : index
    %c0_10 = arith.constant 0 : index
    %25 = vector.load %arg2[%c0_9, %c0_10] : memref<32x32xf32, #tpu.memory_space<vmem>>, vector<32x32xf32>
    %c0_11 = arith.constant 0 : index
    %c0_12 = arith.constant 0 : index
    %c0_13 = arith.constant 0 : index
    %26 = vector.load %arg5[%c0_11, %c0_12, %c0_13] : memref<2x128x128xbf16, #tpu.memory_space<vmem>>, vector<1x128x128xbf16>
    %27 = vector.shape_cast %26 : vector<1x128x128xbf16> to vector<128x128xbf16>
    %c0_14 = arith.constant 0 : index
    %c0_15 = arith.constant 0 : index
    %c0_16 = arith.constant 0 : index
    %28 = vector.load %arg6[%c0_14, %c0_15, %c0_16] : memref<2x1x128xf32, #tpu.memory_space<vmem>>, vector<1x1x128xf32>
    %29 = vector.shape_cast %28 : vector<1x1x128xf32> to vector<1x128xf32>
    %c0_17 = arith.constant 0 : index
    %c0_18 = arith.constant 0 : index
    %c0_19 = arith.constant 0 : index
    %30 = vector.load %arg7[%c0_17, %c0_18, %c0_19] : memref<2x32x128xbf16, #tpu.memory_space<vmem>>, vector<1x32x128xbf16>
    %31 = vector.shape_cast %30 : vector<1x32x128xbf16> to vector<32x128xbf16>
    %c0_20 = arith.constant 0 : index
    %c0_21 = arith.constant 0 : index
    %c0_22 = arith.constant 0 : index
    %32 = vector.load %arg8[%c0_20, %c0_21, %c0_22] : memref<2x1x128xf32, #tpu.memory_space<vmem>>, vector<1x1x128xf32>
    %33 = vector.shape_cast %32 : vector<1x1x128xf32> to vector<1x128xf32>
    %c0_23 = arith.constant 0 : index
    %c0_24 = arith.constant 0 : index
    %c0_25 = arith.constant 0 : index
    %34 = vector.load %arg9[%c0_23, %c0_24, %c0_25] : memref<2x1x128xf32, #tpu.memory_space<vmem>>, vector<1x1x128xf32>
    %35 = vector.shape_cast %34 : vector<1x1x128xf32> to vector<1x128xf32>
    %c0_26 = arith.constant 0 : index
    %c0_27 = arith.constant 0 : index
    %c0_28 = arith.constant 0 : index
    %36 = vector.load %arg10[%c0_26, %c0_27, %c0_28] : memref<2x1x128xf32, #tpu.memory_space<vmem>>, vector<1x1x128xf32>
    %37 = vector.shape_cast %36 : vector<1x1x128xf32> to vector<1x128xf32>
    %c0_29 = arith.constant 0 : index
    %c0_30 = arith.constant 0 : index
    %c0_31 = arith.constant 0 : index
    %38 = vector.load %arg11[%c0_29, %c0_30, %c0_31] : memref<2x128x128xbf16, #tpu.memory_space<vmem>>, vector<1x128x128xbf16>
    %39 = vector.shape_cast %38 : vector<1x128x128xbf16> to vector<128x128xbf16>
    %c0_32 = arith.constant 0 : index
    %c0_33 = arith.constant 0 : index
    %c0_34 = arith.constant 0 : index
    %40 = vector.load %arg12[%c0_32, %c0_33, %c0_34] : memref<2x1x128xf32, #tpu.memory_space<vmem>>, vector<1x1x128xf32>
    %41 = vector.shape_cast %40 : vector<1x1x128xf32> to vector<1x128xf32>
    %c0_35 = arith.constant 0 : index
    %c0_36 = arith.constant 0 : index
    %c0_37 = arith.constant 0 : index
    %42 = vector.load %arg13[%c0_35, %c0_36, %c0_37] : memref<2x128x128xbf16, #tpu.memory_space<vmem>>, vector<1x128x128xbf16>
    %43 = vector.shape_cast %42 : vector<1x128x128xbf16> to vector<128x128xbf16>
    %c0_38 = arith.constant 0 : index
    %c0_39 = arith.constant 0 : index
    %c0_40 = arith.constant 0 : index
    %44 = vector.load %arg14[%c0_38, %c0_39, %c0_40] : memref<2x1x128xf32, #tpu.memory_space<vmem>>, vector<1x1x128xf32>
    %45 = vector.shape_cast %44 : vector<1x1x128xf32> to vector<1x128xf32>
    %c0_41 = arith.constant 0 : index
    %c0_42 = arith.constant 0 : index
    %c0_43 = arith.constant 0 : index
    %46 = vector.load %arg15[%c0_41, %c0_42, %c0_43] : memref<2x1x128xf32, #tpu.memory_space<vmem>>, vector<1x1x128xf32>
    %47 = vector.shape_cast %46 : vector<1x1x128xf32> to vector<1x128xf32>
    %c0_44 = arith.constant 0 : index
    %c0_45 = arith.constant 0 : index
    %c0_46 = arith.constant 0 : index
    %48 = vector.load %arg16[%c0_44, %c0_45, %c0_46] : memref<2x1x128xf32, #tpu.memory_space<vmem>>, vector<1x1x128xf32>
    %49 = vector.shape_cast %48 : vector<1x1x128xf32> to vector<1x128xf32>
    %50 = arith.truncf %24 : vector<16x128xf32> to vector<16x128xbf16>
    %cst_47 = arith.constant dense<0.000000e+00> : vector<16x128xf32>
    %51 = tpu.matmul %50, %27, %cst_47 {dimension_numbers = #tpu.dot_dimension_numbers<[1], [0], [0], [1], [0, 0, 1, 1], [], []>} : vector<16x128xbf16>, vector<128x128xbf16>, vector<16x128xf32> -> vector<16x128xf32>
    %52 = vector.broadcast %29 : vector<1x128xf32> to vector<16x128xf32>
    %53 = arith.addf %51, %52 : vector<16x128xf32>
    %54 = vector.extract_strided_slice %53 {offsets = [0, 0], sizes = [16, 16], strides = [1, 1]} : vector<16x128xf32> to vector<16x16xf32>
    %55 = vector.extract_strided_slice %53 {offsets = [0, 16], sizes = [16, 16], strides = [1, 1]} : vector<16x128xf32> to vector<16x16xf32>
    %56 = tpu.concatenate %54, %55 in 0 : vector<16x16xf32>, vector<16x16xf32> -> vector<32x16xf32>
    %57 = arith.truncf %56 : vector<32x16xf32> to vector<32x16xbf16>
    %58 = vector.extract_strided_slice %53 {offsets = [0, 32], sizes = [16, 16], strides = [1, 1]} : vector<16x128xf32> to vector<16x16xf32>
    %59 = vector.extract_strided_slice %53 {offsets = [0, 48], sizes = [16, 16], strides = [1, 1]} : vector<16x128xf32> to vector<16x16xf32>
    %60 = tpu.concatenate %58, %59 in 0 : vector<16x16xf32>, vector<16x16xf32> -> vector<32x16xf32>
    %61 = arith.truncf %60 : vector<32x16xf32> to vector<32x16xbf16>
    %62 = vector.extract_strided_slice %53 {offsets = [0, 64], sizes = [16, 16], strides = [1, 1]} : vector<16x128xf32> to vector<16x16xf32>
    %63 = vector.extract_strided_slice %53 {offsets = [0, 80], sizes = [16, 16], strides = [1, 1]} : vector<16x128xf32> to vector<16x16xf32>
    %64 = tpu.concatenate %62, %63 in 0 : vector<16x16xf32>, vector<16x16xf32> -> vector<32x16xf32>
    %65 = arith.truncf %64 : vector<32x16xf32> to vector<32x16xbf16>
    %cst_48 = arith.constant dense<0.000000e+00> : vector<32x32xf32>
    %66 = tpu.matmul %57, %61, %cst_48 {dimension_numbers = #tpu.dot_dimension_numbers<[1], [1], [0], [0], [0, 0, 1, 0], [], []>} : vector<32x16xbf16>, vector<32x16xbf16>, vector<32x32xf32> -> vector<32x32xf32>
    %cst_49 = arith.constant 2.500000e-01 : f32
    %67 = vector.broadcast %cst_49 : f32 to vector<32x32xf32>
    %68 = arith.mulf %66, %67 : vector<32x32xf32>
    %69 = arith.addf %68, %25 : vector<32x32xf32>
    %cst_50 = arith.constant dense<0xFF800000> : vector<32xf32>
    %70 = vector.multi_reduction <maximumf>, %69, %cst_50 [1] : vector<32x32xf32> to vector<32xf32>
    %71 = vector.shape_cast %70 : vector<32xf32> to vector<32x1xf32>
    %72 = vector.broadcast %71 : vector<32x1xf32> to vector<32x32xf32>
    %73 = arith.subf %69, %72 : vector<32x32xf32>
    %74 = math.exp %73 : vector<32x32xf32>
    %cst_51 = arith.constant dense<0.000000e+00> : vector<32xf32>
    %75 = vector.multi_reduction <add>, %74, %cst_51 [1] : vector<32x32xf32> to vector<32xf32>
    %76 = vector.shape_cast %75 : vector<32xf32> to vector<32x1xf32>
    %77 = tpu.reciprocal %76 {approx = true} : vector<32x1xf32> -> vector<32x1xf32>
    %78 = vector.broadcast %77 : vector<32x1xf32> to vector<32x32xf32>
    %79 = arith.mulf %74, %78 : vector<32x32xf32>
    %80 = arith.truncf %79 : vector<32x32xf32> to vector<32x32xbf16>
    %cst_52 = arith.constant dense<0.000000e+00> : vector<32x16xf32>
    %81 = tpu.matmul %80, %65, %cst_52 {dimension_numbers = #tpu.dot_dimension_numbers<[1], [0], [0], [1], [0, 0, 1, 1], [], []>} : vector<32x32xbf16>, vector<32x16xbf16>, vector<32x16xf32> -> vector<32x16xf32>
    %82 = vector.extract_strided_slice %81 {offsets = [0, 0], sizes = [16, 16], strides = [1, 1]} : vector<32x16xf32> to vector<16x16xf32>
    %83 = vector.extract_strided_slice %81 {offsets = [16, 0], sizes = [16, 16], strides = [1, 1]} : vector<32x16xf32> to vector<16x16xf32>
    %84 = tpu.concatenate %82, %83 in 1 : vector<16x16xf32>, vector<16x16xf32> -> vector<16x32xf32>
    %85 = arith.truncf %84 : vector<16x32xf32> to vector<16x32xbf16>
    %cst_53 = arith.constant dense<0.000000e+00> : vector<16x128xf32>
    %86 = tpu.matmul %85, %31, %cst_53 {dimension_numbers = #tpu.dot_dimension_numbers<[1], [0], [0], [1], [0, 0, 1, 1], [], []>} : vector<16x32xbf16>, vector<32x128xbf16>, vector<16x128xf32> -> vector<16x128xf32>
    %87 = vector.broadcast %33 : vector<1x128xf32> to vector<16x128xf32>
    %88 = arith.addf %86, %87 : vector<16x128xf32>
    %89 = arith.addf %24, %88 : vector<16x128xf32>
    %cst_54 = arith.constant dense<0.000000e+00> : vector<16xf32>
    %90 = vector.multi_reduction <add>, %89, %cst_54 [1] : vector<16x128xf32> to vector<16xf32>
    %91 = vector.shape_cast %90 : vector<16xf32> to vector<16x1xf32>
    %cst_55 = arith.constant 3.125000e-02 : f32
    %92 = vector.broadcast %cst_55 : f32 to vector<16x1xf32>
    %93 = arith.mulf %91, %92 : vector<16x1xf32>
    %94 = arith.mulf %89, %89 : vector<16x128xf32>
    %cst_56 = arith.constant dense<0.000000e+00> : vector<16xf32>
    %95 = vector.multi_reduction <add>, %94, %cst_56 [1] : vector<16x128xf32> to vector<16xf32>
    %96 = vector.shape_cast %95 : vector<16xf32> to vector<16x1xf32>
    %cst_57 = arith.constant 3.125000e-02 : f32
    %97 = vector.broadcast %cst_57 : f32 to vector<16x1xf32>
    %98 = arith.mulf %96, %97 : vector<16x1xf32>
    %99 = arith.mulf %93, %93 : vector<16x1xf32>
    %100 = arith.subf %98, %99 : vector<16x1xf32>
    %101 = vector.broadcast %93 : vector<16x1xf32> to vector<16x128xf32>
    %102 = arith.subf %89, %101 : vector<16x128xf32>
    %cst_58 = arith.constant 9.99999996E-13 : f32
    %103 = vector.broadcast %cst_58 : f32 to vector<16x1xf32>
    %104 = arith.addf %100, %103 : vector<16x1xf32>
    %105 = math.rsqrt %104 : vector<16x1xf32>
    %106 = vector.broadcast %105 : vector<16x1xf32> to vector<16x128xf32>
    %107 = arith.mulf %102, %106 : vector<16x128xf32>
    %108 = vector.broadcast %35 : vector<1x128xf32> to vector<16x128xf32>
    %109 = arith.mulf %107, %108 : vector<16x128xf32>
    %110 = vector.broadcast %37 : vector<1x128xf32> to vector<16x128xf32>
    %111 = arith.addf %109, %110 : vector<16x128xf32>
    %112 = arith.truncf %111 : vector<16x128xf32> to vector<16x128xbf16>
    %cst_59 = arith.constant dense<0.000000e+00> : vector<16x128xf32>
    %113 = tpu.matmul %112, %39, %cst_59 {dimension_numbers = #tpu.dot_dimension_numbers<[1], [0], [0], [1], [0, 0, 1, 1], [], []>} : vector<16x128xbf16>, vector<128x128xbf16>, vector<16x128xf32> -> vector<16x128xf32>
    %114 = vector.broadcast %41 : vector<1x128xf32> to vector<16x128xf32>
    %115 = arith.addf %113, %114 : vector<16x128xf32>
    %cst_60 = arith.constant 5.000000e-01 : f32
    %116 = vector.broadcast %cst_60 : f32 to vector<16x128xf32>
    %117 = arith.mulf %116, %115 : vector<16x128xf32>
    %cst_61 = arith.constant 4.471500e-02 : f32
    %118 = vector.broadcast %cst_61 : f32 to vector<16x128xf32>
    %119 = arith.mulf %118, %115 : vector<16x128xf32>
    %120 = arith.mulf %119, %115 : vector<16x128xf32>
    %121 = arith.mulf %120, %115 : vector<16x128xf32>
    %122 = arith.addf %115, %121 : vector<16x128xf32>
    %cst_62 = arith.constant 0.797884583 : f32
    %123 = vector.broadcast %cst_62 : f32 to vector<16x128xf32>
    %124 = arith.mulf %123, %122 : vector<16x128xf32>
    %125 = math.tanh %124 : vector<16x128xf32>
    %cst_63 = arith.constant 1.000000e+00 : f32
    %126 = vector.broadcast %cst_63 : f32 to vector<16x128xf32>
    %127 = arith.addf %126, %125 : vector<16x128xf32>
    %128 = arith.mulf %117, %127 : vector<16x128xf32>
    %129 = arith.truncf %128 : vector<16x128xf32> to vector<16x128xbf16>
    %cst_64 = arith.constant dense<0.000000e+00> : vector<16x128xf32>
    %130 = tpu.matmul %129, %43, %cst_64 {dimension_numbers = #tpu.dot_dimension_numbers<[1], [0], [0], [1], [0, 0, 1, 1], [], []>} : vector<16x128xbf16>, vector<128x128xbf16>, vector<16x128xf32> -> vector<16x128xf32>
    %131 = vector.broadcast %45 : vector<1x128xf32> to vector<16x128xf32>
    %132 = arith.addf %130, %131 : vector<16x128xf32>
    %133 = arith.addf %111, %132 : vector<16x128xf32>
    %cst_65 = arith.constant dense<0.000000e+00> : vector<16xf32>
    %134 = vector.multi_reduction <add>, %133, %cst_65 [1] : vector<16x128xf32> to vector<16xf32>
    %135 = vector.shape_cast %134 : vector<16xf32> to vector<16x1xf32>
    %cst_66 = arith.constant 3.125000e-02 : f32
    %136 = vector.broadcast %cst_66 : f32 to vector<16x1xf32>
    %137 = arith.mulf %135, %136 : vector<16x1xf32>
    %138 = arith.mulf %133, %133 : vector<16x128xf32>
    %cst_67 = arith.constant dense<0.000000e+00> : vector<16xf32>
    %139 = vector.multi_reduction <add>, %138, %cst_67 [1] : vector<16x128xf32> to vector<16xf32>
    %140 = vector.shape_cast %139 : vector<16xf32> to vector<16x1xf32>
    %cst_68 = arith.constant 3.125000e-02 : f32
    %141 = vector.broadcast %cst_68 : f32 to vector<16x1xf32>
    %142 = arith.mulf %140, %141 : vector<16x1xf32>
    %143 = arith.mulf %137, %137 : vector<16x1xf32>
    %144 = arith.subf %142, %143 : vector<16x1xf32>
    %145 = vector.broadcast %137 : vector<16x1xf32> to vector<16x128xf32>
    %146 = arith.subf %133, %145 : vector<16x128xf32>
    %cst_69 = arith.constant 9.99999996E-13 : f32
    %147 = vector.broadcast %cst_69 : f32 to vector<16x1xf32>
    %148 = arith.addf %144, %147 : vector<16x1xf32>
    %149 = math.rsqrt %148 : vector<16x1xf32>
    %150 = vector.broadcast %149 : vector<16x1xf32> to vector<16x128xf32>
    %151 = arith.mulf %146, %150 : vector<16x128xf32>
    %152 = vector.broadcast %47 : vector<1x128xf32> to vector<16x128xf32>
    %153 = arith.mulf %151, %152 : vector<16x128xf32>
    %154 = vector.broadcast %49 : vector<1x128xf32> to vector<16x128xf32>
    %155 = arith.addf %153, %154 : vector<16x128xf32>
    %c1 = arith.constant 1 : index
    %c0_70 = arith.constant 0 : index
    %c0_71 = arith.constant 0 : index
    %156 = vector.load %arg5[%c1, %c0_70, %c0_71] : memref<2x128x128xbf16, #tpu.memory_space<vmem>>, vector<1x128x128xbf16>
    %157 = vector.shape_cast %156 : vector<1x128x128xbf16> to vector<128x128xbf16>
    %c1_72 = arith.constant 1 : index
    %c0_73 = arith.constant 0 : index
    %c0_74 = arith.constant 0 : index
    %158 = vector.load %arg6[%c1_72, %c0_73, %c0_74] : memref<2x1x128xf32, #tpu.memory_space<vmem>>, vector<1x1x128xf32>
    %159 = vector.shape_cast %158 : vector<1x1x128xf32> to vector<1x128xf32>
    %c1_75 = arith.constant 1 : index
    %c0_76 = arith.constant 0 : index
    %c0_77 = arith.constant 0 : index
    %160 = vector.load %arg7[%c1_75, %c0_76, %c0_77] : memref<2x32x128xbf16, #tpu.memory_space<vmem>>, vector<1x32x128xbf16>
    %161 = vector.shape_cast %160 : vector<1x32x128xbf16> to vector<32x128xbf16>
    %c1_78 = arith.constant 1 : index
    %c0_79 = arith.constant 0 : index
    %c0_80 = arith.constant 0 : index
    %162 = vector.load %arg8[%c1_78, %c0_79, %c0_80] : memref<2x1x128xf32, #tpu.memory_space<vmem>>, vector<1x1x128xf32>
    %163 = vector.shape_cast %162 : vector<1x1x128xf32> to vector<1x128xf32>
    %c1_81 = arith.constant 1 : index
    %c0_82 = arith.constant 0 : index
    %c0_83 = arith.constant 0 : index
    %164 = vector.load %arg9[%c1_81, %c0_82, %c0_83] : memref<2x1x128xf32, #tpu.memory_space<vmem>>, vector<1x1x128xf32>
    %165 = vector.shape_cast %164 : vector<1x1x128xf32> to vector<1x128xf32>
    %c1_84 = arith.constant 1 : index
    %c0_85 = arith.constant 0 : index
    %c0_86 = arith.constant 0 : index
    %166 = vector.load %arg10[%c1_84, %c0_85, %c0_86] : memref<2x1x128xf32, #tpu.memory_space<vmem>>, vector<1x1x128xf32>
    %167 = vector.shape_cast %166 : vector<1x1x128xf32> to vector<1x128xf32>
    %c1_87 = arith.constant 1 : index
    %c0_88 = arith.constant 0 : index
    %c0_89 = arith.constant 0 : index
    %168 = vector.load %arg11[%c1_87, %c0_88, %c0_89] : memref<2x128x128xbf16, #tpu.memory_space<vmem>>, vector<1x128x128xbf16>
    %169 = vector.shape_cast %168 : vector<1x128x128xbf16> to vector<128x128xbf16>
    %c1_90 = arith.constant 1 : index
    %c0_91 = arith.constant 0 : index
    %c0_92 = arith.constant 0 : index
    %170 = vector.load %arg12[%c1_90, %c0_91, %c0_92] : memref<2x1x128xf32, #tpu.memory_space<vmem>>, vector<1x1x128xf32>
    %171 = vector.shape_cast %170 : vector<1x1x128xf32> to vector<1x128xf32>
    %c1_93 = arith.constant 1 : index
    %c0_94 = arith.constant 0 : index
    %c0_95 = arith.constant 0 : index
    %172 = vector.load %arg13[%c1_93, %c0_94, %c0_95] : memref<2x128x128xbf16, #tpu.memory_space<vmem>>, vector<1x128x128xbf16>
    %173 = vector.shape_cast %172 : vector<1x128x128xbf16> to vector<128x128xbf16>
    %c1_96 = arith.constant 1 : index
    %c0_97 = arith.constant 0 : index
    %c0_98 = arith.constant 0 : index
    %174 = vector.load %arg14[%c1_96, %c0_97, %c0_98] : memref<2x1x128xf32, #tpu.memory_space<vmem>>, vector<1x1x128xf32>
    %175 = vector.shape_cast %174 : vector<1x1x128xf32> to vector<1x128xf32>
    %c1_99 = arith.constant 1 : index
    %c0_100 = arith.constant 0 : index
    %c0_101 = arith.constant 0 : index
    %176 = vector.load %arg15[%c1_99, %c0_100, %c0_101] : memref<2x1x128xf32, #tpu.memory_space<vmem>>, vector<1x1x128xf32>
    %177 = vector.shape_cast %176 : vector<1x1x128xf32> to vector<1x128xf32>
    %c1_102 = arith.constant 1 : index
    %c0_103 = arith.constant 0 : index
    %c0_104 = arith.constant 0 : index
    %178 = vector.load %arg16[%c1_102, %c0_103, %c0_104] : memref<2x1x128xf32, #tpu.memory_space<vmem>>, vector<1x1x128xf32>
    %179 = vector.shape_cast %178 : vector<1x1x128xf32> to vector<1x128xf32>
    %180 = arith.truncf %155 : vector<16x128xf32> to vector<16x128xbf16>
    %cst_105 = arith.constant dense<0.000000e+00> : vector<16x128xf32>
    %181 = tpu.matmul %180, %157, %cst_105 {dimension_numbers = #tpu.dot_dimension_numbers<[1], [0], [0], [1], [0, 0, 1, 1], [], []>} : vector<16x128xbf16>, vector<128x128xbf16>, vector<16x128xf32> -> vector<16x128xf32>
    %182 = vector.broadcast %159 : vector<1x128xf32> to vector<16x128xf32>
    %183 = arith.addf %181, %182 : vector<16x128xf32>
    %184 = vector.extract_strided_slice %183 {offsets = [0, 0], sizes = [16, 16], strides = [1, 1]} : vector<16x128xf32> to vector<16x16xf32>
    %185 = vector.extract_strided_slice %183 {offsets = [0, 16], sizes = [16, 16], strides = [1, 1]} : vector<16x128xf32> to vector<16x16xf32>
    %186 = tpu.concatenate %184, %185 in 0 : vector<16x16xf32>, vector<16x16xf32> -> vector<32x16xf32>
    %187 = arith.truncf %186 : vector<32x16xf32> to vector<32x16xbf16>
    %188 = vector.extract_strided_slice %183 {offsets = [0, 32], sizes = [16, 16], strides = [1, 1]} : vector<16x128xf32> to vector<16x16xf32>
    %189 = vector.extract_strided_slice %183 {offsets = [0, 48], sizes = [16, 16], strides = [1, 1]} : vector<16x128xf32> to vector<16x16xf32>
    %190 = tpu.concatenate %188, %189 in 0 : vector<16x16xf32>, vector<16x16xf32> -> vector<32x16xf32>
    %191 = arith.truncf %190 : vector<32x16xf32> to vector<32x16xbf16>
    %192 = vector.extract_strided_slice %183 {offsets = [0, 64], sizes = [16, 16], strides = [1, 1]} : vector<16x128xf32> to vector<16x16xf32>
    %193 = vector.extract_strided_slice %183 {offsets = [0, 80], sizes = [16, 16], strides = [1, 1]} : vector<16x128xf32> to vector<16x16xf32>
    %194 = tpu.concatenate %192, %193 in 0 : vector<16x16xf32>, vector<16x16xf32> -> vector<32x16xf32>
    %195 = arith.truncf %194 : vector<32x16xf32> to vector<32x16xbf16>
    %cst_106 = arith.constant dense<0.000000e+00> : vector<32x32xf32>
    %196 = tpu.matmul %187, %191, %cst_106 {dimension_numbers = #tpu.dot_dimension_numbers<[1], [1], [0], [0], [0, 0, 1, 0], [], []>} : vector<32x16xbf16>, vector<32x16xbf16>, vector<32x32xf32> -> vector<32x32xf32>
    %cst_107 = arith.constant 2.500000e-01 : f32
    %197 = vector.broadcast %cst_107 : f32 to vector<32x32xf32>
    %198 = arith.mulf %196, %197 : vector<32x32xf32>
    %199 = arith.addf %198, %25 : vector<32x32xf32>
    %cst_108 = arith.constant dense<0xFF800000> : vector<32xf32>
    %200 = vector.multi_reduction <maximumf>, %199, %cst_108 [1] : vector<32x32xf32> to vector<32xf32>
    %201 = vector.shape_cast %200 : vector<32xf32> to vector<32x1xf32>
    %202 = vector.broadcast %201 : vector<32x1xf32> to vector<32x32xf32>
    %203 = arith.subf %199, %202 : vector<32x32xf32>
    %204 = math.exp %203 : vector<32x32xf32>
    %cst_109 = arith.constant dense<0.000000e+00> : vector<32xf32>
    %205 = vector.multi_reduction <add>, %204, %cst_109 [1] : vector<32x32xf32> to vector<32xf32>
    %206 = vector.shape_cast %205 : vector<32xf32> to vector<32x1xf32>
    %207 = tpu.reciprocal %206 {approx = true} : vector<32x1xf32> -> vector<32x1xf32>
    %208 = vector.broadcast %207 : vector<32x1xf32> to vector<32x32xf32>
    %209 = arith.mulf %204, %208 : vector<32x32xf32>
    %210 = arith.truncf %209 : vector<32x32xf32> to vector<32x32xbf16>
    %cst_110 = arith.constant dense<0.000000e+00> : vector<32x16xf32>
    %211 = tpu.matmul %210, %195, %cst_110 {dimension_numbers = #tpu.dot_dimension_numbers<[1], [0], [0], [1], [0, 0, 1, 1], [], []>} : vector<32x32xbf16>, vector<32x16xbf16>, vector<32x16xf32> -> vector<32x16xf32>
    %212 = vector.extract_strided_slice %211 {offsets = [0, 0], sizes = [16, 16], strides = [1, 1]} : vector<32x16xf32> to vector<16x16xf32>
    %213 = vector.extract_strided_slice %211 {offsets = [16, 0], sizes = [16, 16], strides = [1, 1]} : vector<32x16xf32> to vector<16x16xf32>
    %214 = tpu.concatenate %212, %213 in 1 : vector<16x16xf32>, vector<16x16xf32> -> vector<16x32xf32>
    %215 = arith.truncf %214 : vector<16x32xf32> to vector<16x32xbf16>
    %cst_111 = arith.constant dense<0.000000e+00> : vector<16x128xf32>
    %216 = tpu.matmul %215, %161, %cst_111 {dimension_numbers = #tpu.dot_dimension_numbers<[1], [0], [0], [1], [0, 0, 1, 1], [], []>} : vector<16x32xbf16>, vector<32x128xbf16>, vector<16x128xf32> -> vector<16x128xf32>
    %217 = vector.broadcast %163 : vector<1x128xf32> to vector<16x128xf32>
    %218 = arith.addf %216, %217 : vector<16x128xf32>
    %219 = arith.addf %155, %218 : vector<16x128xf32>
    %cst_112 = arith.constant dense<0.000000e+00> : vector<16xf32>
    %220 = vector.multi_reduction <add>, %219, %cst_112 [1] : vector<16x128xf32> to vector<16xf32>
    %221 = vector.shape_cast %220 : vector<16xf32> to vector<16x1xf32>
    %cst_113 = arith.constant 3.125000e-02 : f32
    %222 = vector.broadcast %cst_113 : f32 to vector<16x1xf32>
    %223 = arith.mulf %221, %222 : vector<16x1xf32>
    %224 = arith.mulf %219, %219 : vector<16x128xf32>
    %cst_114 = arith.constant dense<0.000000e+00> : vector<16xf32>
    %225 = vector.multi_reduction <add>, %224, %cst_114 [1] : vector<16x128xf32> to vector<16xf32>
    %226 = vector.shape_cast %225 : vector<16xf32> to vector<16x1xf32>
    %cst_115 = arith.constant 3.125000e-02 : f32
    %227 = vector.broadcast %cst_115 : f32 to vector<16x1xf32>
    %228 = arith.mulf %226, %227 : vector<16x1xf32>
    %229 = arith.mulf %223, %223 : vector<16x1xf32>
    %230 = arith.subf %228, %229 : vector<16x1xf32>
    %231 = vector.broadcast %223 : vector<16x1xf32> to vector<16x128xf32>
    %232 = arith.subf %219, %231 : vector<16x128xf32>
    %cst_116 = arith.constant 9.99999996E-13 : f32
    %233 = vector.broadcast %cst_116 : f32 to vector<16x1xf32>
    %234 = arith.addf %230, %233 : vector<16x1xf32>
    %235 = math.rsqrt %234 : vector<16x1xf32>
    %236 = vector.broadcast %235 : vector<16x1xf32> to vector<16x128xf32>
    %237 = arith.mulf %232, %236 : vector<16x128xf32>
    %238 = vector.broadcast %165 : vector<1x128xf32> to vector<16x128xf32>
    %239 = arith.mulf %237, %238 : vector<16x128xf32>
    %240 = vector.broadcast %167 : vector<1x128xf32> to vector<16x128xf32>
    %241 = arith.addf %239, %240 : vector<16x128xf32>
    %242 = arith.truncf %241 : vector<16x128xf32> to vector<16x128xbf16>
    %cst_117 = arith.constant dense<0.000000e+00> : vector<16x128xf32>
    %243 = tpu.matmul %242, %169, %cst_117 {dimension_numbers = #tpu.dot_dimension_numbers<[1], [0], [0], [1], [0, 0, 1, 1], [], []>} : vector<16x128xbf16>, vector<128x128xbf16>, vector<16x128xf32> -> vector<16x128xf32>
    %244 = vector.broadcast %171 : vector<1x128xf32> to vector<16x128xf32>
    %245 = arith.addf %243, %244 : vector<16x128xf32>
    %cst_118 = arith.constant 5.000000e-01 : f32
    %246 = vector.broadcast %cst_118 : f32 to vector<16x128xf32>
    %247 = arith.mulf %246, %245 : vector<16x128xf32>
    %cst_119 = arith.constant 4.471500e-02 : f32
    %248 = vector.broadcast %cst_119 : f32 to vector<16x128xf32>
    %249 = arith.mulf %248, %245 : vector<16x128xf32>
    %250 = arith.mulf %249, %245 : vector<16x128xf32>
    %251 = arith.mulf %250, %245 : vector<16x128xf32>
    %252 = arith.addf %245, %251 : vector<16x128xf32>
    %cst_120 = arith.constant 0.797884583 : f32
    %253 = vector.broadcast %cst_120 : f32 to vector<16x128xf32>
    %254 = arith.mulf %253, %252 : vector<16x128xf32>
    %255 = math.tanh %254 : vector<16x128xf32>
    %cst_121 = arith.constant 1.000000e+00 : f32
    %256 = vector.broadcast %cst_121 : f32 to vector<16x128xf32>
    %257 = arith.addf %256, %255 : vector<16x128xf32>
    %258 = arith.mulf %247, %257 : vector<16x128xf32>
    %259 = arith.truncf %258 : vector<16x128xf32> to vector<16x128xbf16>
    %cst_122 = arith.constant dense<0.000000e+00> : vector<16x128xf32>
    %260 = tpu.matmul %259, %173, %cst_122 {dimension_numbers = #tpu.dot_dimension_numbers<[1], [0], [0], [1], [0, 0, 1, 1], [], []>} : vector<16x128xbf16>, vector<128x128xbf16>, vector<16x128xf32> -> vector<16x128xf32>
    %261 = vector.broadcast %175 : vector<1x128xf32> to vector<16x128xf32>
    %262 = arith.addf %260, %261 : vector<16x128xf32>
    %263 = arith.addf %241, %262 : vector<16x128xf32>
    %cst_123 = arith.constant dense<0.000000e+00> : vector<16xf32>
    %264 = vector.multi_reduction <add>, %263, %cst_123 [1] : vector<16x128xf32> to vector<16xf32>
    %265 = vector.shape_cast %264 : vector<16xf32> to vector<16x1xf32>
    %cst_124 = arith.constant 3.125000e-02 : f32
    %266 = vector.broadcast %cst_124 : f32 to vector<16x1xf32>
    %267 = arith.mulf %265, %266 : vector<16x1xf32>
    %268 = arith.mulf %263, %263 : vector<16x128xf32>
    %cst_125 = arith.constant dense<0.000000e+00> : vector<16xf32>
    %269 = vector.multi_reduction <add>, %268, %cst_125 [1] : vector<16x128xf32> to vector<16xf32>
    %270 = vector.shape_cast %269 : vector<16xf32> to vector<16x1xf32>
    %cst_126 = arith.constant 3.125000e-02 : f32
    %271 = vector.broadcast %cst_126 : f32 to vector<16x1xf32>
    %272 = arith.mulf %270, %271 : vector<16x1xf32>
    %273 = arith.mulf %267, %267 : vector<16x1xf32>
    %274 = arith.subf %272, %273 : vector<16x1xf32>
    %275 = vector.broadcast %267 : vector<16x1xf32> to vector<16x128xf32>
    %276 = arith.subf %263, %275 : vector<16x128xf32>
    %cst_127 = arith.constant 9.99999996E-13 : f32
    %277 = vector.broadcast %cst_127 : f32 to vector<16x1xf32>
    %278 = arith.addf %274, %277 : vector<16x1xf32>
    %279 = math.rsqrt %278 : vector<16x1xf32>
    %280 = vector.broadcast %279 : vector<16x1xf32> to vector<16x128xf32>
    %281 = arith.mulf %276, %280 : vector<16x128xf32>
    %282 = vector.broadcast %177 : vector<1x128xf32> to vector<16x128xf32>
    %283 = arith.mulf %281, %282 : vector<16x128xf32>
    %284 = vector.broadcast %179 : vector<1x128xf32> to vector<16x128xf32>
    %285 = arith.addf %283, %284 : vector<16x128xf32>
    %286 = vector.extract_strided_slice %285 {offsets = [0, 0], sizes = [1, 128], strides = [1, 1]} : vector<16x128xf32> to vector<1x128xf32>
    %287 = vector.extract_strided_slice %285 {offsets = [8, 0], sizes = [1, 128], strides = [1, 1]} : vector<16x128xf32> to vector<1x128xf32>
    %288 = tpu.concatenate %286, %287 in 0 : vector<1x128xf32>, vector<1x128xf32> -> vector<2x128xf32>
    %289 = arith.truncf %288 : vector<2x128xf32> to vector<2x128xbf16>
    %c0_128 = arith.constant 0 : index
    %c0_129 = arith.constant 0 : index
    %290 = vector.load %arg17[%c0_128, %c0_129] : memref<128x128xbf16, #tpu.memory_space<vmem>>, vector<128x128xbf16>
    %cst_130 = arith.constant dense<0.000000e+00> : vector<2x128xf32>
    %291 = tpu.matmul %289, %290, %cst_130 {dimension_numbers = #tpu.dot_dimension_numbers<[1], [0], [0], [1], [0, 0, 1, 1], [], []>} : vector<2x128xbf16>, vector<128x128xbf16>, vector<2x128xf32> -> vector<2x128xf32>
    %c0_131 = arith.constant 0 : index
    %c0_132 = arith.constant 0 : index
    %292 = vector.load %arg18[%c0_131, %c0_132] : memref<1x128xf32, #tpu.memory_space<vmem>>, vector<1x128xf32>
    %293 = vector.broadcast %292 : vector<1x128xf32> to vector<2x128xf32>
    %294 = arith.addf %291, %293 : vector<2x128xf32>
    %295 = math.tanh %294 : vector<2x128xf32>
    %c0_133 = arith.constant 0 : index
    %c0_134 = arith.constant 0 : index
    %296 = vector.load %arg19[%c0_133, %c0_134] : memref<16x256xbf16, #tpu.memory_space<vmem>>, vector<16x256xbf16>
    %c0_135 = arith.constant 0 : index
    %c0_136 = arith.constant 0 : index
    %297 = vector.load %arg20[%c0_135, %c0_136] : memref<256x128xbf16, #tpu.memory_space<vmem>>, vector<256x128xbf16>
    %cst_137 = arith.constant dense<0.000000e+00> : vector<16x128xf32>
    %298 = tpu.matmul %296, %297, %cst_137 {dimension_numbers = #tpu.dot_dimension_numbers<[1], [0], [0], [1], [0, 0, 1, 1], [], []>} : vector<16x256xbf16>, vector<256x128xbf16>, vector<16x128xf32> -> vector<16x128xf32>
    %c0_138 = arith.constant 0 : index
    %c0_139 = arith.constant 0 : index
    %299 = vector.load %arg21[%c0_138, %c0_139] : memref<16x128xf32, #tpu.memory_space<vmem>>, vector<16x128xf32>
    %300 = arith.addf %298, %299 : vector<16x128xf32>
    %c0_140 = arith.constant 0 : index
    %c0_141 = arith.constant 0 : index
    %301 = vector.load %arg22[%c0_140, %c0_141] : memref<32x32xf32, #tpu.memory_space<vmem>>, vector<32x32xf32>
    %c0_142 = arith.constant 0 : index
    %c0_143 = arith.constant 0 : index
    %c0_144 = arith.constant 0 : index
    %302 = vector.load %arg23[%c0_142, %c0_143, %c0_144] : memref<2x128x128xbf16, #tpu.memory_space<vmem>>, vector<1x128x128xbf16>
    %303 = vector.shape_cast %302 : vector<1x128x128xbf16> to vector<128x128xbf16>
    %c0_145 = arith.constant 0 : index
    %c0_146 = arith.constant 0 : index
    %c0_147 = arith.constant 0 : index
    %304 = vector.load %arg24[%c0_145, %c0_146, %c0_147] : memref<2x1x128xf32, #tpu.memory_space<vmem>>, vector<1x1x128xf32>
    %305 = vector.shape_cast %304 : vector<1x1x128xf32> to vector<1x128xf32>
    %c0_148 = arith.constant 0 : index
    %c0_149 = arith.constant 0 : index
    %c0_150 = arith.constant 0 : index
    %306 = vector.load %arg25[%c0_148, %c0_149, %c0_150] : memref<2x32x128xbf16, #tpu.memory_space<vmem>>, vector<1x32x128xbf16>
    %307 = vector.shape_cast %306 : vector<1x32x128xbf16> to vector<32x128xbf16>
    %c0_151 = arith.constant 0 : index
    %c0_152 = arith.constant 0 : index
    %c0_153 = arith.constant 0 : index
    %308 = vector.load %arg26[%c0_151, %c0_152, %c0_153] : memref<2x1x128xf32, #tpu.memory_space<vmem>>, vector<1x1x128xf32>
    %309 = vector.shape_cast %308 : vector<1x1x128xf32> to vector<1x128xf32>
    %c0_154 = arith.constant 0 : index
    %c0_155 = arith.constant 0 : index
    %c0_156 = arith.constant 0 : index
    %310 = vector.load %arg27[%c0_154, %c0_155, %c0_156] : memref<2x1x128xf32, #tpu.memory_space<vmem>>, vector<1x1x128xf32>
    %311 = vector.shape_cast %310 : vector<1x1x128xf32> to vector<1x128xf32>
    %c0_157 = arith.constant 0 : index
    %c0_158 = arith.constant 0 : index
    %c0_159 = arith.constant 0 : index
    %312 = vector.load %arg28[%c0_157, %c0_158, %c0_159] : memref<2x1x128xf32, #tpu.memory_space<vmem>>, vector<1x1x128xf32>
    %313 = vector.shape_cast %312 : vector<1x1x128xf32> to vector<1x128xf32>
    %c0_160 = arith.constant 0 : index
    %c0_161 = arith.constant 0 : index
    %c0_162 = arith.constant 0 : index
    %314 = vector.load %arg29[%c0_160, %c0_161, %c0_162] : memref<2x128x128xbf16, #tpu.memory_space<vmem>>, vector<1x128x128xbf16>
    %315 = vector.shape_cast %314 : vector<1x128x128xbf16> to vector<128x128xbf16>
    %c0_163 = arith.constant 0 : index
    %c0_164 = arith.constant 0 : index
    %c0_165 = arith.constant 0 : index
    %316 = vector.load %arg30[%c0_163, %c0_164, %c0_165] : memref<2x1x128xf32, #tpu.memory_space<vmem>>, vector<1x1x128xf32>
    %317 = vector.shape_cast %316 : vector<1x1x128xf32> to vector<1x128xf32>
    %c0_166 = arith.constant 0 : index
    %c0_167 = arith.constant 0 : index
    %c0_168 = arith.constant 0 : index
    %318 = vector.load %arg31[%c0_166, %c0_167, %c0_168] : memref<2x128x128xbf16, #tpu.memory_space<vmem>>, vector<1x128x128xbf16>
    %319 = vector.shape_cast %318 : vector<1x128x128xbf16> to vector<128x128xbf16>
    %c0_169 = arith.constant 0 : index
    %c0_170 = arith.constant 0 : index
    %c0_171 = arith.constant 0 : index
    %320 = vector.load %arg32[%c0_169, %c0_170, %c0_171] : memref<2x1x128xf32, #tpu.memory_space<vmem>>, vector<1x1x128xf32>
    %321 = vector.shape_cast %320 : vector<1x1x128xf32> to vector<1x128xf32>
    %c0_172 = arith.constant 0 : index
    %c0_173 = arith.constant 0 : index
    %c0_174 = arith.constant 0 : index
    %322 = vector.load %arg33[%c0_172, %c0_173, %c0_174] : memref<2x1x128xf32, #tpu.memory_space<vmem>>, vector<1x1x128xf32>
    %323 = vector.shape_cast %322 : vector<1x1x128xf32> to vector<1x128xf32>
    %c0_175 = arith.constant 0 : index
    %c0_176 = arith.constant 0 : index
    %c0_177 = arith.constant 0 : index
    %324 = vector.load %arg34[%c0_175, %c0_176, %c0_177] : memref<2x1x128xf32, #tpu.memory_space<vmem>>, vector<1x1x128xf32>
    %325 = vector.shape_cast %324 : vector<1x1x128xf32> to vector<1x128xf32>
    %cst_178 = arith.constant dense<0.000000e+00> : vector<16xf32>
    %326 = vector.multi_reduction <add>, %300, %cst_178 [1] : vector<16x128xf32> to vector<16xf32>
    %327 = vector.shape_cast %326 : vector<16xf32> to vector<16x1xf32>
    %cst_179 = arith.constant 3.125000e-02 : f32
    %328 = vector.broadcast %cst_179 : f32 to vector<16x1xf32>
    %329 = arith.mulf %327, %328 : vector<16x1xf32>
    %330 = arith.mulf %300, %300 : vector<16x128xf32>
    %cst_180 = arith.constant dense<0.000000e+00> : vector<16xf32>
    %331 = vector.multi_reduction <add>, %330, %cst_180 [1] : vector<16x128xf32> to vector<16xf32>
    %332 = vector.shape_cast %331 : vector<16xf32> to vector<16x1xf32>
    %cst_181 = arith.constant 3.125000e-02 : f32
    %333 = vector.broadcast %cst_181 : f32 to vector<16x1xf32>
    %334 = arith.mulf %332, %333 : vector<16x1xf32>
    %335 = arith.mulf %329, %329 : vector<16x1xf32>
    %336 = arith.subf %334, %335 : vector<16x1xf32>
    %337 = vector.broadcast %329 : vector<16x1xf32> to vector<16x128xf32>
    %338 = arith.subf %300, %337 : vector<16x128xf32>
    %cst_182 = arith.constant 9.99999996E-13 : f32
    %339 = vector.broadcast %cst_182 : f32 to vector<16x1xf32>
    %340 = arith.addf %336, %339 : vector<16x1xf32>
    %341 = math.rsqrt %340 : vector<16x1xf32>
    %342 = vector.broadcast %341 : vector<16x1xf32> to vector<16x128xf32>
    %343 = arith.mulf %338, %342 : vector<16x128xf32>
    %344 = vector.broadcast %311 : vector<1x128xf32> to vector<16x128xf32>
    %345 = arith.mulf %343, %344 : vector<16x128xf32>
    %346 = vector.broadcast %313 : vector<1x128xf32> to vector<16x128xf32>
    %347 = arith.addf %345, %346 : vector<16x128xf32>
    %348 = arith.truncf %347 : vector<16x128xf32> to vector<16x128xbf16>
    %cst_183 = arith.constant dense<0.000000e+00> : vector<16x128xf32>
    %349 = tpu.matmul %348, %303, %cst_183 {dimension_numbers = #tpu.dot_dimension_numbers<[1], [0], [0], [1], [0, 0, 1, 1], [], []>} : vector<16x128xbf16>, vector<128x128xbf16>, vector<16x128xf32> -> vector<16x128xf32>
    %350 = vector.broadcast %305 : vector<1x128xf32> to vector<16x128xf32>
    %351 = arith.addf %349, %350 : vector<16x128xf32>
    %352 = vector.extract_strided_slice %351 {offsets = [0, 0], sizes = [16, 16], strides = [1, 1]} : vector<16x128xf32> to vector<16x16xf32>
    %353 = vector.extract_strided_slice %351 {offsets = [0, 16], sizes = [16, 16], strides = [1, 1]} : vector<16x128xf32> to vector<16x16xf32>
    %354 = tpu.concatenate %352, %353 in 0 : vector<16x16xf32>, vector<16x16xf32> -> vector<32x16xf32>
    %355 = arith.truncf %354 : vector<32x16xf32> to vector<32x16xbf16>
    %356 = vector.extract_strided_slice %351 {offsets = [0, 32], sizes = [16, 16], strides = [1, 1]} : vector<16x128xf32> to vector<16x16xf32>
    %357 = vector.extract_strided_slice %351 {offsets = [0, 48], sizes = [16, 16], strides = [1, 1]} : vector<16x128xf32> to vector<16x16xf32>
    %358 = tpu.concatenate %356, %357 in 0 : vector<16x16xf32>, vector<16x16xf32> -> vector<32x16xf32>
    %359 = arith.truncf %358 : vector<32x16xf32> to vector<32x16xbf16>
    %360 = vector.extract_strided_slice %351 {offsets = [0, 64], sizes = [16, 16], strides = [1, 1]} : vector<16x128xf32> to vector<16x16xf32>
    %361 = vector.extract_strided_slice %351 {offsets = [0, 80], sizes = [16, 16], strides = [1, 1]} : vector<16x128xf32> to vector<16x16xf32>
    %362 = tpu.concatenate %360, %361 in 0 : vector<16x16xf32>, vector<16x16xf32> -> vector<32x16xf32>
    %363 = arith.truncf %362 : vector<32x16xf32> to vector<32x16xbf16>
    %cst_184 = arith.constant dense<0.000000e+00> : vector<32x32xf32>
    %364 = tpu.matmul %355, %359, %cst_184 {dimension_numbers = #tpu.dot_dimension_numbers<[1], [1], [0], [0], [0, 0, 1, 0], [], []>} : vector<32x16xbf16>, vector<32x16xbf16>, vector<32x32xf32> -> vector<32x32xf32>
    %cst_185 = arith.constant 2.500000e-01 : f32
    %365 = vector.broadcast %cst_185 : f32 to vector<32x32xf32>
    %366 = arith.mulf %364, %365 : vector<32x32xf32>
    %367 = arith.addf %366, %301 : vector<32x32xf32>
    %cst_186 = arith.constant dense<0xFF800000> : vector<32xf32>
    %368 = vector.multi_reduction <maximumf>, %367, %cst_186 [1] : vector<32x32xf32> to vector<32xf32>
    %369 = vector.shape_cast %368 : vector<32xf32> to vector<32x1xf32>
    %370 = vector.broadcast %369 : vector<32x1xf32> to vector<32x32xf32>
    %371 = arith.subf %367, %370 : vector<32x32xf32>
    %372 = math.exp %371 : vector<32x32xf32>
    %cst_187 = arith.constant dense<0.000000e+00> : vector<32xf32>
    %373 = vector.multi_reduction <add>, %372, %cst_187 [1] : vector<32x32xf32> to vector<32xf32>
    %374 = vector.shape_cast %373 : vector<32xf32> to vector<32x1xf32>
    %375 = tpu.reciprocal %374 {approx = true} : vector<32x1xf32> -> vector<32x1xf32>
    %376 = vector.broadcast %375 : vector<32x1xf32> to vector<32x32xf32>
    %377 = arith.mulf %372, %376 : vector<32x32xf32>
    %378 = arith.truncf %377 : vector<32x32xf32> to vector<32x32xbf16>
    %cst_188 = arith.constant dense<0.000000e+00> : vector<32x16xf32>
    %379 = tpu.matmul %378, %363, %cst_188 {dimension_numbers = #tpu.dot_dimension_numbers<[1], [0], [0], [1], [0, 0, 1, 1], [], []>} : vector<32x32xbf16>, vector<32x16xbf16>, vector<32x16xf32> -> vector<32x16xf32>
    %380 = vector.extract_strided_slice %379 {offsets = [0, 0], sizes = [16, 16], strides = [1, 1]} : vector<32x16xf32> to vector<16x16xf32>
    %381 = vector.extract_strided_slice %379 {offsets = [16, 0], sizes = [16, 16], strides = [1, 1]} : vector<32x16xf32> to vector<16x16xf32>
    %382 = tpu.concatenate %380, %381 in 1 : vector<16x16xf32>, vector<16x16xf32> -> vector<16x32xf32>
    %383 = arith.truncf %382 : vector<16x32xf32> to vector<16x32xbf16>
    %cst_189 = arith.constant dense<0.000000e+00> : vector<16x128xf32>
    %384 = tpu.matmul %383, %307, %cst_189 {dimension_numbers = #tpu.dot_dimension_numbers<[1], [0], [0], [1], [0, 0, 1, 1], [], []>} : vector<16x32xbf16>, vector<32x128xbf16>, vector<16x128xf32> -> vector<16x128xf32>
    %385 = vector.broadcast %309 : vector<1x128xf32> to vector<16x128xf32>
    %386 = arith.addf %384, %385 : vector<16x128xf32>
    %387 = arith.addf %300, %386 : vector<16x128xf32>
    %cst_190 = arith.constant dense<0.000000e+00> : vector<16xf32>
    %388 = vector.multi_reduction <add>, %387, %cst_190 [1] : vector<16x128xf32> to vector<16xf32>
    %389 = vector.shape_cast %388 : vector<16xf32> to vector<16x1xf32>
    %cst_191 = arith.constant 3.125000e-02 : f32
    %390 = vector.broadcast %cst_191 : f32 to vector<16x1xf32>
    %391 = arith.mulf %389, %390 : vector<16x1xf32>
    %392 = arith.mulf %387, %387 : vector<16x128xf32>
    %cst_192 = arith.constant dense<0.000000e+00> : vector<16xf32>
    %393 = vector.multi_reduction <add>, %392, %cst_192 [1] : vector<16x128xf32> to vector<16xf32>
    %394 = vector.shape_cast %393 : vector<16xf32> to vector<16x1xf32>
    %cst_193 = arith.constant 3.125000e-02 : f32
    %395 = vector.broadcast %cst_193 : f32 to vector<16x1xf32>
    %396 = arith.mulf %394, %395 : vector<16x1xf32>
    %397 = arith.mulf %391, %391 : vector<16x1xf32>
    %398 = arith.subf %396, %397 : vector<16x1xf32>
    %399 = vector.broadcast %391 : vector<16x1xf32> to vector<16x128xf32>
    %400 = arith.subf %387, %399 : vector<16x128xf32>
    %cst_194 = arith.constant 9.99999996E-13 : f32
    %401 = vector.broadcast %cst_194 : f32 to vector<16x1xf32>
    %402 = arith.addf %398, %401 : vector<16x1xf32>
    %403 = math.rsqrt %402 : vector<16x1xf32>
    %404 = vector.broadcast %403 : vector<16x1xf32> to vector<16x128xf32>
    %405 = arith.mulf %400, %404 : vector<16x128xf32>
    %406 = vector.broadcast %323 : vector<1x128xf32> to vector<16x128xf32>
    %407 = arith.mulf %405, %406 : vector<16x128xf32>
    %408 = vector.broadcast %325 : vector<1x128xf32> to vector<16x128xf32>
    %409 = arith.addf %407, %408 : vector<16x128xf32>
    %410 = arith.truncf %409 : vector<16x128xf32> to vector<16x128xbf16>
    %cst_195 = arith.constant dense<0.000000e+00> : vector<16x128xf32>
    %411 = tpu.matmul %410, %315, %cst_195 {dimension_numbers = #tpu.dot_dimension_numbers<[1], [0], [0], [1], [0, 0, 1, 1], [], []>} : vector<16x128xbf16>, vector<128x128xbf16>, vector<16x128xf32> -> vector<16x128xf32>
    %412 = vector.broadcast %317 : vector<1x128xf32> to vector<16x128xf32>
    %413 = arith.addf %411, %412 : vector<16x128xf32>
    %cst_196 = arith.constant 5.000000e-01 : f32
    %414 = vector.broadcast %cst_196 : f32 to vector<16x128xf32>
    %415 = arith.mulf %414, %413 : vector<16x128xf32>
    %cst_197 = arith.constant 4.471500e-02 : f32
    %416 = vector.broadcast %cst_197 : f32 to vector<16x128xf32>
    %417 = arith.mulf %416, %413 : vector<16x128xf32>
    %418 = arith.mulf %417, %413 : vector<16x128xf32>
    %419 = arith.mulf %418, %413 : vector<16x128xf32>
    %420 = arith.addf %413, %419 : vector<16x128xf32>
    %cst_198 = arith.constant 0.797884583 : f32
    %421 = vector.broadcast %cst_198 : f32 to vector<16x128xf32>
    %422 = arith.mulf %421, %420 : vector<16x128xf32>
    %423 = math.tanh %422 : vector<16x128xf32>
    %cst_199 = arith.constant 1.000000e+00 : f32
    %424 = vector.broadcast %cst_199 : f32 to vector<16x128xf32>
    %425 = arith.addf %424, %423 : vector<16x128xf32>
    %426 = arith.mulf %415, %425 : vector<16x128xf32>
    %427 = arith.truncf %426 : vector<16x128xf32> to vector<16x128xbf16>
    %cst_200 = arith.constant dense<0.000000e+00> : vector<16x128xf32>
    %428 = tpu.matmul %427, %319, %cst_200 {dimension_numbers = #tpu.dot_dimension_numbers<[1], [0], [0], [1], [0, 0, 1, 1], [], []>} : vector<16x128xbf16>, vector<128x128xbf16>, vector<16x128xf32> -> vector<16x128xf32>
    %429 = vector.broadcast %321 : vector<1x128xf32> to vector<16x128xf32>
    %430 = arith.addf %428, %429 : vector<16x128xf32>
    %431 = arith.addf %387, %430 : vector<16x128xf32>
    %c1_201 = arith.constant 1 : index
    %c0_202 = arith.constant 0 : index
    %c0_203 = arith.constant 0 : index
    %432 = vector.load %arg23[%c1_201, %c0_202, %c0_203] : memref<2x128x128xbf16, #tpu.memory_space<vmem>>, vector<1x128x128xbf16>
    %433 = vector.shape_cast %432 : vector<1x128x128xbf16> to vector<128x128xbf16>
    %c1_204 = arith.constant 1 : index
    %c0_205 = arith.constant 0 : index
    %c0_206 = arith.constant 0 : index
    %434 = vector.load %arg24[%c1_204, %c0_205, %c0_206] : memref<2x1x128xf32, #tpu.memory_space<vmem>>, vector<1x1x128xf32>
    %435 = vector.shape_cast %434 : vector<1x1x128xf32> to vector<1x128xf32>
    %c1_207 = arith.constant 1 : index
    %c0_208 = arith.constant 0 : index
    %c0_209 = arith.constant 0 : index
    %436 = vector.load %arg25[%c1_207, %c0_208, %c0_209] : memref<2x32x128xbf16, #tpu.memory_space<vmem>>, vector<1x32x128xbf16>
    %437 = vector.shape_cast %436 : vector<1x32x128xbf16> to vector<32x128xbf16>
    %c1_210 = arith.constant 1 : index
    %c0_211 = arith.constant 0 : index
    %c0_212 = arith.constant 0 : index
    %438 = vector.load %arg26[%c1_210, %c0_211, %c0_212] : memref<2x1x128xf32, #tpu.memory_space<vmem>>, vector<1x1x128xf32>
    %439 = vector.shape_cast %438 : vector<1x1x128xf32> to vector<1x128xf32>
    %c1_213 = arith.constant 1 : index
    %c0_214 = arith.constant 0 : index
    %c0_215 = arith.constant 0 : index
    %440 = vector.load %arg27[%c1_213, %c0_214, %c0_215] : memref<2x1x128xf32, #tpu.memory_space<vmem>>, vector<1x1x128xf32>
    %441 = vector.shape_cast %440 : vector<1x1x128xf32> to vector<1x128xf32>
    %c1_216 = arith.constant 1 : index
    %c0_217 = arith.constant 0 : index
    %c0_218 = arith.constant 0 : index
    %442 = vector.load %arg28[%c1_216, %c0_217, %c0_218] : memref<2x1x128xf32, #tpu.memory_space<vmem>>, vector<1x1x128xf32>
    %443 = vector.shape_cast %442 : vector<1x1x128xf32> to vector<1x128xf32>
    %c1_219 = arith.constant 1 : index
    %c0_220 = arith.constant 0 : index
    %c0_221 = arith.constant 0 : index
    %444 = vector.load %arg29[%c1_219, %c0_220, %c0_221] : memref<2x128x128xbf16, #tpu.memory_space<vmem>>, vector<1x128x128xbf16>
    %445 = vector.shape_cast %444 : vector<1x128x128xbf16> to vector<128x128xbf16>
    %c1_222 = arith.constant 1 : index
    %c0_223 = arith.constant 0 : index
    %c0_224 = arith.constant 0 : index
    %446 = vector.load %arg30[%c1_222, %c0_223, %c0_224] : memref<2x1x128xf32, #tpu.memory_space<vmem>>, vector<1x1x128xf32>
    %447 = vector.shape_cast %446 : vector<1x1x128xf32> to vector<1x128xf32>
    %c1_225 = arith.constant 1 : index
    %c0_226 = arith.constant 0 : index
    %c0_227 = arith.constant 0 : index
    %448 = vector.load %arg31[%c1_225, %c0_226, %c0_227] : memref<2x128x128xbf16, #tpu.memory_space<vmem>>, vector<1x128x128xbf16>
    %449 = vector.shape_cast %448 : vector<1x128x128xbf16> to vector<128x128xbf16>
    %c1_228 = arith.constant 1 : index
    %c0_229 = arith.constant 0 : index
    %c0_230 = arith.constant 0 : index
    %450 = vector.load %arg32[%c1_228, %c0_229, %c0_230] : memref<2x1x128xf32, #tpu.memory_space<vmem>>, vector<1x1x128xf32>
    %451 = vector.shape_cast %450 : vector<1x1x128xf32> to vector<1x128xf32>
    %c1_231 = arith.constant 1 : index
    %c0_232 = arith.constant 0 : index
    %c0_233 = arith.constant 0 : index
    %452 = vector.load %arg33[%c1_231, %c0_232, %c0_233] : memref<2x1x128xf32, #tpu.memory_space<vmem>>, vector<1x1x128xf32>
    %453 = vector.shape_cast %452 : vector<1x1x128xf32> to vector<1x128xf32>
    %c1_234 = arith.constant 1 : index
    %c0_235 = arith.constant 0 : index
    %c0_236 = arith.constant 0 : index
    %454 = vector.load %arg34[%c1_234, %c0_235, %c0_236] : memref<2x1x128xf32, #tpu.memory_space<vmem>>, vector<1x1x128xf32>
    %455 = vector.shape_cast %454 : vector<1x1x128xf32> to vector<1x128xf32>
    %cst_237 = arith.constant dense<0.000000e+00> : vector<16xf32>
    %456 = vector.multi_reduction <add>, %431, %cst_237 [1] : vector<16x128xf32> to vector<16xf32>
    %457 = vector.shape_cast %456 : vector<16xf32> to vector<16x1xf32>
    %cst_238 = arith.constant 3.125000e-02 : f32
    %458 = vector.broadcast %cst_238 : f32 to vector<16x1xf32>
    %459 = arith.mulf %457, %458 : vector<16x1xf32>
    %460 = arith.mulf %431, %431 : vector<16x128xf32>
    %cst_239 = arith.constant dense<0.000000e+00> : vector<16xf32>
    %461 = vector.multi_reduction <add>, %460, %cst_239 [1] : vector<16x128xf32> to vector<16xf32>
    %462 = vector.shape_cast %461 : vector<16xf32> to vector<16x1xf32>
    %cst_240 = arith.constant 3.125000e-02 : f32
    %463 = vector.broadcast %cst_240 : f32 to vector<16x1xf32>
    %464 = arith.mulf %462, %463 : vector<16x1xf32>
    %465 = arith.mulf %459, %459 : vector<16x1xf32>
    %466 = arith.subf %464, %465 : vector<16x1xf32>
    %467 = vector.broadcast %459 : vector<16x1xf32> to vector<16x128xf32>
    %468 = arith.subf %431, %467 : vector<16x128xf32>
    %cst_241 = arith.constant 9.99999996E-13 : f32
    %469 = vector.broadcast %cst_241 : f32 to vector<16x1xf32>
    %470 = arith.addf %466, %469 : vector<16x1xf32>
    %471 = math.rsqrt %470 : vector<16x1xf32>
    %472 = vector.broadcast %471 : vector<16x1xf32> to vector<16x128xf32>
    %473 = arith.mulf %468, %472 : vector<16x128xf32>
    %474 = vector.broadcast %441 : vector<1x128xf32> to vector<16x128xf32>
    %475 = arith.mulf %473, %474 : vector<16x128xf32>
    %476 = vector.broadcast %443 : vector<1x128xf32> to vector<16x128xf32>
    %477 = arith.addf %475, %476 : vector<16x128xf32>
    %478 = arith.truncf %477 : vector<16x128xf32> to vector<16x128xbf16>
    %cst_242 = arith.constant dense<0.000000e+00> : vector<16x128xf32>
    %479 = tpu.matmul %478, %433, %cst_242 {dimension_numbers = #tpu.dot_dimension_numbers<[1], [0], [0], [1], [0, 0, 1, 1], [], []>} : vector<16x128xbf16>, vector<128x128xbf16>, vector<16x128xf32> -> vector<16x128xf32>
    %480 = vector.broadcast %435 : vector<1x128xf32> to vector<16x128xf32>
    %481 = arith.addf %479, %480 : vector<16x128xf32>
    %482 = vector.extract_strided_slice %481 {offsets = [0, 0], sizes = [16, 16], strides = [1, 1]} : vector<16x128xf32> to vector<16x16xf32>
    %483 = vector.extract_strided_slice %481 {offsets = [0, 16], sizes = [16, 16], strides = [1, 1]} : vector<16x128xf32> to vector<16x16xf32>
    %484 = tpu.concatenate %482, %483 in 0 : vector<16x16xf32>, vector<16x16xf32> -> vector<32x16xf32>
    %485 = arith.truncf %484 : vector<32x16xf32> to vector<32x16xbf16>
    %486 = vector.extract_strided_slice %481 {offsets = [0, 32], sizes = [16, 16], strides = [1, 1]} : vector<16x128xf32> to vector<16x16xf32>
    %487 = vector.extract_strided_slice %481 {offsets = [0, 48], sizes = [16, 16], strides = [1, 1]} : vector<16x128xf32> to vector<16x16xf32>
    %488 = tpu.concatenate %486, %487 in 0 : vector<16x16xf32>, vector<16x16xf32> -> vector<32x16xf32>
    %489 = arith.truncf %488 : vector<32x16xf32> to vector<32x16xbf16>
    %490 = vector.extract_strided_slice %481 {offsets = [0, 64], sizes = [16, 16], strides = [1, 1]} : vector<16x128xf32> to vector<16x16xf32>
    %491 = vector.extract_strided_slice %481 {offsets = [0, 80], sizes = [16, 16], strides = [1, 1]} : vector<16x128xf32> to vector<16x16xf32>
    %492 = tpu.concatenate %490, %491 in 0 : vector<16x16xf32>, vector<16x16xf32> -> vector<32x16xf32>
    %493 = arith.truncf %492 : vector<32x16xf32> to vector<32x16xbf16>
    %cst_243 = arith.constant dense<0.000000e+00> : vector<32x32xf32>
    %494 = tpu.matmul %485, %489, %cst_243 {dimension_numbers = #tpu.dot_dimension_numbers<[1], [1], [0], [0], [0, 0, 1, 0], [], []>} : vector<32x16xbf16>, vector<32x16xbf16>, vector<32x32xf32> -> vector<32x32xf32>
    %cst_244 = arith.constant 2.500000e-01 : f32
    %495 = vector.broadcast %cst_244 : f32 to vector<32x32xf32>
    %496 = arith.mulf %494, %495 : vector<32x32xf32>
    %497 = arith.addf %496, %301 : vector<32x32xf32>
    %cst_245 = arith.constant dense<0xFF800000> : vector<32xf32>
    %498 = vector.multi_reduction <maximumf>, %497, %cst_245 [1] : vector<32x32xf32> to vector<32xf32>
    %499 = vector.shape_cast %498 : vector<32xf32> to vector<32x1xf32>
    %500 = vector.broadcast %499 : vector<32x1xf32> to vector<32x32xf32>
    %501 = arith.subf %497, %500 : vector<32x32xf32>
    %502 = math.exp %501 : vector<32x32xf32>
    %cst_246 = arith.constant dense<0.000000e+00> : vector<32xf32>
    %503 = vector.multi_reduction <add>, %502, %cst_246 [1] : vector<32x32xf32> to vector<32xf32>
    %504 = vector.shape_cast %503 : vector<32xf32> to vector<32x1xf32>
    %505 = tpu.reciprocal %504 {approx = true} : vector<32x1xf32> -> vector<32x1xf32>
    %506 = vector.broadcast %505 : vector<32x1xf32> to vector<32x32xf32>
    %507 = arith.mulf %502, %506 : vector<32x32xf32>
    %508 = arith.truncf %507 : vector<32x32xf32> to vector<32x32xbf16>
    %cst_247 = arith.constant dense<0.000000e+00> : vector<32x16xf32>
    %509 = tpu.matmul %508, %493, %cst_247 {dimension_numbers = #tpu.dot_dimension_numbers<[1], [0], [0], [1], [0, 0, 1, 1], [], []>} : vector<32x32xbf16>, vector<32x16xbf16>, vector<32x16xf32> -> vector<32x16xf32>
    %510 = vector.extract_strided_slice %509 {offsets = [0, 0], sizes = [16, 16], strides = [1, 1]} : vector<32x16xf32> to vector<16x16xf32>
    %511 = vector.extract_strided_slice %509 {offsets = [16, 0], sizes = [16, 16], strides = [1, 1]} : vector<32x16xf32> to vector<16x16xf32>
    %512 = tpu.concatenate %510, %511 in 1 : vector<16x16xf32>, vector<16x16xf32> -> vector<16x32xf32>
    %513 = arith.truncf %512 : vector<16x32xf32> to vector<16x32xbf16>
    %cst_248 = arith.constant dense<0.000000e+00> : vector<16x128xf32>
    %514 = tpu.matmul %513, %437, %cst_248 {dimension_numbers = #tpu.dot_dimension_numbers<[1], [0], [0], [1], [0, 0, 1, 1], [], []>} : vector<16x32xbf16>, vector<32x128xbf16>, vector<16x128xf32> -> vector<16x128xf32>
    %515 = vector.broadcast %439 : vector<1x128xf32> to vector<16x128xf32>
    %516 = arith.addf %514, %515 : vector<16x128xf32>
    %517 = arith.addf %431, %516 : vector<16x128xf32>
    %cst_249 = arith.constant dense<0.000000e+00> : vector<16xf32>
    %518 = vector.multi_reduction <add>, %517, %cst_249 [1] : vector<16x128xf32> to vector<16xf32>
    %519 = vector.shape_cast %518 : vector<16xf32> to vector<16x1xf32>
    %cst_250 = arith.constant 3.125000e-02 : f32
    %520 = vector.broadcast %cst_250 : f32 to vector<16x1xf32>
    %521 = arith.mulf %519, %520 : vector<16x1xf32>
    %522 = arith.mulf %517, %517 : vector<16x128xf32>
    %cst_251 = arith.constant dense<0.000000e+00> : vector<16xf32>
    %523 = vector.multi_reduction <add>, %522, %cst_251 [1] : vector<16x128xf32> to vector<16xf32>
    %524 = vector.shape_cast %523 : vector<16xf32> to vector<16x1xf32>
    %cst_252 = arith.constant 3.125000e-02 : f32
    %525 = vector.broadcast %cst_252 : f32 to vector<16x1xf32>
    %526 = arith.mulf %524, %525 : vector<16x1xf32>
    %527 = arith.mulf %521, %521 : vector<16x1xf32>
    %528 = arith.subf %526, %527 : vector<16x1xf32>
    %529 = vector.broadcast %521 : vector<16x1xf32> to vector<16x128xf32>
    %530 = arith.subf %517, %529 : vector<16x128xf32>
    %cst_253 = arith.constant 9.99999996E-13 : f32
    %531 = vector.broadcast %cst_253 : f32 to vector<16x1xf32>
    %532 = arith.addf %528, %531 : vector<16x1xf32>
    %533 = math.rsqrt %532 : vector<16x1xf32>
    %534 = vector.broadcast %533 : vector<16x1xf32> to vector<16x128xf32>
    %535 = arith.mulf %530, %534 : vector<16x128xf32>
    %536 = vector.broadcast %453 : vector<1x128xf32> to vector<16x128xf32>
    %537 = arith.mulf %535, %536 : vector<16x128xf32>
    %538 = vector.broadcast %455 : vector<1x128xf32> to vector<16x128xf32>
    %539 = arith.addf %537, %538 : vector<16x128xf32>
    %540 = arith.truncf %539 : vector<16x128xf32> to vector<16x128xbf16>
    %cst_254 = arith.constant dense<0.000000e+00> : vector<16x128xf32>
    %541 = tpu.matmul %540, %445, %cst_254 {dimension_numbers = #tpu.dot_dimension_numbers<[1], [0], [0], [1], [0, 0, 1, 1], [], []>} : vector<16x128xbf16>, vector<128x128xbf16>, vector<16x128xf32> -> vector<16x128xf32>
    %542 = vector.broadcast %447 : vector<1x128xf32> to vector<16x128xf32>
    %543 = arith.addf %541, %542 : vector<16x128xf32>
    %cst_255 = arith.constant 5.000000e-01 : f32
    %544 = vector.broadcast %cst_255 : f32 to vector<16x128xf32>
    %545 = arith.mulf %544, %543 : vector<16x128xf32>
    %cst_256 = arith.constant 4.471500e-02 : f32
    %546 = vector.broadcast %cst_256 : f32 to vector<16x128xf32>
    %547 = arith.mulf %546, %543 : vector<16x128xf32>
    %548 = arith.mulf %547, %543 : vector<16x128xf32>
    %549 = arith.mulf %548, %543 : vector<16x128xf32>
    %550 = arith.addf %543, %549 : vector<16x128xf32>
    %cst_257 = arith.constant 0.797884583 : f32
    %551 = vector.broadcast %cst_257 : f32 to vector<16x128xf32>
    %552 = arith.mulf %551, %550 : vector<16x128xf32>
    %553 = math.tanh %552 : vector<16x128xf32>
    %cst_258 = arith.constant 1.000000e+00 : f32
    %554 = vector.broadcast %cst_258 : f32 to vector<16x128xf32>
    %555 = arith.addf %554, %553 : vector<16x128xf32>
    %556 = arith.mulf %545, %555 : vector<16x128xf32>
    %557 = arith.truncf %556 : vector<16x128xf32> to vector<16x128xbf16>
    %cst_259 = arith.constant dense<0.000000e+00> : vector<16x128xf32>
    %558 = tpu.matmul %557, %449, %cst_259 {dimension_numbers = #tpu.dot_dimension_numbers<[1], [0], [0], [1], [0, 0, 1, 1], [], []>} : vector<16x128xbf16>, vector<128x128xbf16>, vector<16x128xf32> -> vector<16x128xf32>
    %559 = vector.broadcast %451 : vector<1x128xf32> to vector<16x128xf32>
    %560 = arith.addf %558, %559 : vector<16x128xf32>
    %561 = arith.addf %517, %560 : vector<16x128xf32>
    %562 = vector.extract_strided_slice %561 {offsets = [0, 0], sizes = [1, 128], strides = [1, 1]} : vector<16x128xf32> to vector<1x128xf32>
    %563 = vector.extract_strided_slice %561 {offsets = [8, 0], sizes = [1, 128], strides = [1, 1]} : vector<16x128xf32> to vector<1x128xf32>
    %564 = tpu.concatenate %562, %563 in 0 : vector<1x128xf32>, vector<1x128xf32> -> vector<2x128xf32>
    %c0_260 = arith.constant 0 : index
    %c0_261 = arith.constant 0 : index
    %565 = vector.load %arg35[%c0_260, %c0_261] : memref<1x128xf32, #tpu.memory_space<vmem>>, vector<1x128xf32>
    %c0_262 = arith.constant 0 : index
    %c0_263 = arith.constant 0 : index
    %566 = vector.load %arg36[%c0_262, %c0_263] : memref<1x128xf32, #tpu.memory_space<vmem>>, vector<1x128xf32>
    %cst_264 = arith.constant dense<0.000000e+00> : vector<2xf32>
    %567 = vector.multi_reduction <add>, %564, %cst_264 [1] : vector<2x128xf32> to vector<2xf32>
    %568 = vector.shape_cast %567 : vector<2xf32> to vector<2x1xf32>
    %cst_265 = arith.constant 3.125000e-02 : f32
    %569 = vector.broadcast %cst_265 : f32 to vector<2x1xf32>
    %570 = arith.mulf %568, %569 : vector<2x1xf32>
    %571 = arith.mulf %564, %564 : vector<2x128xf32>
    %cst_266 = arith.constant dense<0.000000e+00> : vector<2xf32>
    %572 = vector.multi_reduction <add>, %571, %cst_266 [1] : vector<2x128xf32> to vector<2xf32>
    %573 = vector.shape_cast %572 : vector<2xf32> to vector<2x1xf32>
    %cst_267 = arith.constant 3.125000e-02 : f32
    %574 = vector.broadcast %cst_267 : f32 to vector<2x1xf32>
    %575 = arith.mulf %573, %574 : vector<2x1xf32>
    %576 = arith.mulf %570, %570 : vector<2x1xf32>
    %577 = arith.subf %575, %576 : vector<2x1xf32>
    %578 = vector.broadcast %570 : vector<2x1xf32> to vector<2x128xf32>
    %579 = arith.subf %564, %578 : vector<2x128xf32>
    %cst_268 = arith.constant 9.99999996E-13 : f32
    %580 = vector.broadcast %cst_268 : f32 to vector<2x1xf32>
    %581 = arith.addf %577, %580 : vector<2x1xf32>
    %582 = math.rsqrt %581 : vector<2x1xf32>
    %583 = vector.broadcast %582 : vector<2x1xf32> to vector<2x128xf32>
    %584 = arith.mulf %579, %583 : vector<2x128xf32>
    %585 = vector.broadcast %565 : vector<1x128xf32> to vector<2x128xf32>
    %586 = arith.mulf %584, %585 : vector<2x128xf32>
    %587 = vector.broadcast %566 : vector<1x128xf32> to vector<2x128xf32>
    %588 = arith.addf %586, %587 : vector<2x128xf32>
    %589 = arith.truncf %588 : vector<2x128xf32> to vector<2x128xbf16>
    %c0_269 = arith.constant 0 : index
    %c0_270 = arith.constant 0 : index
    %590 = vector.load %arg37[%c0_269, %c0_270] : memref<128x128xbf16, #tpu.memory_space<vmem>>, vector<128x128xbf16>
    %cst_271 = arith.constant dense<0.000000e+00> : vector<2x128xf32>
    %591 = tpu.matmul %589, %590, %cst_271 {dimension_numbers = #tpu.dot_dimension_numbers<[1], [0], [0], [1], [0, 0, 1, 1], [], []>} : vector<2x128xbf16>, vector<128x128xbf16>, vector<2x128xf32> -> vector<2x128xf32>
    %c0_272 = arith.constant 0 : index
    %c0_273 = arith.constant 0 : index
    %592 = vector.load %arg38[%c0_272, %c0_273] : memref<1x128xf32, #tpu.memory_space<vmem>>, vector<1x128xf32>
    %593 = vector.broadcast %592 : vector<1x128xf32> to vector<2x128xf32>
    %594 = arith.addf %591, %593 : vector<2x128xf32>
    %595 = math.tanh %594 : vector<2x128xf32>
    %596 = arith.truncf %295 : vector<2x128xf32> to vector<2x128xbf16>
    %c0_274 = arith.constant 0 : index
    %c0_275 = arith.constant 0 : index
    %597 = vector.load %arg39[%c0_274, %c0_275] : memref<128x128xbf16, #tpu.memory_space<vmem>>, vector<128x128xbf16>
    %cst_276 = arith.constant dense<0.000000e+00> : vector<2x128xf32>
    %598 = tpu.matmul %596, %597, %cst_276 {dimension_numbers = #tpu.dot_dimension_numbers<[1], [0], [0], [1], [0, 0, 1, 1], [], []>} : vector<2x128xbf16>, vector<128x128xbf16>, vector<2x128xf32> -> vector<2x128xf32>
    %599 = arith.truncf %595 : vector<2x128xf32> to vector<2x128xbf16>
    %c0_277 = arith.constant 0 : index
    %c0_278 = arith.constant 0 : index
    %600 = vector.load %arg40[%c0_277, %c0_278] : memref<128x128xbf16, #tpu.memory_space<vmem>>, vector<128x128xbf16>
    %cst_279 = arith.constant dense<0.000000e+00> : vector<2x128xf32>
    %601 = tpu.matmul %599, %600, %cst_279 {dimension_numbers = #tpu.dot_dimension_numbers<[1], [0], [0], [1], [0, 0, 1, 1], [], []>} : vector<2x128xbf16>, vector<128x128xbf16>, vector<2x128xf32> -> vector<2x128xf32>
    %602 = arith.addf %598, %601 : vector<2x128xf32>
    %c0_280 = arith.constant 0 : index
    %c0_281 = arith.constant 0 : index
    %603 = vector.load %arg41[%c0_280, %c0_281] : memref<1x128xf32, #tpu.memory_space<vmem>>, vector<1x128xf32>
    %604 = vector.broadcast %603 : vector<1x128xf32> to vector<2x128xf32>
    %605 = arith.addf %602, %604 : vector<2x128xf32>
    %c0_282 = arith.constant 0 : index
    %c0_283 = arith.constant 0 : index
    %606 = vector.load %arg42[%c0_282, %c0_283] : memref<2x128xf32, #tpu.memory_space<vmem>>, vector<2x128xf32>
    tpu.vector_store %arg42[%c0_282, %c0_283], %605 {strides = array<i32>} : memref<2x128xf32, #tpu.memory_space<vmem>>, vector<2x128xf32>,
    %c0_284 = arith.constant 0 : index
    %c0_285 = arith.constant 0 : index
    %607 = vector.load %arg43[%c0_284, %c0_285] : memref<2x128xf32, #tpu.memory_space<vmem>>, vector<2x128xf32>
    tpu.vector_store %arg43[%c0_284, %c0_285], %295 {strides = array<i32>} : memref<2x128xf32, #tpu.memory_space<vmem>>, vector<2x128xf32>,
    %c0_286 = arith.constant 0 : index
    %c0_287 = arith.constant 0 : index
    %608 = vector.load %arg44[%c0_286, %c0_287] : memref<2x128xf32, #tpu.memory_space<vmem>>, vector<2x128xf32>
    tpu.vector_store %arg44[%c0_286, %c0_287], %595 {strides = array<i32>} : memref<2x128xf32, #tpu.memory_space<vmem>>, vector<2x128xf32>,
    return
  }
  func.func @transform_0(%arg0: i32) -> (i32, i32) {
    %c0_i32 = arith.constant 0 : i32
    %c0_i32_0 = arith.constant 0 : i32
    %c0_i32_1 = arith.constant 0 : i32
    return %c0_i32, %c0_i32_0 : i32, i32
  }
  func.func @transform_1(%arg0: i32) -> (i32, i32) {
    %c0_i32 = arith.constant 0 : i32
    %c0_i32_0 = arith.constant 0 : i32
    %c0_i32_1 = arith.constant 0 : i32
    return %c0_i32, %c0_i32_0 : i32, i32
  }
  func.func @transform_2(%arg0: i32) -> (i32, i32) {
    %c0_i32 = arith.constant 0 : i32
    %c0_i32_0 = arith.constant 0 : i32
    %c0_i32_1 = arith.constant 0 : i32
    return %c0_i32, %c0_i32_0 : i32, i32
  }
  func.func @transform_3(%arg0: i32) -> (i32, i32) {
    %c0_i32 = arith.constant 0 : i32
    %c0_i32_0 = arith.constant 0 : i32
    %c0_i32_1 = arith.constant 0 : i32
    return %c0_i32, %c0_i32_0 : i32, i32
  }
  func.func @transform_4(%arg0: i32) -> (i32, i32, i32) {
    %c0_i32 = arith.constant 0 : i32
    %c0_i32_0 = arith.constant 0 : i32
    %c0_i32_1 = arith.constant 0 : i32
    %c0_i32_2 = arith.constant 0 : i32
    return %c0_i32, %c0_i32_0, %c0_i32_1 : i32, i32, i32
  }
  func.func @transform_5(%arg0: i32) -> (i32, i32, i32) {
    %c0_i32 = arith.constant 0 : i32
    %c0_i32_0 = arith.constant 0 : i32
    %c0_i32_1 = arith.constant 0 : i32
    %c0_i32_2 = arith.constant 0 : i32
    return %c0_i32, %c0_i32_0, %c0_i32_1 : i32, i32, i32
  }
  func.func @transform_6(%arg0: i32) -> (i32, i32, i32) {
    %c0_i32 = arith.constant 0 : i32
    %c0_i32_0 = arith.constant 0 : i32
    %c0_i32_1 = arith.constant 0 : i32
    %c0_i32_2 = arith.constant 0 : i32
    return %c0_i32, %c0_i32_0, %c0_i32_1 : i32, i32, i32
  }
  func.func @transform_7(%arg0: i32) -> (i32, i32, i32) {
    %c0_i32 = arith.constant 0 : i32
    %c0_i32_0 = arith.constant 0 : i32
    %c0_i32_1 = arith.constant 0 : i32
    %c0_i32_2 = arith.constant 0 : i32
    return %c0_i32, %c0_i32_0, %c0_i32_1 : i32, i32, i32
  }
  func.func @transform_8(%arg0: i32) -> (i32, i32, i32) {
    %c0_i32 = arith.constant 0 : i32
    %c0_i32_0 = arith.constant 0 : i32
    %c0_i32_1 = arith.constant 0 : i32
    %c0_i32_2 = arith.constant 0 : i32
    return %c0_i32, %c0_i32_0, %c0_i32_1 : i32, i32, i32
  }
  func.func @transform_9(%arg0: i32) -> (i32, i32, i32) {
    %c0_i32 = arith.constant 0 : i32
    %c0_i32_0 = arith.constant 0 : i32
    %c0_i32_1 = arith.constant 0 : i32
    %c0_i32_2 = arith.constant 0 : i32
    return %c0_i32, %c0_i32_0, %c0_i32_1 : i32, i32, i32
  }
  func.func @transform_10(%arg0: i32) -> (i32, i32, i32) {
    %c0_i32 = arith.constant 0 : i32
    %c0_i32_0 = arith.constant 0 : i32
    %c0_i32_1 = arith.constant 0 : i32
    %c0_i32_2 = arith.constant 0 : i32
    return %c0_i32, %c0_i32_0, %c0_i32_1 : i32, i32, i32
  }
  func.func @transform_11(%arg0: i32) -> (i32, i32, i32) {
    %c0_i32 = arith.constant 0 : i32
    %c0_i32_0 = arith.constant 0 : i32
    %c0_i32_1 = arith.constant 0 : i32
    %c0_i32_2 = arith.constant 0 : i32
    return %c0_i32, %c0_i32_0, %c0_i32_1 : i32, i32, i32
  }
  func.func @transform_12(%arg0: i32) -> (i32, i32, i32) {
    %c0_i32 = arith.constant 0 : i32
    %c0_i32_0 = arith.constant 0 : i32
    %c0_i32_1 = arith.constant 0 : i32
    %c0_i32_2 = arith.constant 0 : i32
    return %c0_i32, %c0_i32_0, %c0_i32_1 : i32, i32, i32
  }
  func.func @transform_13(%arg0: i32) -> (i32, i32, i32) {
    %c0_i32 = arith.constant 0 : i32
    %c0_i32_0 = arith.constant 0 : i32
    %c0_i32_1 = arith.constant 0 : i32
    %c0_i32_2 = arith.constant 0 : i32
    return %c0_i32, %c0_i32_0, %c0_i32_1 : i32, i32, i32
  }
  func.func @transform_14(%arg0: i32) -> (i32, i32, i32) {
    %c0_i32 = arith.constant 0 : i32
    %c0_i32_0 = arith.constant 0 : i32
    %c0_i32_1 = arith.constant 0 : i32
    %c0_i32_2 = arith.constant 0 : i32
    return %c0_i32, %c0_i32_0, %c0_i32_1 : i32, i32, i32
  }
  func.func @transform_15(%arg0: i32) -> (i32, i32, i32) {
    %c0_i32 = arith.constant 0 : i32
    %c0_i32_0 = arith.constant 0 : i32
    %c0_i32_1 = arith.constant 0 : i32
    %c0_i32_2 = arith.constant 0 : i32
    return %c0_i32, %c0_i32_0, %c0_i32_1 : i32, i32, i32
  }
  func.func @transform_16(%arg0: i32) -> (i32, i32) {
    %c0_i32 = arith.constant 0 : i32
    %c0_i32_0 = arith.constant 0 : i32
    %c0_i32_1 = arith.constant 0 : i32
    return %c0_i32, %c0_i32_0 : i32, i32
  }
  func.func @transform_17(%arg0: i32) -> (i32, i32) {
    %c0_i32 = arith.constant 0 : i32
    %c0_i32_0 = arith.constant 0 : i32
    %c0_i32_1 = arith.constant 0 : i32
    return %c0_i32, %c0_i32_0 : i32, i32
  }
  func.func @transform_18(%arg0: i32) -> (i32, i32) {
    %c0_i32 = arith.constant 0 : i32
    %c0_i32_0 = arith.constant 0 : i32
    %c0_i32_1 = arith.constant 0 : i32
    return %c0_i32, %c0_i32_0 : i32, i32
  }
  func.func @transform_19(%arg0: i32) -> (i32, i32) {
    %c0_i32 = arith.constant 0 : i32
    %c0_i32_0 = arith.constant 0 : i32
    %c0_i32_1 = arith.constant 0 : i32
    return %c0_i32, %c0_i32_0 : i32, i32
  }
  func.func @transform_20(%arg0: i32) -> (i32, i32) {
    %c0_i32 = arith.constant 0 : i32
    %c0_i32_0 = arith.constant 0 : i32
    %c0_i32_1 = arith.constant 0 : i32
    return %c0_i32, %c0_i32_0 : i32, i32
  }
  func.func @transform_21(%arg0: i32) -> (i32, i32) {
    %c0_i32 = arith.constant 0 : i32
    %c0_i32_0 = arith.constant 0 : i32
    %c0_i32_1 = arith.constant 0 : i32
    return %c0_i32, %c0_i32_0 : i32, i32
  }
  func.func @transform_22(%arg0: i32) -> (i32, i32, i32) {
    %c0_i32 = arith.constant 0 : i32
    %c0_i32_0 = arith.constant 0 : i32
    %c0_i32_1 = arith.constant 0 : i32
    %c0_i32_2 = arith.constant 0 : i32
    return %c0_i32, %c0_i32_0, %c0_i32_1 : i32, i32, i32
  }
  func.func @transform_23(%arg0: i32) -> (i32, i32, i32) {
    %c0_i32 = arith.constant 0 : i32
    %c0_i32_0 = arith.constant 0 : i32
    %c0_i32_1 = arith.constant 0 : i32
    %c0_i32_2 = arith.constant 0 : i32
    return %c0_i32, %c0_i32_0, %c0_i32_1 : i32, i32, i32
  }
  func.func @transform_24(%arg0: i32) -> (i32, i32, i32) {
    %c0_i32 = arith.constant 0 : i32
    %c0_i32_0 = arith.constant 0 : i32
    %c0_i32_1 = arith.constant 0 : i32
    %c0_i32_2 = arith.constant 0 : i32
    return %c0_i32, %c0_i32_0, %c0_i32_1 : i32, i32, i32
  }
  func.func @transform_25(%arg0: i32) -> (i32, i32, i32) {
    %c0_i32 = arith.constant 0 : i32
    %c0_i32_0 = arith.constant 0 : i32
    %c0_i32_1 = arith.constant 0 : i32
    %c0_i32_2 = arith.constant 0 : i32
    return %c0_i32, %c0_i32_0, %c0_i32_1 : i32, i32, i32
  }
  func.func @transform_26(%arg0: i32) -> (i32, i32, i32) {
    %c0_i32 = arith.constant 0 : i32
    %c0_i32_0 = arith.constant 0 : i32
    %c0_i32_1 = arith.constant 0 : i32
    %c0_i32_2 = arith.constant 0 : i32
    return %c0_i32, %c0_i32_0, %c0_i32_1 : i32, i32, i32
  }
  func.func @transform_27(%arg0: i32) -> (i32, i32, i32) {
    %c0_i32 = arith.constant 0 : i32
    %c0_i32_0 = arith.constant 0 : i32
    %c0_i32_1 = arith.constant 0 : i32
    %c0_i32_2 = arith.constant 0 : i32
    return %c0_i32, %c0_i32_0, %c0_i32_1 : i32, i32, i32
  }
  func.func @transform_28(%arg0: i32) -> (i32, i32, i32) {
    %c0_i32 = arith.constant 0 : i32
    %c0_i32_0 = arith.constant 0 : i32
    %c0_i32_1 = arith.constant 0 : i32
    %c0_i32_2 = arith.constant 0 : i32
    return %c0_i32, %c0_i32_0, %c0_i32_1 : i32, i32, i32
  }
  func.func @transform_29(%arg0: i32) -> (i32, i32, i32) {
    %c0_i32 = arith.constant 0 : i32
    %c0_i32_0 = arith.constant 0 : i32
    %c0_i32_1 = arith.constant 0 : i32
    %c0_i32_2 = arith.constant 0 : i32
    return %c0_i32, %c0_i32_0, %c0_i32_1 : i32, i32, i32
  }
  func.func @transform_30(%arg0: i32) -> (i32, i32, i32) {
    %c0_i32 = arith.constant 0 : i32
    %c0_i32_0 = arith.constant 0 : i32
    %c0_i32_1 = arith.constant 0 : i32
    %c0_i32_2 = arith.constant 0 : i32
    return %c0_i32, %c0_i32_0, %c0_i32_1 : i32, i32, i32
  }
  func.func @transform_31(%arg0: i32) -> (i32, i32, i32) {
    %c0_i32 = arith.constant 0 : i32
    %c0_i32_0 = arith.constant 0 : i32
    %c0_i32_1 = arith.constant 0 : i32
    %c0_i32_2 = arith.constant 0 : i32
    return %c0_i32, %c0_i32_0, %c0_i32_1 : i32, i32, i32
  }
  func.func @transform_32(%arg0: i32) -> (i32, i32, i32) {
    %c0_i32 = arith.constant 0 : i32
    %c0_i32_0 = arith.constant 0 : i32
    %c0_i32_1 = arith.constant 0 : i32
    %c0_i32_2 = arith.constant 0 : i32
    return %c0_i32, %c0_i32_0, %c0_i32_1 : i32, i32, i32
  }
  func.func @transform_33(%arg0: i32) -> (i32, i32, i32) {
    %c0_i32 = arith.constant 0 : i32
    %c0_i32_0 = arith.constant 0 : i32
    %c0_i32_1 = arith.constant 0 : i32
    %c0_i32_2 = arith.constant 0 : i32
    return %c0_i32, %c0_i32_0, %c0_i32_1 : i32, i32, i32
  }
  func.func @transform_34(%arg0: i32) -> (i32, i32) {
    %c0_i32 = arith.constant 0 : i32
    %c0_i32_0 = arith.constant 0 : i32
    %c0_i32_1 = arith.constant 0 : i32
    return %c0_i32, %c0_i32_0 : i32, i32
  }
  func.func @transform_35(%arg0: i32) -> (i32, i32) {
    %c0_i32 = arith.constant 0 : i32
    %c0_i32_0 = arith.constant 0 : i32
    %c0_i32_1 = arith.constant 0 : i32
    return %c0_i32, %c0_i32_0 : i32, i32
  }
  func.func @transform_36(%arg0: i32) -> (i32, i32) {
    %c0_i32 = arith.constant 0 : i32
    %c0_i32_0 = arith.constant 0 : i32
    %c0_i32_1 = arith.constant 0 : i32
    return %c0_i32, %c0_i32_0 : i32, i32
  }
  func.func @transform_37(%arg0: i32) -> (i32, i32) {
    %c0_i32 = arith.constant 0 : i32
    %c0_i32_0 = arith.constant 0 : i32
    %c0_i32_1 = arith.constant 0 : i32
    return %c0_i32, %c0_i32_0 : i32, i32
  }
  func.func @transform_38(%arg0: i32) -> (i32, i32) {
    %c0_i32 = arith.constant 0 : i32
    %c0_i32_0 = arith.constant 0 : i32
    %c0_i32_1 = arith.constant 0 : i32
    return %c0_i32, %c0_i32_0 : i32, i32
  }
  func.func @transform_39(%arg0: i32) -> (i32, i32) {
    %c0_i32 = arith.constant 0 : i32
    %c0_i32_0 = arith.constant 0 : i32
    %c0_i32_1 = arith.constant 0 : i32
    return %c0_i32, %c0_i32_0 : i32, i32
  }
  func.func @transform_40(%arg0: i32) -> (i32, i32) {
    %c0_i32 = arith.constant 0 : i32
    %c0_i32_0 = arith.constant 0 : i32
    %c0_i32_1 = arith.constant 0 : i32
    return %c0_i32, %c0_i32_0 : i32, i32
  }
  func.func @transform_41(%arg0: i32) -> (i32, i32) {
    %c0_i32 = arith.constant 0 : i32
    %c0_i32_0 = arith.constant 0 : i32
    %c0_i32_1 = arith.constant 0 : i32
    return %c0_i32, %c0_i32_0 : i32, i32
  }
  func.func @transform_42(%arg0: i32) -> (i32, i32) {
    %c0_i32 = arith.constant 0 : i32
    %c0_i32_0 = arith.constant 0 : i32
    %c0_i32_1 = arith.constant 0 : i32
    return %c0_i32, %c0_i32_0 : i32, i32
  }
  func.func @transform_43(%arg0: i32) -> (i32, i32) {
    %c0_i32 = arith.constant 0 : i32
    %c0_i32_0 = arith.constant 0 : i32
    %c0_i32_1 = arith.constant 0 : i32
    return %c0_i32, %c0_i32_0 : i32, i32
  }
}

</mosaic_0001>

<llo_original>
// kernel: tile.18
$region0: #{tile.18}
  #allocation0 [shape = 's32[1]{0}', space=sflag, size = 0x4, scoped, tag = 'scoped memory for tile.18']
  %s0 = inlined_call_operand.vmem [shape: f32[2,8], index: 0, kind: input, shape index: {}]
  %s1 = inlined_call_operand.vmem [shape: f32[2,2,1,8], index: 1, kind: output, shape index: {}]
  // Predicated region
  $region2: #{tile.18} parent=0 // pred_check
    _
  $region3: #{tile.18} parent=0 // pred_check_branch
    %3 = sbr.rel (0) target = $region5
  $region4: #{tile.18} parent=0 // pred_region
    _
  $region5: #{tile.18} parent=0 // pred_fallthru
    _
  %v4 = vld [vmem:[%s0] sm:$0x3]
  %5 = vst [vmem:[%s1] sm:$0x3] %v4
  %s6 = scalar_lea.vmem %s1, 2
  %7 = vst [vmem:[%s6] sm:$0x3] %v4

// kernel: tile.28
$region0: #{tile.28}
  #allocation0 [shape = 's32[1]{0}', space=sflag, size = 0x4, scoped, tag = 'scoped memory for tile.28']
  %s0 = inlined_call_operand.vmem [shape: f32[8], index: 0, kind: input, shape index: {}]
  %s1 = inlined_call_operand.vmem [shape: f32[2,2,1,8], index: 1, kind: output, shape index: {}]
  // Predicated region
  $region2: #{tile.28} parent=0 // pred_check
    _
  $region3: #{tile.28} parent=0 // pred_check_branch
    %3 = sbr.rel (0) target = $region5
  $region4: #{tile.28} parent=0 // pred_region
    _
  $region5: #{tile.28} parent=0 // pred_fallthru
    _
  %v4 = vld [vmem:[%s0] ss:$0 sm:$0xff]
  %5 = vst [vmem:[%s1] sm:$0x3] %v4
  %s6 = scalar_lea.vmem %s1, 2
  %7 = vst [vmem:[%s6] sm:$0x3] %v4

// kernel: eq.15
$region0: #{eq.15}
  %s0 = inlined_call_operand.vmem [shape: s32[4,8], index: 0, kind: input, shape index: {}]
  %s1 = inlined_call_operand.vmem [shape: s32[32], index: 1, kind: output, shape index: {}]
  $region1: #{eq.15} parent=0
    #allocation0 [shape = 'u8[4096]{0}', space=vmem, size = 0x1000, scoped, tag = 'scoped mem for output reshape']
    #allocation1 [shape = 'u8[4096]{0}', space=vmem, size = 0x1000, scoped, tag = 'scoped mem for input reshape']
    %s3 = sshllo.u32 0, 4
    %v4 = vld [vmem:[%s0] sm:%s3]
    %5 = vst [vmem:[#allocation1] sm:%s3] %v4
    %v6 = vld [vmem:[#allocation1] sm:$0x1]
    %vm7 = vcmask 64512
    %8 = vst.msk [vmem:[#allocation0] sm:$0x1] %vm7, %v6
    %s9 = scalar_lea.vmem [#allocation1], 3
    %v10 = vld [vmem:[%s9] sm:$0x1]
    %11 = vrot.lane.b32.xlu0 %v10, 24
    %v12 = vpop.permute.xlu0 %11
    %vm13 = vcmask 261312
    %14 = vst.msk [vmem:[#allocation0] sm:$0x1] %vm13, %v12
    %s15 = scalar_lea.vmem [#allocation1], 2
    %v16 = vld [vmem:[%s15] sm:$0x1]
    %17 = vrot.lane.b32.xlu0 %v16, 16
    %v18 = vpop.permute.xlu0 %17
    %vm19 = vcmask 195712
    %20 = vst.msk [vmem:[#allocation0] sm:$0x1] %vm19, %v18
    %s21 = scalar_lea.vmem [#allocation1], 1
    %v22 = vld [vmem:[%s21] sm:$0x1]
    %23 = vrot.lane.b32.xlu0 %v22, 8
    %v24 = vpop.permute.xlu0 %23
    %vm25 = vcmask 130112
    %26 = vst.msk [vmem:[#allocation0] sm:$0x1] %vm25, %v24
    %s28 = sshllo.u32 0, 1
    %v30 = vld [vmem:[#allocation0] sm:%s28]
    %s31 = sshllo.u32 0, 1
    %32 = vst [vmem:[%s1] sm:%s31] %v30

// kernel: _lambda_.1
$region0: #{_lambda_.1}
  #allocation0 [shape = 'u32[]', space=smem, size = 0x4, offset = 0x4, fixed_abs, tag = 'smem constant byte address 0x4 - core index']
  #allocation1 [shape = 'u32[144,128]{1,0:T(1,128)}', space=vmem, size = 0x12000, scoped, tag = 'internal scratch']
  %s0 = inlined_call_operand.smem [shape: u32[44], index: -1, kind: input, shape index: {}]
  %s1 = sld [smem:[%s0]]
  %s2 = scalar_lea.smem %s0, 1
  %s3 = sld [smem:[%s2]]
  %s4 = scalar_lea.smem %s0, 2
  %s5 = sld [smem:[%s4]]
  %s6 = scalar_lea.smem %s0, 3
  %s7 = sld [smem:[%s6]]
  %s8 = scalar_lea.smem %s0, 4
  %s9 = sld [smem:[%s8]]
  %s10 = scalar_lea.smem %s0, 5
  %s11 = sld [smem:[%s10]]
  %s12 = scalar_lea.smem %s0, 6
  %s13 = sld [smem:[%s12]]
  %s14 = scalar_lea.smem %s0, 7
  %s15 = sld [smem:[%s14]]
  %s16 = scalar_lea.smem %s0, 8
  %s17 = sld [smem:[%s16]]
  %s18 = scalar_lea.smem %s0, 9
  %s19 = sld [smem:[%s18]]
  %s20 = scalar_lea.smem %s0, 10
  %s21 = sld [smem:[%s20]]
  %s22 = scalar_lea.smem %s0, 11
  %s23 = sld [smem:[%s22]]
  %s24 = scalar_lea.smem %s0, 12
  %s25 = sld [smem:[%s24]]
  %s26 = scalar_lea.smem %s0, 13
  %s27 = sld [smem:[%s26]]
  %s28 = scalar_lea.smem %s0, 14
  %s29 = sld [smem:[%s28]]
  %s30 = scalar_lea.smem %s0, 15
  %s31 = sld [smem:[%s30]]
  %s32 = scalar_lea.smem %s0, 16
  %s33 = sld [smem:[%s32]]
  %s34 = scalar_lea.smem %s0, 17
  %s35 = sld [smem:[%s34]]
  %s36 = scalar_lea.smem %s0, 18
  %s37 = sld [smem:[%s36]]
  %s38 = scalar_lea.smem %s0, 19
  %s39 = sld [smem:[%s38]]
  %s40 = scalar_lea.smem %s0, 20
  %s41 = sld [smem:[%s40]]
  %s42 = scalar_lea.smem %s0, 21
  %s43 = sld [smem:[%s42]]
  %s44 = scalar_lea.smem %s0, 22
  %s45 = sld [smem:[%s44]]
  %s46 = scalar_lea.smem %s0, 23
  %s47 = sld [smem:[%s46]]
  %s48 = scalar_lea.smem %s0, 24
  %s49 = sld [smem:[%s48]]
  %s50 = scalar_lea.smem %s0, 25
  %s51 = sld [smem:[%s50]]
  %s52 = scalar_lea.smem %s0, 26
  %s53 = sld [smem:[%s52]]
  %s54 = scalar_lea.smem %s0, 27
  %s55 = sld [smem:[%s54]]
  %s56 = scalar_lea.smem %s0, 28
  %s57 = sld [smem:[%s56]]
  %s58 = scalar_lea.smem %s0, 29
  %s59 = sld [smem:[%s58]]
  %s60 = scalar_lea.smem %s0, 30
  %s61 = sld [smem:[%s60]]
  %s62 = scalar_lea.smem %s0, 31
  %s63 = sld [smem:[%s62]]
  %s64 = scalar_lea.smem %s0, 32
  %s65 = sld [smem:[%s64]]
  %s66 = scalar_lea.smem %s0, 33
  %s67 = sld [smem:[%s66]]
  %s68 = scalar_lea.smem %s0, 34
  %s69 = sld [smem:[%s68]]
  %s70 = scalar_lea.smem %s0, 35
  %s71 = sld [smem:[%s70]]
  %s72 = scalar_lea.smem %s0, 36
  %s73 = sld [smem:[%s72]]
  %s74 = scalar_lea.smem %s0, 37
  %s75 = sld [smem:[%s74]]
  %s76 = scalar_lea.smem %s0, 38
  %s77 = sld [smem:[%s76]]
  %s78 = scalar_lea.smem %s0, 39
  %s79 = sld [smem:[%s78]]
  %s80 = scalar_lea.smem %s0, 40
  %s81 = sld [smem:[%s80]]
  %s82 = scalar_lea.smem %s0, 41
  %s83 = sld [smem:[%s82]]
  %s84 = scalar_lea.smem %s0, 42
  %s85 = sld [smem:[%s84]]
  %s86 = scalar_lea.smem %s0, 43
  %s87 = sld [smem:[%s86]]
  %88 = xla_tuple %s83, %s85, %s87
  %s89 = sld [smem:[#allocation0]]
  $region282: #{_lambda_.1} parent=0
    _
  %s91 = ssub.s32 1, %s89
  %s92 = scalar_select 0, %s91, %s89
  $region1: #{_lambda_.1} parent=0
    #allocation2 [shape = 'u8[512]{0}', space=vmem, size = 0x400, scoped, tag = 'input window, operand 3, single buffered']
    #allocation3 [shape = 's32[1]{0}', space=sflag, size = 0x4, scoped, tag = 'scoped memory for _lambda_.1']
    #allocation4 [shape = 's32[1]{0}', space=sflag, size = 0x4, scoped, tag = 'scoped memory for _lambda_.1']
    #allocation5 [shape = 'u8[1024]{0}', space=vmem, size = 0x400, scoped, tag = 'input window, operand 5, single buffered']
    #allocation6 [shape = 's32[1]{0}', space=sflag, size = 0x4, scoped, tag = 'scoped memory for _lambda_.1']
    #allocation7 [shape = 'u8[16384]{0}', space=vmem, size = 0x4000, scoped, tag = 'input window, operand 6, single buffered']
    #allocation8 [shape = 'u8[1024]{0}', space=vmem, size = 0x400, scoped, tag = 'input window, operand 7, single buffered']
    #allocation9 [shape = 's32[1]{0}', space=sflag, size = 0x4, scoped, tag = 'scoped memory for _lambda_.1']
    #allocation10 [shape = 'u8[1024]{0}', space=vmem, size = 0x400, scoped, tag = 'input window, operand 8, single buffered']
    #allocation11 [shape = 'u8[1024]{0}', space=vmem, size = 0x400, scoped, tag = 'input window, operand 9, single buffered']
    #allocation12 [shape = 's32[1]{0}', space=sflag, size = 0x4, scoped, tag = 'scoped memory for _lambda_.1']
    #allocation13 [shape = 'u8[1024]{0}', space=vmem, size = 0x400, scoped, tag = 'input window, operand 11, single buffered']
    #allocation14 [shape = 'u8[1024]{0}', space=vmem, size = 0x400, scoped, tag = 'input window, operand 13, single buffered']
    #allocation15 [shape = 's32[1]{0}', space=sflag, size = 0x4, scoped, tag = 'scoped memory for _lambda_.1']
    #allocation16 [shape = 'u8[1024]{0}', space=vmem, size = 0x400, scoped, tag = 'input window, operand 14, single buffered']
    #allocation17 [shape = 'u8[1024]{0}', space=vmem, size = 0x400, scoped, tag = 'input window, operand 15, single buffered']
    #allocation18 [shape = 's32[1]{0}', space=sflag, size = 0x4, scoped, tag = 'scoped memory for _lambda_.1']
    #allocation19 [shape = 'u8[512]{0}', space=vmem, size = 0x400, scoped, tag = 'input window, operand 17, single buffered']
    #allocation20 [shape = 'u8[1024]{0}', space=vmem, size = 0x400, scoped, tag = 'input window, operand 23, single buffered']
    #allocation21 [shape = 's32[1]{0}', space=sflag, size = 0x4, scoped, tag = 'scoped memory for _lambda_.1']
    #allocation22 [shape = 'u8[16384]{0}', space=vmem, size = 0x4000, scoped, tag = 'input window, operand 24, single buffered']
    #allocation23 [shape = 'u8[1024]{0}', space=vmem, size = 0x400, scoped, tag = 'input window, operand 25, single buffered']
    #allocation24 [shape = 's32[1]{0}', space=sflag, size = 0x4, scoped, tag = 'scoped memory for _lambda_.1']
    #allocation25 [shape = 'u8[1024]{0}', space=vmem, size = 0x400, scoped, tag = 'input window, operand 26, single buffered']
    #allocation26 [shape = 'u8[1024]{0}', space=vmem, size = 0x400, scoped, tag = 'input window, operand 27, single buffered']
    #allocation27 [shape = 's32[1]{0}', space=sflag, size = 0x4, scoped, tag = 'scoped memory for _lambda_.1']
    #allocation28 [shape = 'u8[1024]{0}', space=vmem, size = 0x400, scoped, tag = 'input window, operand 29, single buffered']
    #allocation29 [shape = 'u8[1024]{0}', space=vmem, size = 0x400, scoped, tag = 'input window, operand 31, single buffered']
    #allocation30 [shape = 's32[1]{0}', space=sflag, size = 0x4, scoped, tag = 'scoped memory for _lambda_.1']
    #allocation31 [shape = 'u8[1024]{0}', space=vmem, size = 0x400, scoped, tag = 'input window, operand 32, single buffered']
    #allocation32 [shape = 'u8[1024]{0}', space=vmem, size = 0x400, scoped, tag = 'input window, operand 33, single buffered']
    #allocation33 [shape = 's32[1]{0}', space=sflag, size = 0x4, scoped, tag = 'scoped memory for _lambda_.1']
    #allocation34 [shape = 'u8[512]{0}', space=vmem, size = 0x400, scoped, tag = 'input window, operand 34, single buffered']
    #allocation35 [shape = 'u8[512]{0}', space=vmem, size = 0x400, scoped, tag = 'input window, operand 35, single buffered']
    #allocation36 [shape = 's32[1]{0}', space=sflag, size = 0x4, scoped, tag = 'scoped memory for _lambda_.1']
    #allocation37 [shape = 'u8[512]{0}', space=vmem, size = 0x400, scoped, tag = 'input window, operand 40, single buffered']
    #allocation38 [shape = 'u8[1024]{0}', space=vmem, size = 0x400, scoped, tag = 'output window, operand 0, single buffered']
    %93 = vsyncpa [#allocation3], 0
    %94 = vsyncpa [#allocation6], 0
    %95 = vsyncpa [#allocation9], 0
    %96 = vsyncpa [#allocation12], 0
    %97 = vsyncpa [#allocation15], 0
    %98 = vsyncpa [#allocation18], 0
    %99 = vsyncpa [#allocation21], 0
    %100 = vsyncpa [#allocation24], 0
    %101 = vsyncpa [#allocation27], 0
    %102 = vsyncpa [#allocation30], 0
    %103 = vsyncpa [#allocation33], 0
    %104 = vsyncpa [#allocation36], 0
    %105 = vsyncpa [#allocation4], 0
    // Predicated region
    $region2: #{_lambda_.1} parent=1 // pred_check
      _
    $region3: #{_lambda_.1} parent=1 // pred_check_branch
      %107 = sbr.rel (0) target = $region5
    $region4: #{_lambda_.1} parent=1 // pred_region
      _
    $region5: #{_lambda_.1} parent=1 // pred_fallthru
      _
    // Predicated region
    $region6: #{_lambda_.1} parent=1 // pred_check
      _
    $region7: #{_lambda_.1} parent=1 // pred_check_branch
      %109 = sbr.rel (0) target = $region9
    $region8: #{_lambda_.1} parent=1 // pred_region
      _
    $region9: #{_lambda_.1} parent=1 // pred_fallthru
      _
    // Predicated region
    $region10: #{_lambda_.1} parent=1 // pred_check
      _
    $region11: #{_lambda_.1} parent=1 // pred_check_branch
      %111 = sbr.rel (0) target = $region13
    $region12: #{_lambda_.1} parent=1 // pred_region
      _
    $region13: #{_lambda_.1} parent=1 // pred_fallthru
      _
    // Predicated region
    $region14: #{_lambda_.1} parent=1 // pred_check
      _
    $region15: #{_lambda_.1} parent=1 // pred_check_branch
      %113 = sbr.rel (0) target = $region17
    $region16: #{_lambda_.1} parent=1 // pred_region
      %s115 = ssub.s32 16, 16
      %116 = vsyncadd [#allocation3], %s115
      %s118 = sshll.u32 [#allocation2], 4
      %s119 = int_to_ptr.vmem [resolvable:$true] %s118
      %121 = dma.hbm_to_vmem [thread:$0]  %s7, 16, %s119, [#allocation3]
    $region17: #{_lambda_.1} parent=1 // pred_fallthru
      _
    // Predicated region
    $region18: #{_lambda_.1} parent=1 // pred_check
      _
    $region19: #{_lambda_.1} parent=1 // pred_check_branch
      %123 = sbr.rel (0) target = $region21
    $region20: #{_lambda_.1} parent=1 // pred_region
      _
    $region21: #{_lambda_.1} parent=1 // pred_fallthru
      _
    // Predicated region
    $region22: #{_lambda_.1} parent=1 // pred_check
      _
    $region23: #{_lambda_.1} parent=1 // pred_check_branch
      %125 = sbr.rel (0) target = $region25
    $region24: #{_lambda_.1} parent=1 // pred_region
      %s127 = ssub.s32 32, 32
      %128 = vsyncadd [#allocation6], %s127
      %s129 = sshll.u32 [#allocation5], 4
      %s130 = int_to_ptr.vmem [resolvable:$true] %s129
      %135 = dma.hbm_to_vmem [thread:$0]  %s11, 32, %s130, [#allocation6], 16, 16, 1
    $region25: #{_lambda_.1} parent=1 // pred_fallthru
      _
    // Predicated region
    $region26: #{_lambda_.1} parent=1 // pred_check
      _
    $region27: #{_lambda_.1} parent=1 // pred_check_branch
      %137 = sbr.rel (0) target = $region29
    $region28: #{_lambda_.1} parent=1 // pred_region
      %s139 = ssub.s32 512, 512
      %140 = vsyncadd [#allocation6], %s139
      %s141 = sshll.u32 [#allocation7], 4
      %s142 = int_to_ptr.vmem [resolvable:$true] %s141
      %147 = dma.hbm_to_vmem [thread:$0]  %s13, 512, %s142, [#allocation6], 64, 64, 4
    $region29: #{_lambda_.1} parent=1 // pred_fallthru
      _
    // Predicated region
    $region30: #{_lambda_.1} parent=1 // pred_check
      _
    $region31: #{_lambda_.1} parent=1 // pred_check_branch
      %149 = sbr.rel (0) target = $region33
    $region32: #{_lambda_.1} parent=1 // pred_region
      %s151 = ssub.s32 32, 32
      %152 = vsyncadd [#allocation9], %s151
      %s153 = sshll.u32 [#allocation8], 4
      %s154 = int_to_ptr.vmem [resolvable:$true] %s153
      %159 = dma.hbm_to_vmem [thread:$0]  %s15, 32, %s154, [#allocation9], 16, 16, 1
    $region33: #{_lambda_.1} parent=1 // pred_fallthru
      _
    // Predicated region
    $region34: #{_lambda_.1} parent=1 // pred_check
      _
    $region35: #{_lambda_.1} parent=1 // pred_check_branch
      %161 = sbr.rel (0) target = $region37
    $region36: #{_lambda_.1} parent=1 // pred_region
      %s163 = ssub.s32 32, 32
      %164 = vsyncadd [#allocation9], %s163
      %s165 = sshll.u32 [#allocation10], 4
      %s166 = int_to_ptr.vmem [resolvable:$true] %s165
      %171 = dma.hbm_to_vmem [thread:$0]  %s17, 32, %s166, [#allocation9], 16, 16, 1
    $region37: #{_lambda_.1} parent=1 // pred_fallthru
      _
    // Predicated region
    $region38: #{_lambda_.1} parent=1 // pred_check
      _
    $region39: #{_lambda_.1} parent=1 // pred_check_branch
      %173 = sbr.rel (0) target = $region41
    $region40: #{_lambda_.1} parent=1 // pred_region
      %s175 = ssub.s32 32, 32
      %176 = vsyncadd [#allocation12], %s175
      %s177 = sshll.u32 [#allocation11], 4
      %s178 = int_to_ptr.vmem [resolvable:$true] %s177
      %183 = dma.hbm_to_vmem [thread:$0]  %s19, 32, %s178, [#allocation12], 16, 16, 1
    $region41: #{_lambda_.1} parent=1 // pred_fallthru
      _
    // Predicated region
    $region42: #{_lambda_.1} parent=1 // pred_check
      _
    $region43: #{_lambda_.1} parent=1 // pred_check_branch
      %185 = sbr.rel (0) target = $region45
    $region44: #{_lambda_.1} parent=1 // pred_region
      _
    $region45: #{_lambda_.1} parent=1 // pred_fallthru
      _
    // Predicated region
    $region46: #{_lambda_.1} parent=1 // pred_check
      _
    $region47: #{_lambda_.1} parent=1 // pred_check_branch
      %187 = sbr.rel (0) target = $region49
    $region48: #{_lambda_.1} parent=1 // pred_region
      %s189 = ssub.s32 32, 32
      %190 = vsyncadd [#allocation12], %s189
      %s191 = sshll.u32 [#allocation13], 4
      %s192 = int_to_ptr.vmem [resolvable:$true] %s191
      %197 = dma.hbm_to_vmem [thread:$0]  %s23, 32, %s192, [#allocation12], 16, 16, 1
    $region49: #{_lambda_.1} parent=1 // pred_fallthru
      _
    // Predicated region
    $region50: #{_lambda_.1} parent=1 // pred_check
      _
    $region51: #{_lambda_.1} parent=1 // pred_check_branch
      %199 = sbr.rel (0) target = $region53
    $region52: #{_lambda_.1} parent=1 // pred_region
      _
    $region53: #{_lambda_.1} parent=1 // pred_fallthru
      _
    // Predicated region
    $region54: #{_lambda_.1} parent=1 // pred_check
      _
    $region55: #{_lambda_.1} parent=1 // pred_check_branch
      %201 = sbr.rel (0) target = $region57
    $region56: #{_lambda_.1} parent=1 // pred_region
      %s203 = ssub.s32 32, 32
      %204 = vsyncadd [#allocation15], %s203
      %s205 = sshll.u32 [#allocation14], 4
      %s206 = int_to_ptr.vmem [resolvable:$true] %s205
      %211 = dma.hbm_to_vmem [thread:$0]  %s27, 32, %s206, [#allocation15], 16, 16, 1
    $region57: #{_lambda_.1} parent=1 // pred_fallthru
      _
    // Predicated region
    $region58: #{_lambda_.1} parent=1 // pred_check
      _
    $region59: #{_lambda_.1} parent=1 // pred_check_branch
      %213 = sbr.rel (0) target = $region61
    $region60: #{_lambda_.1} parent=1 // pred_region
      %s215 = ssub.s32 32, 32
      %216 = vsyncadd [#allocation15], %s215
      %s217 = sshll.u32 [#allocation16], 4
      %s218 = int_to_ptr.vmem [resolvable:$true] %s217
      %223 = dma.hbm_to_vmem [thread:$0]  %s29, 32, %s218, [#allocation15], 16, 16, 1
    $region61: #{_lambda_.1} parent=1 // pred_fallthru
      _
    // Predicated region
    $region62: #{_lambda_.1} parent=1 // pred_check
      _
    $region63: #{_lambda_.1} parent=1 // pred_check_branch
      %225 = sbr.rel (0) target = $region65
    $region64: #{_lambda_.1} parent=1 // pred_region
      %s227 = ssub.s32 32, 32
      %228 = vsyncadd [#allocation18], %s227
      %s229 = sshll.u32 [#allocation17], 4
      %s230 = int_to_ptr.vmem [resolvable:$true] %s229
      %235 = dma.hbm_to_vmem [thread:$0]  %s31, 32, %s230, [#allocation18], 16, 16, 1
    $region65: #{_lambda_.1} parent=1 // pred_fallthru
      _
    // Predicated region
    $region66: #{_lambda_.1} parent=1 // pred_check
      _
    $region67: #{_lambda_.1} parent=1 // pred_check_branch
      %237 = sbr.rel (0) target = $region69
    $region68: #{_lambda_.1} parent=1 // pred_region
      _
    $region69: #{_lambda_.1} parent=1 // pred_fallthru
      _
    // Predicated region
    $region70: #{_lambda_.1} parent=1 // pred_check
      _
    $region71: #{_lambda_.1} parent=1 // pred_check_branch
      %239 = sbr.rel (0) target = $region73
    $region72: #{_lambda_.1} parent=1 // pred_region
      %s241 = ssub.s32 16, 16
      %242 = vsyncadd [#allocation18], %s241
      %s244 = sshll.u32 [#allocation19], 4
      %s245 = int_to_ptr.vmem [resolvable:$true] %s244
      %247 = dma.hbm_to_vmem [thread:$0]  %s35, 16, %s245, [#allocation18]
    $region73: #{_lambda_.1} parent=1 // pred_fallthru
      _
    // Predicated region
    $region74: #{_lambda_.1} parent=1 // pred_check
      _
    $region75: #{_lambda_.1} parent=1 // pred_check_branch
      %249 = sbr.rel (0) target = $region77
    $region76: #{_lambda_.1} parent=1 // pred_region
      _
    $region77: #{_lambda_.1} parent=1 // pred_fallthru
      _
    // Predicated region
    $region78: #{_lambda_.1} parent=1 // pred_check
      _
    $region79: #{_lambda_.1} parent=1 // pred_check_branch
      %251 = sbr.rel (0) target = $region81
    $region80: #{_lambda_.1} parent=1 // pred_region
      _
    $region81: #{_lambda_.1} parent=1 // pred_fallthru
      _
    // Predicated region
    $region82: #{_lambda_.1} parent=1 // pred_check
      _
    $region83: #{_lambda_.1} parent=1 // pred_check_branch
      %253 = sbr.rel (0) target = $region85
    $region84: #{_lambda_.1} parent=1 // pred_region
      _
    $region85: #{_lambda_.1} parent=1 // pred_fallthru
      _
    // Predicated region
    $region86: #{_lambda_.1} parent=1 // pred_check
      _
    $region87: #{_lambda_.1} parent=1 // pred_check_branch
      %255 = sbr.rel (0) target = $region89
    $region88: #{_lambda_.1} parent=1 // pred_region
      _
    $region89: #{_lambda_.1} parent=1 // pred_fallthru
      _
    // Predicated region
    $region90: #{_lambda_.1} parent=1 // pred_check
      _
    $region91: #{_lambda_.1} parent=1 // pred_check_branch
      %257 = sbr.rel (0) target = $region93
    $region92: #{_lambda_.1} parent=1 // pred_region
      _
    $region93: #{_lambda_.1} parent=1 // pred_fallthru
      _
    // Predicated region
    $region94: #{_lambda_.1} parent=1 // pred_check
      _
    $region95: #{_lambda_.1} parent=1 // pred_check_branch
      %259 = sbr.rel (0) target = $region97
    $region96: #{_lambda_.1} parent=1 // pred_region
      %s261 = ssub.s32 32, 32
      %262 = vsyncadd [#allocation21], %s261
      %s263 = sshll.u32 [#allocation20], 4
      %s264 = int_to_ptr.vmem [resolvable:$true] %s263
      %269 = dma.hbm_to_vmem [thread:$0]  %s47, 32, %s264, [#allocation21], 16, 16, 1
    $region97: #{_lambda_.1} parent=1 // pred_fallthru
      _
    // Predicated region
    $region98: #{_lambda_.1} parent=1 // pred_check
      _
    $region99: #{_lambda_.1} parent=1 // pred_check_branch
      %271 = sbr.rel (0) target = $region101
    $region100: #{_lambda_.1} parent=1 // pred_region
      %s273 = ssub.s32 512, 512
      %274 = vsyncadd [#allocation21], %s273
      %s275 = sshll.u32 [#allocation22], 4
      %s276 = int_to_ptr.vmem [resolvable:$true] %s275
      %281 = dma.hbm_to_vmem [thread:$0]  %s49, 512, %s276, [#allocation21], 64, 64, 4
    $region101: #{_lambda_.1} parent=1 // pred_fallthru
      _
    // Predicated region
    $region102: #{_lambda_.1} parent=1 // pred_check
      _
    $region103: #{_lambda_.1} parent=1 // pred_check_branch
      %283 = sbr.rel (0) target = $region105
    $region104: #{_lambda_.1} parent=1 // pred_region
      %s285 = ssub.s32 32, 32
      %286 = vsyncadd [#allocation24], %s285
      %s287 = sshll.u32 [#allocation23], 4
      %s288 = int_to_ptr.vmem [resolvable:$true] %s287
      %293 = dma.hbm_to_vmem [thread:$0]  %s51, 32, %s288, [#allocation24], 16, 16, 1
    $region105: #{_lambda_.1} parent=1 // pred_fallthru
      _
    // Predicated region
    $region106: #{_lambda_.1} parent=1 // pred_check
      _
    $region107: #{_lambda_.1} parent=1 // pred_check_branch
      %295 = sbr.rel (0) target = $region109
    $region108: #{_lambda_.1} parent=1 // pred_region
      %s297 = ssub.s32 32, 32
      %298 = vsyncadd [#allocation24], %s297
      %s299 = sshll.u32 [#allocation25], 4
      %s300 = int_to_ptr.vmem [resolvable:$true] %s299
      %305 = dma.hbm_to_vmem [thread:$0]  %s53, 32, %s300, [#allocation24], 16, 16, 1
    $region109: #{_lambda_.1} parent=1 // pred_fallthru
      _
    // Predicated region
    $region110: #{_lambda_.1} parent=1 // pred_check
      _
    $region111: #{_lambda_.1} parent=1 // pred_check_branch
      %307 = sbr.rel (0) target = $region113
    $region112: #{_lambda_.1} parent=1 // pred_region
      %s309 = ssub.s32 32, 32
      %310 = vsyncadd [#allocation27], %s309
      %s311 = sshll.u32 [#allocation26], 4
      %s312 = int_to_ptr.vmem [resolvable:$true] %s311
      %317 = dma.hbm_to_vmem [thread:$0]  %s55, 32, %s312, [#allocation27], 16, 16, 1
    $region113: #{_lambda_.1} parent=1 // pred_fallthru
      _
    // Predicated region
    $region114: #{_lambda_.1} parent=1 // pred_check
      _
    $region115: #{_lambda_.1} parent=1 // pred_check_branch
      %319 = sbr.rel (0) target = $region117
    $region116: #{_lambda_.1} parent=1 // pred_region
      _
    $region117: #{_lambda_.1} parent=1 // pred_fallthru
      _
    // Predicated region
    $region118: #{_lambda_.1} parent=1 // pred_check
      _
    $region119: #{_lambda_.1} parent=1 // pred_check_branch
      %321 = sbr.rel (0) target = $region121
    $region120: #{_lambda_.1} parent=1 // pred_region
      %s323 = ssub.s32 32, 32
      %324 = vsyncadd [#allocation27], %s323
      %s325 = sshll.u32 [#allocation28], 4
      %s326 = int_to_ptr.vmem [resolvable:$true] %s325
      %331 = dma.hbm_to_vmem [thread:$0]  %s59, 32, %s326, [#allocation27], 16, 16, 1
    $region121: #{_lambda_.1} parent=1 // pred_fallthru
      _
    // Predicated region
    $region122: #{_lambda_.1} parent=1 // pred_check
      _
    $region123: #{_lambda_.1} parent=1 // pred_check_branch
      %333 = sbr.rel (0) target = $region125
    $region124: #{_lambda_.1} parent=1 // pred_region
      _
    $region125: #{_lambda_.1} parent=1 // pred_fallthru
      _
    // Predicated region
    $region126: #{_lambda_.1} parent=1 // pred_check
      _
    $region127: #{_lambda_.1} parent=1 // pred_check_branch
      %335 = sbr.rel (0) target = $region129
    $region128: #{_lambda_.1} parent=1 // pred_region
      %s337 = ssub.s32 32, 32
      %338 = vsyncadd [#allocation30], %s337
      %s339 = sshll.u32 [#allocation29], 4
      %s340 = int_to_ptr.vmem [resolvable:$true] %s339
      %345 = dma.hbm_to_vmem [thread:$0]  %s63, 32, %s340, [#allocation30], 16, 16, 1
    $region129: #{_lambda_.1} parent=1 // pred_fallthru
      _
    // Predicated region
    $region130: #{_lambda_.1} parent=1 // pred_check
      _
    $region131: #{_lambda_.1} parent=1 // pred_check_branch
      %347 = sbr.rel (0) target = $region133
    $region132: #{_lambda_.1} parent=1 // pred_region
      %s349 = ssub.s32 32, 32
      %350 = vsyncadd [#allocation30], %s349
      %s351 = sshll.u32 [#allocation31], 4
      %s352 = int_to_ptr.vmem [resolvable:$true] %s351
      %357 = dma.hbm_to_vmem [thread:$0]  %s65, 32, %s352, [#allocation30], 16, 16, 1
    $region133: #{_lambda_.1} parent=1 // pred_fallthru
      _
    // Predicated region
    $region134: #{_lambda_.1} parent=1 // pred_check
      _
    $region135: #{_lambda_.1} parent=1 // pred_check_branch
      %359 = sbr.rel (0) target = $region137
    $region136: #{_lambda_.1} parent=1 // pred_region
      %s361 = ssub.s32 32, 32
      %362 = vsyncadd [#allocation33], %s361
      %s363 = sshll.u32 [#allocation32], 4
      %s364 = int_to_ptr.vmem [resolvable:$true] %s363
      %369 = dma.hbm_to_vmem [thread:$0]  %s67, 32, %s364, [#allocation33], 16, 16, 1
    $region137: #{_lambda_.1} parent=1 // pred_fallthru
      _
    // Predicated region
    $region138: #{_lambda_.1} parent=1 // pred_check
      _
    $region139: #{_lambda_.1} parent=1 // pred_check_branch
      %371 = sbr.rel (0) target = $region141
    $region140: #{_lambda_.1} parent=1 // pred_region
      %s373 = ssub.s32 16, 16
      %374 = vsyncadd [#allocation33], %s373
      %s376 = sshll.u32 [#allocation34], 4
      %s377 = int_to_ptr.vmem [resolvable:$true] %s376
      %379 = dma.hbm_to_vmem [thread:$0]  %s69, 16, %s377, [#allocation33]
    $region141: #{_lambda_.1} parent=1 // pred_fallthru
      _
    // Predicated region
    $region142: #{_lambda_.1} parent=1 // pred_check
      _
    $region143: #{_lambda_.1} parent=1 // pred_check_branch
      %381 = sbr.rel (0) target = $region145
    $region144: #{_lambda_.1} parent=1 // pred_region
      %s383 = ssub.s32 16, 16
      %384 = vsyncadd [#allocation36], %s383
      %s386 = sshll.u32 [#allocation35], 4
      %s387 = int_to_ptr.vmem [resolvable:$true] %s386
      %389 = dma.hbm_to_vmem [thread:$0]  %s71, 16, %s387, [#allocation36]
    $region145: #{_lambda_.1} parent=1 // pred_fallthru
      _
    // Predicated region
    $region146: #{_lambda_.1} parent=1 // pred_check
      _
    $region147: #{_lambda_.1} parent=1 // pred_check_branch
      %391 = sbr.rel (0) target = $region149
    $region148: #{_lambda_.1} parent=1 // pred_region
      _
    $region149: #{_lambda_.1} parent=1 // pred_fallthru
      _
    // Predicated region
    $region150: #{_lambda_.1} parent=1 // pred_check
      _
    $region151: #{_lambda_.1} parent=1 // pred_check_branch
      %393 = sbr.rel (0) target = $region153
    $region152: #{_lambda_.1} parent=1 // pred_region
      _
    $region153: #{_lambda_.1} parent=1 // pred_fallthru
      _
    // Predicated region
    $region154: #{_lambda_.1} parent=1 // pred_check
      _
    $region155: #{_lambda_.1} parent=1 // pred_check_branch
      %395 = sbr.rel (0) target = $region157
    $region156: #{_lambda_.1} parent=1 // pred_region
      _
    $region157: #{_lambda_.1} parent=1 // pred_fallthru
      _
    // Predicated region
    $region158: #{_lambda_.1} parent=1 // pred_check
      _
    $region159: #{_lambda_.1} parent=1 // pred_check_branch
      %397 = sbr.rel (0) target = $region161
    $region160: #{_lambda_.1} parent=1 // pred_region
      _
    $region161: #{_lambda_.1} parent=1 // pred_fallthru
      _
    // Predicated region
    $region162: #{_lambda_.1} parent=1 // pred_check
      _
    $region163: #{_lambda_.1} parent=1 // pred_check_branch
      %399 = sbr.rel (0) target = $region165
    $region164: #{_lambda_.1} parent=1 // pred_region
      %s401 = ssub.s32 16, 16
      %402 = vsyncadd [#allocation36], %s401
      %s404 = sshll.u32 [#allocation37], 4
      %s405 = int_to_ptr.vmem [resolvable:$true] %s404
      %407 = dma.hbm_to_vmem [thread:$0]  %s81, 16, %s405, [#allocation36]
    $region165: #{_lambda_.1} parent=1 // pred_fallthru
      _
    // Predicated region
    $region166: #{_lambda_.1} parent=1 // pred_check
      _
    $region167: #{_lambda_.1} parent=1 // pred_check_branch
      %409 = sbr.rel (0) target = $region169
    $region168: #{_lambda_.1} parent=1 // pred_region
      %410 = dma.done [#allocation3], 16
    $region169: #{_lambda_.1} parent=1 // pred_fallthru
      _
    // Predicated region
    $region170: #{_lambda_.1} parent=1 // pred_check
      _
    $region171: #{_lambda_.1} parent=1 // pred_check_branch
      %412 = sbr.rel (0) target = $region173
    $region172: #{_lambda_.1} parent=1 // pred_region
      %413 = dma.done [#allocation6], 32
    $region173: #{_lambda_.1} parent=1 // pred_fallthru
      _
    // Predicated region
    $region174: #{_lambda_.1} parent=1 // pred_check
      _
    $region175: #{_lambda_.1} parent=1 // pred_check_branch
      %415 = sbr.rel (0) target = $region177
    $region176: #{_lambda_.1} parent=1 // pred_region
      %416 = dma.done [#allocation6], 512
    $region177: #{_lambda_.1} parent=1 // pred_fallthru
      _
    // Predicated region
    $region178: #{_lambda_.1} parent=1 // pred_check
      _
    $region179: #{_lambda_.1} parent=1 // pred_check_branch
      %418 = sbr.rel (0) target = $region181
    $region180: #{_lambda_.1} parent=1 // pred_region
      %419 = dma.done [#allocation9], 32
    $region181: #{_lambda_.1} parent=1 // pred_fallthru
      _
    // Predicated region
    $region182: #{_lambda_.1} parent=1 // pred_check
      _
    $region183: #{_lambda_.1} parent=1 // pred_check_branch
      %421 = sbr.rel (0) target = $region185
    $region184: #{_lambda_.1} parent=1 // pred_region
      %422 = dma.done [#allocation9], 32
    $region185: #{_lambda_.1} parent=1 // pred_fallthru
      _
    // Predicated region
    $region186: #{_lambda_.1} parent=1 // pred_check
      _
    $region187: #{_lambda_.1} parent=1 // pred_check_branch
      %424 = sbr.rel (0) target = $region189
    $region188: #{_lambda_.1} parent=1 // pred_region
      %425 = dma.done [#allocation12], 32
    $region189: #{_lambda_.1} parent=1 // pred_fallthru
      _
    // Predicated region
    $region190: #{_lambda_.1} parent=1 // pred_check
      _
    $region191: #{_lambda_.1} parent=1 // pred_check_branch
      %427 = sbr.rel (0) target = $region193
    $region192: #{_lambda_.1} parent=1 // pred_region
      %428 = dma.done [#allocation12], 32
    $region193: #{_lambda_.1} parent=1 // pred_fallthru
      _
    // Predicated region
    $region194: #{_lambda_.1} parent=1 // pred_check
      _
    $region195: #{_lambda_.1} parent=1 // pred_check_branch
      %430 = sbr.rel (0) target = $region197
    $region196: #{_lambda_.1} parent=1 // pred_region
      %431 = dma.done [#allocation15], 32
    $region197: #{_lambda_.1} parent=1 // pred_fallthru
      _
    // Predicated region
    $region198: #{_lambda_.1} parent=1 // pred_check
      _
    $region199: #{_lambda_.1} parent=1 // pred_check_branch
      %433 = sbr.rel (0) target = $region201
    $region200: #{_lambda_.1} parent=1 // pred_region
      %434 = dma.done [#allocation15], 32
    $region201: #{_lambda_.1} parent=1 // pred_fallthru
      _
    // Predicated region
    $region202: #{_lambda_.1} parent=1 // pred_check
      _
    $region203: #{_lambda_.1} parent=1 // pred_check_branch
      %436 = sbr.rel (0) target = $region205
    $region204: #{_lambda_.1} parent=1 // pred_region
      %437 = dma.done [#allocation18], 32
    $region205: #{_lambda_.1} parent=1 // pred_fallthru
      _
    // Predicated region
    $region206: #{_lambda_.1} parent=1 // pred_check
      _
    $region207: #{_lambda_.1} parent=1 // pred_check_branch
      %439 = sbr.rel (0) target = $region209
    $region208: #{_lambda_.1} parent=1 // pred_region
      %440 = dma.done [#allocation18], 16
    $region209: #{_lambda_.1} parent=1 // pred_fallthru
      _
    // Predicated region
    $region210: #{_lambda_.1} parent=1 // pred_check
      _
    $region211: #{_lambda_.1} parent=1 // pred_check_branch
      %442 = sbr.rel (0) target = $region213
    $region212: #{_lambda_.1} parent=1 // pred_region
      %443 = dma.done [#allocation21], 32
    $region213: #{_lambda_.1} parent=1 // pred_fallthru
      _
    // Predicated region
    $region214: #{_lambda_.1} parent=1 // pred_check
      _
    $region215: #{_lambda_.1} parent=1 // pred_check_branch
      %445 = sbr.rel (0) target = $region217
    $region216: #{_lambda_.1} parent=1 // pred_region
      %446 = dma.done [#allocation21], 512
    $region217: #{_lambda_.1} parent=1 // pred_fallthru
      _
    // Predicated region
    $region218: #{_lambda_.1} parent=1 // pred_check
      _
    $region219: #{_lambda_.1} parent=1 // pred_check_branch
      %448 = sbr.rel (0) target = $region221
    $region220: #{_lambda_.1} parent=1 // pred_region
      %449 = dma.done [#allocation24], 32
    $region221: #{_lambda_.1} parent=1 // pred_fallthru
      _
    // Predicated region
    $region222: #{_lambda_.1} parent=1 // pred_check
      _
    $region223: #{_lambda_.1} parent=1 // pred_check_branch
      %451 = sbr.rel (0) target = $region225
    $region224: #{_lambda_.1} parent=1 // pred_region
      %452 = dma.done [#allocation24], 32
    $region225: #{_lambda_.1} parent=1 // pred_fallthru
      _
    // Predicated region
    $region226: #{_lambda_.1} parent=1 // pred_check
      _
    $region227: #{_lambda_.1} parent=1 // pred_check_branch
      %454 = sbr.rel (0) target = $region229
    $region228: #{_lambda_.1} parent=1 // pred_region
      %455 = dma.done [#allocation27], 32
    $region229: #{_lambda_.1} parent=1 // pred_fallthru
      _
    // Predicated region
    $region230: #{_lambda_.1} parent=1 // pred_check
      _
    $region231: #{_lambda_.1} parent=1 // pred_check_branch
      %457 = sbr.rel (0) target = $region233
    $region232: #{_lambda_.1} parent=1 // pred_region
      %458 = dma.done [#allocation27], 32
    $region233: #{_lambda_.1} parent=1 // pred_fallthru
      _
    // Predicated region
    $region234: #{_lambda_.1} parent=1 // pred_check
      _
    $region235: #{_lambda_.1} parent=1 // pred_check_branch
      %460 = sbr.rel (0) target = $region237
    $region236: #{_lambda_.1} parent=1 // pred_region
      %461 = dma.done [#allocation30], 32
    $region237: #{_lambda_.1} parent=1 // pred_fallthru
      _
    // Predicated region
    $region238: #{_lambda_.1} parent=1 // pred_check
      _
    $region239: #{_lambda_.1} parent=1 // pred_check_branch
      %463 = sbr.rel (0) target = $region241
    $region240: #{_lambda_.1} parent=1 // pred_region
      %464 = dma.done [#allocation30], 32
    $region241: #{_lambda_.1} parent=1 // pred_fallthru
      _
    // Predicated region
    $region242: #{_lambda_.1} parent=1 // pred_check
      _
    $region243: #{_lambda_.1} parent=1 // pred_check_branch
      %466 = sbr.rel (0) target = $region245
    $region244: #{_lambda_.1} parent=1 // pred_region
      %467 = dma.done [#allocation33], 32
    $region245: #{_lambda_.1} parent=1 // pred_fallthru
      _
    // Predicated region
    $region246: #{_lambda_.1} parent=1 // pred_check
      _
    $region247: #{_lambda_.1} parent=1 // pred_check_branch
      %469 = sbr.rel (0) target = $region249
    $region248: #{_lambda_.1} parent=1 // pred_region
      %470 = dma.done [#allocation33], 16
    $region249: #{_lambda_.1} parent=1 // pred_fallthru
      _
    // Predicated region
    $region250: #{_lambda_.1} parent=1 // pred_check
      _
    $region251: #{_lambda_.1} parent=1 // pred_check_branch
      %472 = sbr.rel (0) target = $region253
    $region252: #{_lambda_.1} parent=1 // pred_region
      %473 = dma.done [#allocation36], 16
    $region253: #{_lambda_.1} parent=1 // pred_fallthru
      _
    // Predicated region
    $region254: #{_lambda_.1} parent=1 // pred_check
      _
    $region255: #{_lambda_.1} parent=1 // pred_check_branch
      %475 = sbr.rel (0) target = $region257
    $region256: #{_lambda_.1} parent=1 // pred_region
      %476 = dma.done [#allocation36], 16
    $region257: #{_lambda_.1} parent=1 // pred_fallthru
      _
    %v478 = vld [vmem:[%s1] sm:$0xff]
    %v479 = vld [vmem:[%s1 + $0x8] sm:$0xff]
    %v480 = vld [vmem:[%s5] sm:$0x1]
    %v481 = vld [vmem:[#allocation2] sm:$0x1]
    %482 = vadd.xlane.f32.xlu0 %v478
    %v483 = vpop.xlane.xlu0 %482
    %484 = vadd.xlane.f32.xlu0 %v479
    %v485 = vpop.xlane.xlu0 %484
    %v486 = vmul.f32 %v483, 0.03125
    %v487 = vmul.f32 %v485, 0.03125
    %v488 = vmul.f32 %v478, %v478
    %v489 = vmul.f32 %v479, %v479
    %490 = vadd.xlane.f32.xlu0 %v488
    %v491 = vpop.xlane.xlu0 %490
    %492 = vadd.xlane.f32.xlu0 %v489
    %v493 = vpop.xlane.xlu0 %492
    %v494 = vmul.f32 %v491, 0.03125
    %v495 = vmul.f32 %v493, 0.03125
    %v496 = vmul.f32 %v486, %v486
    %v497 = vmul.f32 %v487, %v487
    %v498 = vsub.f32 %v494, %v496
    %v499 = vsub.f32 %v495, %v497
    %v500 = vsub.f32 %v478, %v486
    %v501 = vsub.f32 %v479, %v487
    %v502 = vadd.f32 %v498, 1e-12
    %v503 = vadd.f32 %v499, 1e-12
    %v504 = vrsqrt.pop %v502
    %v505 = vrsqrt.pop %v503
    %v506 = vmul.f32 %v500, %v504
    %v507 = vmul.f32 %v501, %v505
    %v509 = vlaneseq
    %v510 = vshrl.u32 %v509, 7
    %v511 = vsub.s32 0, %v510
    %v512 = vrot.slane %v480, %v511
    %v514 = vmul.f32 %v506, %v512
    %v515 = vmul.f32 %v507, %v512
    %v517 = vlaneseq
    %v518 = vshrl.u32 %v517, 7
    %v519 = vsub.s32 0, %v518
    %v520 = vrot.slane %v481, %v519
    %v522 = vadd.f32 %v514, %v520
    %v523 = vadd.f32 %v515, %v520
    %v524 = vld [vmem:[%s3] sm:$0xff]
    %v525 = vld [vmem:[%s3 + $0x8] sm:$0xff]
    %v526 = vld [vmem:[%s3 + $0x10] sm:$0xff]
    %v527 = vld [vmem:[%s3 + $0x18] sm:$0xff]
    %v528 = vld [vmem:[%s9] sm:$0xf]
    %v529 = vld [vmem:[%s9 + $0x4] sm:$0xf]
    %v530 = vld [vmem:[%s9 + $0x8] sm:$0xf]
    %v531 = vld [vmem:[%s9 + $0xc] sm:$0xf]
    %v532 = vld [vmem:[%s9 + $0x10] sm:$0xf]
    %v533 = vld [vmem:[%s9 + $0x14] sm:$0xf]
    %v534 = vld [vmem:[%s9 + $0x18] sm:$0xf]
    %v535 = vld [vmem:[%s9 + $0x1c] sm:$0xf]
    %v536 = vld [vmem:[%s9 + $0x20] sm:$0xf]
    %v537 = vld [vmem:[%s9 + $0x24] sm:$0xf]
    %v538 = vld [vmem:[%s9 + $0x28] sm:$0xf]
    %v539 = vld [vmem:[%s9 + $0x2c] sm:$0xf]
    %v540 = vld [vmem:[%s9 + $0x30] sm:$0xf]
    %v541 = vld [vmem:[%s9 + $0x34] sm:$0xf]
    %v542 = vld [vmem:[%s9 + $0x38] sm:$0xf]
    %v543 = vld [vmem:[%s9 + $0x3c] sm:$0xf]
    %v544 = vld [vmem:[#allocation5] sm:$0x1]
    %v545 = vld [vmem:[#allocation7] sm:$0xf]
    %v546 = vld [vmem:[#allocation7 + $0x4] sm:$0xf]
    %v547 = vld [vmem:[#allocation7 + $0x8] sm:$0xf]
    %v548 = vld [vmem:[#allocation7 + $0xc] sm:$0xf]
    %v549 = vld [vmem:[#allocation8] sm:$0x1]
    %v550 = vld [vmem:[#allocation10] sm:$0x1]
    %v551 = vld [vmem:[#allocation11] sm:$0x1]
    %v552 = vld [vmem:[%s21] sm:$0xf]
    %v553 = vld [vmem:[%s21 + $0x4] sm:$0xf]
    %v554 = vld [vmem:[%s21 + $0x8] sm:$0xf]
    %v555 = vld [vmem:[%s21 + $0xc] sm:$0xf]
    %v556 = vld [vmem:[%s21 + $0x10] sm:$0xf]
    %v557 = vld [vmem:[%s21 + $0x14] sm:$0xf]
    %v558 = vld [vmem:[%s21 + $0x18] sm:$0xf]
    %v559 = vld [vmem:[%s21 + $0x1c] sm:$0xf]
    %v560 = vld [vmem:[%s21 + $0x20] sm:$0xf]
    %v561 = vld [vmem:[%s21 + $0x24] sm:$0xf]
    %v562 = vld [vmem:[%s21 + $0x28] sm:$0xf]
    %v563 = vld [vmem:[%s21 + $0x2c] sm:$0xf]
    %v564 = vld [vmem:[%s21 + $0x30] sm:$0xf]
    %v565 = vld [vmem:[%s21 + $0x34] sm:$0xf]
    %v566 = vld [vmem:[%s21 + $0x38] sm:$0xf]
    %v567 = vld [vmem:[%s21 + $0x3c] sm:$0xf]
    %v568 = vld [vmem:[#allocation13] sm:$0x1]
    %v569 = vld [vmem:[%s25] sm:$0xf]
    %v570 = vld [vmem:[%s25 + $0x4] sm:$0xf]
    %v571 = vld [vmem:[%s25 + $0x8] sm:$0xf]
    %v572 = vld [vmem:[%s25 + $0xc] sm:$0xf]
    %v573 = vld [vmem:[%s25 + $0x10] sm:$0xf]
    %v574 = vld [vmem:[%s25 + $0x14] sm:$0xf]
    %v575 = vld [vmem:[%s25 + $0x18] sm:$0xf]
    %v576 = vld [vmem:[%s25 + $0x1c] sm:$0xf]
    %v577 = vld [vmem:[%s25 + $0x20] sm:$0xf]
    %v578 = vld [vmem:[%s25 + $0x24] sm:$0xf]
    %v579 = vld [vmem:[%s25 + $0x28] sm:$0xf]
    %v580 = vld [vmem:[%s25 + $0x2c] sm:$0xf]
    %v581 = vld [vmem:[%s25 + $0x30] sm:$0xf]
    %v582 = vld [vmem:[%s25 + $0x34] sm:$0xf]
    %v583 = vld [vmem:[%s25 + $0x38] sm:$0xf]
    %v584 = vld [vmem:[%s25 + $0x3c] sm:$0xf]
    %v585 = vld [vmem:[#allocation14] sm:$0x1]
    %v586 = vld [vmem:[#allocation16] sm:$0x1]
    %v587 = vld [vmem:[#allocation17] sm:$0x1]
    %v588 = vpack.c.bf16 %v523, %v522
    %v590 = vlaneseq
    %v591 = vshrl.u32 %v590, 7
    %v592 = vsub.s32 0, %v591
    %v593 = vrot.slane %v544, %v592
    %v611 = vunpack.c.l.b16 %v528
    %v612 = vunpack.c.l.b16 %v529
    %v613 = vunpack.c.l.b16 %v530
    %v614 = vunpack.c.l.b16 %v531
    %v615 = vunpack.c.l.b16 %v532
    %v616 = vunpack.c.l.b16 %v533
    %v617 = vunpack.c.l.b16 %v534
    %v618 = vunpack.c.l.b16 %v535
    %v619 = vunpack.c.l.b16 %v536
    %v620 = vunpack.c.l.b16 %v537
    %v621 = vunpack.c.l.b16 %v538
    %v622 = vunpack.c.l.b16 %v539
    %v623 = vunpack.c.l.b16 %v540
    %v624 = vunpack.c.l.b16 %v541
    %v625 = vunpack.c.l.b16 %v542
    %v626 = vunpack.c.l.b16 %v543
    %v627 = vpack.c.b16 %v612, %v611
    %v628 = vpack.c.b16 %v614, %v613
    %v629 = vpack.c.b16 %v616, %v615
    %v630 = vpack.c.b16 %v618, %v617
    %v631 = vpack.c.b16 %v620, %v619
    %v632 = vpack.c.b16 %v622, %v621
    %v633 = vpack.c.b16 %v624, %v623
    %v634 = vpack.c.b16 %v626, %v625
    %643 = vmatprep.subr.bf16.mxu0 0
    %644 = vmatpush1.bf16.msra.mxu0 %v627
    %645 = vmatprep.subr.bf16.mxu0 0
    %646 = vmatpush1.bf16.msra.mxu0 %v628
    %647 = vmatprep.subr.bf16.mxu0 0
    %648 = vmatpush1.bf16.msra.mxu0 %v629
    %649 = vmatprep.subr.bf16.mxu0 0
    %650 = vmatpush1.bf16.msra.mxu0 %v630
    %651 = vmatprep.subr.bf16.mxu0 0
    %652 = vmatpush1.bf16.msra.mxu0 %v631
    %653 = vmatprep.subr.bf16.mxu0 0
    %654 = vmatpush1.bf16.msra.mxu0 %v632
    %655 = vmatprep.subr.bf16.mxu0 0
    %656 = vmatpush1.bf16.msra.mxu0 %v633
    %657 = vmatprep.subr.bf16.mxu0 0
    %658 = vmatpush1.bf16.msra.mxu0 %v634
    %659 = vmatprep.subr.bf16.mxu0 0
    %660 = vmatpush1.bf16.msra.mxu0 0
    %661 = vmatprep.subr.bf16.mxu0 0
    %662 = vmatpush1.bf16.msra.mxu0 0
    %663 = vmatprep.subr.bf16.mxu0 0
    %664 = vmatpush1.bf16.msra.mxu0 0
    %665 = vmatprep.subr.bf16.mxu0 0
    %666 = vmatpush1.bf16.msra.mxu0 0
    %667 = vmatprep.subr.bf16.mxu0 0
    %668 = vmatpush1.bf16.msra.mxu0 0
    %669 = vmatprep.subr.bf16.mxu0 0
    %670 = vmatpush1.bf16.msra.mxu0 0
    %671 = vmatprep.subr.bf16.mxu0 0
    %672 = vmatpush1.bf16.msra.mxu0 0
    %673 = vmatprep.subr.bf16.mxu0 0
    %674 = vmatpush1.bf16.msra.mxu0 0
    %675 = vmatprep.mubr.bf16.mxu0 0
    %676 = vmatmul.mubr.bf16.gmra.mrb[0].mxu0 %v588
    %v677 = vpop.f32.mrb[0].mxu0
    %v678 = vadd.f32 %v593, %v677
    %v679 = vpop.f32.mrb[0].mxu0
    %v680 = vpop.f32.mrb[0].mxu0
    %v681 = vadd.f32 %v593, %v680
    %v682 = vpop.f32.mrb[0].mxu0
    %683 = vdwg.mxu0
    %686 = vrot.lane.b32.xlu0 %v678, 112
    %v687 = vpop.permute.xlu0 %686
    %688 = vrot.lane.b32.xlu0 %v681, 112
    %v689 = vpop.permute.xlu0 %688
    %v692 = vpack.c.bf16 %v681, %v678
    %v693 = vpack.c.bf16 %v689, %v687
    %696 = vrot.lane.b32.xlu0 %v692, 96
    %v697 = vpop.permute.xlu0 %696
    %698 = vrot.lane.b32.xlu0 %v693, 96
    %v699 = vpop.permute.xlu0 %698
    %vm700 = vcmask 130048
    %v702 = vsel %vm700, %v692, 0
    %v705 = vsel %vm700, %v693, 0
    %v708 = vsel %vm700, %v697, 0
    %v711 = vsel %vm700, %v699, 0
    %713 = vmatprep.subr.bf16.mxu0 0
    %714 = vmatpush1.bf16.xpose.msra.mxu0 %v708
    %715 = vmatprep.subr.bf16.mxu0 0
    %716 = vmatpush1.bf16.xpose.msra.mxu0 %v711
    %717 = vmatprep.subr.bf16.mxu0 0
    %718 = vmatpush1.bf16.xpose.msra.mxu0 0
    %719 = vmatprep.subr.bf16.mxu0 0
    %720 = vmatpush1.bf16.xpose.msra.mxu0 0
    %721 = vmatprep.subr.bf16.mxu0 0
    %722 = vmatpush1.bf16.xpose.msra.mxu0 0
    %723 = vmatprep.subr.bf16.mxu0 0
    %724 = vmatpush1.bf16.xpose.msra.mxu0 0
    %725 = vmatprep.subr.bf16.mxu0 0
    %726 = vmatpush1.bf16.xpose.msra.mxu0 0
    %727 = vmatprep.subr.bf16.mxu0 0
    %728 = vmatpush1.bf16.xpose.msra.mxu0 0
    %729 = vmatprep.subr.bf16.mxu0 0
    %730 = vmatpush1.bf16.xpose.msra.mxu0 0
    %731 = vmatprep.subr.bf16.mxu0 0
    %732 = vmatpush1.bf16.xpose.msra.mxu0 0
    %733 = vmatprep.subr.bf16.mxu0 0
    %734 = vmatpush1.bf16.xpose.msra.mxu0 0
    %735 = vmatprep.subr.bf16.mxu0 0
    %736 = vmatpush1.bf16.xpose.msra.mxu0 0
    %737 = vmatprep.subr.bf16.mxu0 0
    %738 = vmatpush1.bf16.xpose.msra.mxu0 0
    %739 = vmatprep.subr.bf16.mxu0 0
    %740 = vmatpush1.bf16.xpose.msra.mxu0 0
    %741 = vmatprep.subr.bf16.mxu0 0
    %742 = vmatpush1.bf16.xpose.msra.mxu0 0
    %743 = vmatprep.subr.bf16.mxu0 0
    %744 = vmatpush1.bf16.xpose.msra.mxu0 0
    %745 = vmatprep.mubr.bf16.mxu0 0
    %746 = vmatmul.mubr.bf16.gmra.mrb[0].mxu0 %v702
    %v747 = vpop.f32.mrb[0].mxu0
    %v748 = vadd.f32 0.0, %v747
    %v749 = vpop.f32.mrb[0].mxu0
    %v750 = vpop.f32.mrb[0].mxu0
    %v751 = vadd.f32 0.0, %v750
    %v752 = vpop.f32.mrb[0].mxu0
    %753 = vmatprep.mubr.bf16.mxu0 0
    %754 = vmatmul.mubr.bf16.gmra.mrb[0].mxu0 %v705
    %v755 = vpop.f32.mrb[0].mxu0
    %v756 = vadd.f32 0.0, %v755
    %v757 = vpop.f32.mrb[0].mxu0
    %v758 = vpop.f32.mrb[0].mxu0
    %v759 = vadd.f32 0.0, %v758
    %v760 = vpop.f32.mrb[0].mxu0
    %761 = vdwg.mxu0
    %v762 = vmul.f32 %v748, 0.25
    %v763 = vmul.f32 %v751, 0.25
    %v764 = vmul.f32 %v756, 0.25
    %v765 = vmul.f32 %v759, 0.25
    %v766 = vadd.f32 %v762, %v524
    %v767 = vadd.f32 %v763, %v525
    %v768 = vadd.f32 %v764, %v526
    %v769 = vadd.f32 %v765, %v527
    %vm770 = vcmask 261120
    %v771 = vsel %vm770, %v766, -inf
    %772 = vmax.xlane.f32.xlu0 %v771
    %v773 = vpop.xlane.xlu0 %772
    %v774 = vsel %vm770, %v767, -inf
    %775 = vmax.xlane.f32.xlu0 %v774
    %v776 = vpop.xlane.xlu0 %775
    %v777 = vsel %vm770, %v768, -inf
    %778 = vmax.xlane.f32.xlu0 %v777
    %v779 = vpop.xlane.xlu0 %778
    %v780 = vsel %vm770, %v769, -inf
    %781 = vmax.xlane.f32.xlu0 %v780
    %v782 = vpop.xlane.xlu0 %781
    %v783 = vsub.f32 %v766, %v773
    %v784 = vsub.f32 %v767, %v776
    %v785 = vsub.f32 %v768, %v779
    %v786 = vsub.f32 %v769, %v782
    %v787 = vmul.f32 %v783, 1.442695
    %v788 = vpow.pop %v787
    %v789 = vmul.f32 %v784, 1.442695
    %v790 = vpow.pop %v789
    %v791 = vmul.f32 %v785, 1.442695
    %v792 = vpow.pop %v791
    %v793 = vmul.f32 %v786, 1.442695
    %v794 = vpow.pop %v793
    %v795 = vsel %vm770, %v788, 0.0
    %796 = vadd.xlane.f32.xlu0 %v795
    %v797 = vpop.xlane.xlu0 %796
    %v798 = vsel %vm770, %v790, 0.0
    %799 = vadd.xlane.f32.xlu0 %v798
    %v800 = vpop.xlane.xlu0 %799
    %v801 = vsel %vm770, %v792, 0.0
    %802 = vadd.xlane.f32.xlu0 %v801
    %v803 = vpop.xlane.xlu0 %802
    %v804 = vsel %vm770, %v794, 0.0
    %805 = vadd.xlane.f32.xlu0 %v804
    %v806 = vpop.xlane.xlu0 %805
    %v807 = vrcp.pop %v797
    %v808 = vrcp.pop %v800
    %v809 = vrcp.pop %v803
    %v810 = vrcp.pop %v806
    %v811 = vmul.f32 %v788, %v807
    %v812 = vmul.f32 %v790, %v808
    %v813 = vmul.f32 %v792, %v809
    %v814 = vmul.f32 %v794, %v810
    %v815 = vpack.c.bf16 %v812, %v811
    %v816 = vpack.c.bf16 %v814, %v813
    %817 = vrot.lane.b32.xlu0 %v692, 64
    %v818 = vpop.permute.xlu0 %817
    %819 = vrot.lane.b32.xlu0 %v693, 64
    %v820 = vpop.permute.xlu0 %819
    %v824 = vsel %vm770, %v815, 0
    %v827 = vsel %vm770, %v816, 0
    %829 = vmatprep.subr.bf16.mxu0 0
    %830 = vmatpush1.bf16.msra.mxu0 %v818
    %831 = vmatprep.subr.bf16.mxu0 0
    %832 = vmatpush1.bf16.msra.mxu0 %v820
    %833 = vmatprep.subr.bf16.mxu0 0
    %834 = vmatpush1.bf16.msra.mxu0 0
    %835 = vmatprep.subr.bf16.mxu0 0
    %836 = vmatpush1.bf16.msra.mxu0 0
    %837 = vmatprep.subr.bf16.mxu0 0
    %838 = vmatpush1.bf16.msra.mxu0 0
    %839 = vmatprep.subr.bf16.mxu0 0
    %840 = vmatpush1.bf16.msra.mxu0 0
    %841 = vmatprep.subr.bf16.mxu0 0
    %842 = vmatpush1.bf16.msra.mxu0 0
    %843 = vmatprep.subr.bf16.mxu0 0
    %844 = vmatpush1.bf16.msra.mxu0 0
    %845 = vmatprep.subr.bf16.mxu0 0
    %846 = vmatpush1.bf16.msra.mxu0 0
    %847 = vmatprep.subr.bf16.mxu0 0
    %848 = vmatpush1.bf16.msra.mxu0 0
    %849 = vmatprep.subr.bf16.mxu0 0
    %850 = vmatpush1.bf16.msra.mxu0 0
    %851 = vmatprep.subr.bf16.mxu0 0
    %852 = vmatpush1.bf16.msra.mxu0 0
    %853 = vmatprep.subr.bf16.mxu0 0
    %854 = vmatpush1.bf16.msra.mxu0 0
    %855 = vmatprep.subr.bf16.mxu0 0
    %856 = vmatpush1.bf16.msra.mxu0 0
    %857 = vmatprep.subr.bf16.mxu0 0
    %858 = vmatpush1.bf16.msra.mxu0 0
    %859 = vmatprep.subr.bf16.mxu0 0
    %860 = vmatpush1.bf16.msra.mxu0 0
    %861 = vmatprep.mubr.bf16.mxu0 0
    %862 = vmatmul.mubr.bf16.gmra.mrb[0].mxu0 %v824
    %v863 = vpop.f32.mrb[0].mxu0
    %v864 = vadd.f32 0.0, %v863
    %v865 = vpop.f32.mrb[0].mxu0
    %v866 = vpop.f32.mrb[0].mxu0
    %v867 = vadd.f32 0.0, %v866
    %v868 = vpop.f32.mrb[0].mxu0
    %869 = vmatprep.mubr.bf16.mxu0 0
    %870 = vmatmul.mubr.bf16.gmra.mrb[0].mxu0 %v827
    %v871 = vpop.f32.mrb[0].mxu0
    %v872 = vadd.f32 0.0, %v871
    %v873 = vpop.f32.mrb[0].mxu0
    %v874 = vpop.f32.mrb[0].mxu0
    %v875 = vadd.f32 0.0, %v874
    %v876 = vpop.f32.mrb[0].mxu0
    %877 = vdwg.mxu0
    %880 = vrot.lane.b32.xlu0 %v872, 16
    %v881 = vpop.permute.xlu0 %880
    %882 = vrot.lane.b32.xlu0 %v875, 16
    %v883 = vpop.permute.xlu0 %882
    %v886 = vsel %vm700, %v864, %v881
    %v887 = vsel %vm700, %v867, %v883
    %v888 = vpack.c.bf16 %v887, %v886
    %v890 = vlaneseq
    %v891 = vshrl.u32 %v890, 7
    %v892 = vsub.s32 0, %v891
    %v893 = vrot.slane %v549, %v892
    %v899 = vunpack.c.l.b16 %v545
    %v900 = vunpack.c.l.b16 %v546
    %v901 = vunpack.c.l.b16 %v547
    %v902 = vunpack.c.l.b16 %v548
    %v903 = vpack.c.b16 %v900, %v899
    %v904 = vpack.c.b16 %v902, %v901
    %v908 = vsel %vm770, %v888, 0
    %910 = vmatprep.subr.bf16.mxu0 0
    %911 = vmatpush1.bf16.msra.mxu0 %v903
    %912 = vmatprep.subr.bf16.mxu0 0
    %913 = vmatpush1.bf16.msra.mxu0 %v904
    %914 = vmatprep.subr.bf16.mxu0 0
    %915 = vmatpush1.bf16.msra.mxu0 0
    %916 = vmatprep.subr.bf16.mxu0 0
    %917 = vmatpush1.bf16.msra.mxu0 0
    %918 = vmatprep.subr.bf16.mxu0 0
    %919 = vmatpush1.bf16.msra.mxu0 0
    %920 = vmatprep.subr.bf16.mxu0 0
    %921 = vmatpush1.bf16.msra.mxu0 0
    %922 = vmatprep.subr.bf16.mxu0 0
    %923 = vmatpush1.bf16.msra.mxu0 0
    %924 = vmatprep.subr.bf16.mxu0 0
    %925 = vmatpush1.bf16.msra.mxu0 0
    %926 = vmatprep.subr.bf16.mxu0 0
    %927 = vmatpush1.bf16.msra.mxu0 0
    %928 = vmatprep.subr.bf16.mxu0 0
    %929 = vmatpush1.bf16.msra.mxu0 0
    %930 = vmatprep.subr.bf16.mxu0 0
    %931 = vmatpush1.bf16.msra.mxu0 0
    %932 = vmatprep.subr.bf16.mxu0 0
    %933 = vmatpush1.bf16.msra.mxu0 0
    %934 = vmatprep.subr.bf16.mxu0 0
    %935 = vmatpush1.bf16.msra.mxu0 0
    %936 = vmatprep.subr.bf16.mxu0 0
    %937 = vmatpush1.bf16.msra.mxu0 0
    %938 = vmatprep.subr.bf16.mxu0 0
    %939 = vmatpush1.bf16.msra.mxu0 0
    %940 = vmatprep.subr.bf16.mxu0 0
    %941 = vmatpush1.bf16.msra.mxu0 0
    %942 = vmatprep.mubr.bf16.mxu0 0
    %943 = vmatmul.mubr.bf16.gmra.mrb[0].mxu0 %v908
    %v944 = vpop.f32.mrb[0].mxu0
    %v945 = vadd.f32 %v893, %v944
    %v946 = vpop.f32.mrb[0].mxu0
    %v947 = vpop.f32.mrb[0].mxu0
    %v948 = vadd.f32 %v893, %v947
    %v949 = vpop.f32.mrb[0].mxu0
    %950 = vdwg.mxu0
    %v951 = vadd.f32 %v522, %v945
    %v952 = vadd.f32 %v523, %v948
    %953 = vadd.xlane.f32.xlu0 %v951
    %v954 = vpop.xlane.xlu0 %953
    %955 = vadd.xlane.f32.xlu0 %v952
    %v956 = vpop.xlane.xlu0 %955
    %v957 = vmul.f32 %v954, 0.03125
    %v958 = vmul.f32 %v956, 0.03125
    %v959 = vmul.f32 %v951, %v951
    %v960 = vmul.f32 %v952, %v952
    %961 = vadd.xlane.f32.xlu0 %v959
    %v962 = vpop.xlane.xlu0 %961
    %963 = vadd.xlane.f32.xlu0 %v960
    %v964 = vpop.xlane.xlu0 %963
    %v965 = vmul.f32 %v962, 0.03125
    %v966 = vmul.f32 %v964, 0.03125
    %v967 = vmul.f32 %v957, %v957
    %v968 = vmul.f32 %v958, %v958
    %v969 = vsub.f32 %v965, %v967
    %v970 = vsub.f32 %v966, %v968
    %v971 = vsub.f32 %v951, %v957
    %v972 = vsub.f32 %v952, %v958
    %v973 = vadd.f32 %v969, 1e-12
    %v974 = vadd.f32 %v970, 1e-12
    %v975 = vrsqrt.pop %v973
    %v976 = vrsqrt.pop %v974
    %v977 = vmul.f32 %v971, %v975
    %v978 = vmul.f32 %v972, %v976
    %v980 = vlaneseq
    %v981 = vshrl.u32 %v980, 7
    %v982 = vsub.s32 0, %v981
    %v983 = vrot.slane %v550, %v982
    %v985 = vmul.f32 %v977, %v983
    %v986 = vmul.f32 %v978, %v983
    %v988 = vlaneseq
    %v989 = vshrl.u32 %v988, 7
    %v990 = vsub.s32 0, %v989
    %v991 = vrot.slane %v551, %v990
    %v993 = vadd.f32 %v985, %v991
    %v994 = vadd.f32 %v986, %v991
    %v995 = vpack.c.bf16 %v994, %v993
    %v997 = vlaneseq
    %v998 = vshrl.u32 %v997, 7
    %v999 = vsub.s32 0, %v998
    %v1000 = vrot.slane %v568, %v999
    %v1018 = vunpack.c.l.b16 %v552
    %v1019 = vunpack.c.l.b16 %v553
    %v1020 = vunpack.c.l.b16 %v554
    %v1021 = vunpack.c.l.b16 %v555
    %v1022 = vunpack.c.l.b16 %v556
    %v1023 = vunpack.c.l.b16 %v557
    %v1024 = vunpack.c.l.b16 %v558
    %v1025 = vunpack.c.l.b16 %v559
    %v1026 = vunpack.c.l.b16 %v560
    %v1027 = vunpack.c.l.b16 %v561
    %v1028 = vunpack.c.l.b16 %v562
    %v1029 = vunpack.c.l.b16 %v563
    %v1030 = vunpack.c.l.b16 %v564
    %v1031 = vunpack.c.l.b16 %v565
    %v1032 = vunpack.c.l.b16 %v566
    %v1033 = vunpack.c.l.b16 %v567
    %v1034 = vpack.c.b16 %v1019, %v1018
    %v1035 = vpack.c.b16 %v1021, %v1020
    %v1036 = vpack.c.b16 %v1023, %v1022
    %v1037 = vpack.c.b16 %v1025, %v1024
    %v1038 = vpack.c.b16 %v1027, %v1026
    %v1039 = vpack.c.b16 %v1029, %v1028
    %v1040 = vpack.c.b16 %v1031, %v1030
    %v1041 = vpack.c.b16 %v1033, %v1032
    %1050 = vmatprep.subr.bf16.mxu0 0
    %1051 = vmatpush1.bf16.msra.mxu0 %v1034
    %1052 = vmatprep.subr.bf16.mxu0 0
    %1053 = vmatpush1.bf16.msra.mxu0 %v1035
    %1054 = vmatprep.subr.bf16.mxu0 0
    %1055 = vmatpush1.bf16.msra.mxu0 %v1036
    %1056 = vmatprep.subr.bf16.mxu0 0
    %1057 = vmatpush1.bf16.msra.mxu0 %v1037
    %1058 = vmatprep.subr.bf16.mxu0 0
    %1059 = vmatpush1.bf16.msra.mxu0 %v1038
    %1060 = vmatprep.subr.bf16.mxu0 0
    %1061 = vmatpush1.bf16.msra.mxu0 %v1039
    %1062 = vmatprep.subr.bf16.mxu0 0
    %1063 = vmatpush1.bf16.msra.mxu0 %v1040
    %1064 = vmatprep.subr.bf16.mxu0 0
    %1065 = vmatpush1.bf16.msra.mxu0 %v1041
    %1066 = vmatprep.subr.bf16.mxu0 0
    %1067 = vmatpush1.bf16.msra.mxu0 0
    %1068 = vmatprep.subr.bf16.mxu0 0
    %1069 = vmatpush1.bf16.msra.mxu0 0
    %1070 = vmatprep.subr.bf16.mxu0 0
    %1071 = vmatpush1.bf16.msra.mxu0 0
    %1072 = vmatprep.subr.bf16.mxu0 0
    %1073 = vmatpush1.bf16.msra.mxu0 0
    %1074 = vmatprep.subr.bf16.mxu0 0
    %1075 = vmatpush1.bf16.msra.mxu0 0
    %1076 = vmatprep.subr.bf16.mxu0 0
    %1077 = vmatpush1.bf16.msra.mxu0 0
    %1078 = vmatprep.subr.bf16.mxu0 0
    %1079 = vmatpush1.bf16.msra.mxu0 0
    %1080 = vmatprep.subr.bf16.mxu0 0
    %1081 = vmatpush1.bf16.msra.mxu0 0
    %1082 = vmatprep.mubr.bf16.mxu0 0
    %1083 = vmatmul.mubr.bf16.gmra.mrb[0].mxu0 %v995
    %v1084 = vpop.f32.mrb[0].mxu0
    %v1085 = vadd.f32 %v1000, %v1084
    %v1086 = vpop.f32.mrb[0].mxu0
    %v1087 = vpop.f32.mrb[0].mxu0
    %v1088 = vadd.f32 %v1000, %v1087
    %v1089 = vpop.f32.mrb[0].mxu0
    %1090 = vdwg.mxu0
    %v1091 = vmul.f32 %v1085, 0.5
    %v1092 = vmul.f32 %v1088, 0.5
    %v1093 = vmul.f32 %v1085, 0.044715
    %v1094 = vmul.f32 %v1088, 0.044715
    %v1095 = vmul.f32 %v1093, %v1085
    %v1096 = vmul.f32 %v1094, %v1088
    %v1097 = vmul.f32 %v1095, %v1085
    %v1098 = vmul.f32 %v1096, %v1088
    %v1099 = vadd.f32 %v1085, %v1097
    %v1100 = vadd.f32 %v1088, %v1098
    %v1101 = vmul.f32 %v1099, 0.7978846
    %v1102 = vmul.f32 %v1100, 0.7978846
    %v1103 = vtanh.pop %v1101
    %v1104 = vtanh.pop %v1102
    %v1105 = vadd.f32 %v1103, 1.0
    %v1106 = vadd.f32 %v1104, 1.0
    %v1107 = vmul.f32 %v1091, %v1105
    %v1108 = vmul.f32 %v1092, %v1106
    %v1109 = vpack.c.bf16 %v1108, %v1107
    %v1111 = vlaneseq
    %v1112 = vshrl.u32 %v1111, 7
    %v1113 = vsub.s32 0, %v1112
    %v1114 = vrot.slane %v585, %v1113
    %v1132 = vunpack.c.l.b16 %v569
    %v1133 = vunpack.c.l.b16 %v570
    %v1134 = vunpack.c.l.b16 %v571
    %v1135 = vunpack.c.l.b16 %v572
    %v1136 = vunpack.c.l.b16 %v573
    %v1137 = vunpack.c.l.b16 %v574
    %v1138 = vunpack.c.l.b16 %v575
    %v1139 = vunpack.c.l.b16 %v576
    %v1140 = vunpack.c.l.b16 %v577
    %v1141 = vunpack.c.l.b16 %v578
    %v1142 = vunpack.c.l.b16 %v579
    %v1143 = vunpack.c.l.b16 %v580
    %v1144 = vunpack.c.l.b16 %v581
    %v1145 = vunpack.c.l.b16 %v582
    %v1146 = vunpack.c.l.b16 %v583
    %v1147 = vunpack.c.l.b16 %v584
    %v1148 = vpack.c.b16 %v1133, %v1132
    %v1149 = vpack.c.b16 %v1135, %v1134
    %v1150 = vpack.c.b16 %v1137, %v1136
    %v1151 = vpack.c.b16 %v1139, %v1138
    %v1152 = vpack.c.b16 %v1141, %v1140
    %v1153 = vpack.c.b16 %v1143, %v1142
    %v1154 = vpack.c.b16 %v1145, %v1144
    %v1155 = vpack.c.b16 %v1147, %v1146
    %1164 = vmatprep.subr.bf16.mxu0 0
    %1165 = vmatpush1.bf16.msra.mxu0 %v1148
    %1166 = vmatprep.subr.bf16.mxu0 0
    %1167 = vmatpush1.bf16.msra.mxu0 %v1149
    %1168 = vmatprep.subr.bf16.mxu0 0
    %1169 = vmatpush1.bf16.msra.mxu0 %v1150
    %1170 = vmatprep.subr.bf16.mxu0 0
    %1171 = vmatpush1.bf16.msra.mxu0 %v1151
    %1172 = vmatprep.subr.bf16.mxu0 0
    %1173 = vmatpush1.bf16.msra.mxu0 %v1152
    %1174 = vmatprep.subr.bf16.mxu0 0
    %1175 = vmatpush1.bf16.msra.mxu0 %v1153
    %1176 = vmatprep.subr.bf16.mxu0 0
    %1177 = vmatpush1.bf16.msra.mxu0 %v1154
    %1178 = vmatprep.subr.bf16.mxu0 0
    %1179 = vmatpush1.bf16.msra.mxu0 %v1155
    %1180 = vmatprep.subr.bf16.mxu0 0
    %1181 = vmatpush1.bf16.msra.mxu0 0
    %1182 = vmatprep.subr.bf16.mxu0 0
    %1183 = vmatpush1.bf16.msra.mxu0 0
    %1184 = vmatprep.subr.bf16.mxu0 0
    %1185 = vmatpush1.bf16.msra.mxu0 0
    %1186 = vmatprep.subr.bf16.mxu0 0
    %1187 = vmatpush1.bf16.msra.mxu0 0
    %1188 = vmatprep.subr.bf16.mxu0 0
    %1189 = vmatpush1.bf16.msra.mxu0 0
    %1190 = vmatprep.subr.bf16.mxu0 0
    %1191 = vmatpush1.bf16.msra.mxu0 0
    %1192 = vmatprep.subr.bf16.mxu0 0
    %1193 = vmatpush1.bf16.msra.mxu0 0
    %1194 = vmatprep.subr.bf16.mxu0 0
    %1195 = vmatpush1.bf16.msra.mxu0 0
    %1196 = vmatprep.mubr.bf16.mxu0 0
    %1197 = vmatmul.mubr.bf16.gmra.mrb[0].mxu0 %v1109
    %v1198 = vpop.f32.mrb[0].mxu0
    %v1199 = vadd.f32 %v1114, %v1198
    %v1200 = vpop.f32.mrb[0].mxu0
    %v1201 = vpop.f32.mrb[0].mxu0
    %v1202 = vadd.f32 %v1114, %v1201
    %v1203 = vpop.f32.mrb[0].mxu0
    %1204 = vdwg.mxu0
    %v1205 = vadd.f32 %v993, %v1199
    %v1206 = vadd.f32 %v994, %v1202
    %1207 = vadd.xlane.f32.xlu0 %v1205
    %v1208 = vpop.xlane.xlu0 %1207
    %1209 = vadd.xlane.f32.xlu0 %v1206
    %v1210 = vpop.xlane.xlu0 %1209
    %v1211 = vmul.f32 %v1208, 0.03125
    %v1212 = vmul.f32 %v1210, 0.03125
    %v1213 = vmul.f32 %v1205, %v1205
    %v1214 = vmul.f32 %v1206, %v1206
    %1215 = vadd.xlane.f32.xlu0 %v1213
    %v1216 = vpop.xlane.xlu0 %1215
    %1217 = vadd.xlane.f32.xlu0 %v1214
    %v1218 = vpop.xlane.xlu0 %1217
    %v1219 = vmul.f32 %v1216, 0.03125
    %v1220 = vmul.f32 %v1218, 0.03125
    %v1221 = vmul.f32 %v1211, %v1211
    %v1222 = vmul.f32 %v1212, %v1212
    %v1223 = vsub.f32 %v1219, %v1221
    %v1224 = vsub.f32 %v1220, %v1222
    %v1225 = vsub.f32 %v1205, %v1211
    %v1226 = vsub.f32 %v1206, %v1212
    %v1227 = vadd.f32 %v1223, 1e-12
    %v1228 = vadd.f32 %v1224, 1e-12
    %v1229 = vrsqrt.pop %v1227
    %v1230 = vrsqrt.pop %v1228
    %v1231 = vmul.f32 %v1225, %v1229
    %v1232 = vmul.f32 %v1226, %v1230
    %v1234 = vlaneseq
    %v1235 = vshrl.u32 %v1234, 7
    %v1236 = vsub.s32 0, %v1235
    %v1237 = vrot.slane %v586, %v1236
    %v1239 = vmul.f32 %v1231, %v1237
    %v1240 = vmul.f32 %v1232, %v1237
    %v1242 = vlaneseq
    %v1243 = vshrl.u32 %v1242, 7
    %v1244 = vsub.s32 0, %v1243
    %v1245 = vrot.slane %v587, %v1244
    %v1247 = vadd.f32 %v1239, %v1245
    %v1248 = vadd.f32 %v1240, %v1245
    %s1249 = scalar_lea.vmem %s9, 64
    %v1250 = vld [vmem:[%s1249] sm:$0xf]
    %v1251 = vld [vmem:[%s1249 + $0x4] sm:$0xf]
    %v1252 = vld [vmem:[%s1249 + $0x8] sm:$0xf]
    %v1253 = vld [vmem:[%s1249 + $0xc] sm:$0xf]
    %v1254 = vld [vmem:[%s1249 + $0x10] sm:$0xf]
    %v1255 = vld [vmem:[%s1249 + $0x14] sm:$0xf]
    %v1256 = vld [vmem:[%s1249 + $0x18] sm:$0xf]
    %v1257 = vld [vmem:[%s1249 + $0x1c] sm:$0xf]
    %v1258 = vld [vmem:[%s1249 + $0x20] sm:$0xf]
    %v1259 = vld [vmem:[%s1249 + $0x24] sm:$0xf]
    %v1260 = vld [vmem:[%s1249 + $0x28] sm:$0xf]
    %v1261 = vld [vmem:[%s1249 + $0x2c] sm:$0xf]
    %v1262 = vld [vmem:[%s1249 + $0x30] sm:$0xf]
    %v1263 = vld [vmem:[%s1249 + $0x34] sm:$0xf]
    %v1264 = vld [vmem:[%s1249 + $0x38] sm:$0xf]
    %v1265 = vld [vmem:[%s1249 + $0x3c] sm:$0xf]
    %s1266 = scalar_lea.vmem [#allocation5], 1
    %v1267 = vld [vmem:[%s1266] sm:$0x1]
    %s1268 = scalar_lea.vmem [#allocation7], 16
    %v1269 = vld [vmem:[%s1268] sm:$0xf]
    %v1270 = vld [vmem:[%s1268 + $0x4] sm:$0xf]
    %v1271 = vld [vmem:[%s1268 + $0x8] sm:$0xf]
    %v1272 = vld [vmem:[%s1268 + $0xc] sm:$0xf]
    %s1273 = scalar_lea.vmem [#allocation8], 1
    %v1274 = vld [vmem:[%s1273] sm:$0x1]
    %s1275 = scalar_lea.vmem [#allocation10], 1
    %v1276 = vld [vmem:[%s1275] sm:$0x1]
    %s1277 = scalar_lea.vmem [#allocation11], 1
    %v1278 = vld [vmem:[%s1277] sm:$0x1]
    %s1279 = scalar_lea.vmem %s21, 64
    %v1280 = vld [vmem:[%s1279] sm:$0xf]
    %v1281 = vld [vmem:[%s1279 + $0x4] sm:$0xf]
    %v1282 = vld [vmem:[%s1279 + $0x8] sm:$0xf]
    %v1283 = vld [vmem:[%s1279 + $0xc] sm:$0xf]
    %v1284 = vld [vmem:[%s1279 + $0x10] sm:$0xf]
    %v1285 = vld [vmem:[%s1279 + $0x14] sm:$0xf]
    %v1286 = vld [vmem:[%s1279 + $0x18] sm:$0xf]
    %v1287 = vld [vmem:[%s1279 + $0x1c] sm:$0xf]
    %v1288 = vld [vmem:[%s1279 + $0x20] sm:$0xf]
    %v1289 = vld [vmem:[%s1279 + $0x24] sm:$0xf]
    %v1290 = vld [vmem:[%s1279 + $0x28] sm:$0xf]
    %v1291 = vld [vmem:[%s1279 + $0x2c] sm:$0xf]
    %v1292 = vld [vmem:[%s1279 + $0x30] sm:$0xf]
    %v1293 = vld [vmem:[%s1279 + $0x34] sm:$0xf]
    %v1294 = vld [vmem:[%s1279 + $0x38] sm:$0xf]
    %v1295 = vld [vmem:[%s1279 + $0x3c] sm:$0xf]
    %s1296 = scalar_lea.vmem [#allocation13], 1
    %v1297 = vld [vmem:[%s1296] sm:$0x1]
    %s1298 = scalar_lea.vmem %s25, 64
    %v1299 = vld [vmem:[%s1298] sm:$0xf]
    %v1300 = vld [vmem:[%s1298 + $0x4] sm:$0xf]
    %v1301 = vld [vmem:[%s1298 + $0x8] sm:$0xf]
    %v1302 = vld [vmem:[%s1298 + $0xc] sm:$0xf]
    %v1303 = vld [vmem:[%s1298 + $0x10] sm:$0xf]
    %v1304 = vld [vmem:[%s1298 + $0x14] sm:$0xf]
    %v1305 = vld [vmem:[%s1298 + $0x18] sm:$0xf]
    %v1306 = vld [vmem:[%s1298 + $0x1c] sm:$0xf]
    %v1307 = vld [vmem:[%s1298 + $0x20] sm:$0xf]
    %v1308 = vld [vmem:[%s1298 + $0x24] sm:$0xf]
    %v1309 = vld [vmem:[%s1298 + $0x28] sm:$0xf]
    %v1310 = vld [vmem:[%s1298 + $0x2c] sm:$0xf]
    %v1311 = vld [vmem:[%s1298 + $0x30] sm:$0xf]
    %v1312 = vld [vmem:[%s1298 + $0x34] sm:$0xf]
    %v1313 = vld [vmem:[%s1298 + $0x38] sm:$0xf]
    %v1314 = vld [vmem:[%s1298 + $0x3c] sm:$0xf]
    %s1315 = scalar_lea.vmem [#allocation14], 1
    %v1316 = vld [vmem:[%s1315] sm:$0x1]
    %s1317 = scalar_lea.vmem [#allocation16], 1
    %v1318 = vld [vmem:[%s1317] sm:$0x1]
    %s1319 = scalar_lea.vmem [#allocation17], 1
    %v1320 = vld [vmem:[%s1319] sm:$0x1]
    %v1321 = vpack.c.bf16 %v1248, %v1247
    %v1323 = vlaneseq
    %v1324 = vshrl.u32 %v1323, 7
    %v1325 = vsub.s32 0, %v1324
    %v1326 = vrot.slane %v1267, %v1325
    %v1344 = vunpack.c.l.b16 %v1250
    %v1345 = vunpack.c.l.b16 %v1251
    %v1346 = vunpack.c.l.b16 %v1252
    %v1347 = vunpack.c.l.b16 %v1253
    %v1348 = vunpack.c.l.b16 %v1254
    %v1349 = vunpack.c.l.b16 %v1255
    %v1350 = vunpack.c.l.b16 %v1256
    %v1351 = vunpack.c.l.b16 %v1257
    %v1352 = vunpack.c.l.b16 %v1258
    %v1353 = vunpack.c.l.b16 %v1259
    %v1354 = vunpack.c.l.b16 %v1260
    %v1355 = vunpack.c.l.b16 %v1261
    %v1356 = vunpack.c.l.b16 %v1262
    %v1357 = vunpack.c.l.b16 %v1263
    %v1358 = vunpack.c.l.b16 %v1264
    %v1359 = vunpack.c.l.b16 %v1265
    %v1360 = vpack.c.b16 %v1345, %v1344
    %v1361 = vpack.c.b16 %v1347, %v1346
    %v1362 = vpack.c.b16 %v1349, %v1348
    %v1363 = vpack.c.b16 %v1351, %v1350
    %v1364 = vpack.c.b16 %v1353, %v1352
    %v1365 = vpack.c.b16 %v1355, %v1354
    %v1366 = vpack.c.b16 %v1357, %v1356
    %v1367 = vpack.c.b16 %v1359, %v1358
    %1376 = vmatprep.subr.bf16.mxu0 0
    %1377 = vmatpush1.bf16.msra.mxu0 %v1360
    %1378 = vmatprep.subr.bf16.mxu0 0
    %1379 = vmatpush1.bf16.msra.mxu0 %v1361
    %1380 = vmatprep.subr.bf16.mxu0 0
    %1381 = vmatpush1.bf16.msra.mxu0 %v1362
    %1382 = vmatprep.subr.bf16.mxu0 0
    %1383 = vmatpush1.bf16.msra.mxu0 %v1363
    %1384 = vmatprep.subr.bf16.mxu0 0
    %1385 = vmatpush1.bf16.msra.mxu0 %v1364
    %1386 = vmatprep.subr.bf16.mxu0 0
    %1387 = vmatpush1.bf16.msra.mxu0 %v1365
    %1388 = vmatprep.subr.bf16.mxu0 0
    %1389 = vmatpush1.bf16.msra.mxu0 %v1366
    %1390 = vmatprep.subr.bf16.mxu0 0
    %1391 = vmatpush1.bf16.msra.mxu0 %v1367
    %1392 = vmatprep.subr.bf16.mxu0 0
    %1393 = vmatpush1.bf16.msra.mxu0 0
    %1394 = vmatprep.subr.bf16.mxu0 0
    %1395 = vmatpush1.bf16.msra.mxu0 0
    %1396 = vmatprep.subr.bf16.mxu0 0
    %1397 = vmatpush1.bf16.msra.mxu0 0
    %1398 = vmatprep.subr.bf16.mxu0 0
    %1399 = vmatpush1.bf16.msra.mxu0 0
    %1400 = vmatprep.subr.bf16.mxu0 0
    %1401 = vmatpush1.bf16.msra.mxu0 0
    %1402 = vmatprep.subr.bf16.mxu0 0
    %1403 = vmatpush1.bf16.msra.mxu0 0
    %1404 = vmatprep.subr.bf16.mxu0 0
    %1405 = vmatpush1.bf16.msra.mxu0 0
    %1406 = vmatprep.subr.bf16.mxu0 0
    %1407 = vmatpush1.bf16.msra.mxu0 0
    %1408 = vmatprep.mubr.bf16.mxu0 0
    %1409 = vmatmul.mubr.bf16.gmra.mrb[0].mxu0 %v1321
    %v1410 = vpop.f32.mrb[0].mxu0
    %v1411 = vadd.f32 %v1326, %v1410
    %v1412 = vpop.f32.mrb[0].mxu0
    %v1413 = vpop.f32.mrb[0].mxu0
    %v1414 = vadd.f32 %v1326, %v1413
    %v1415 = vpop.f32.mrb[0].mxu0
    %1416 = vdwg.mxu0
    %1419 = vrot.lane.b32.xlu0 %v1411, 112
    %v1420 = vpop.permute.xlu0 %1419
    %1421 = vrot.lane.b32.xlu0 %v1414, 112
    %v1422 = vpop.permute.xlu0 %1421
    %v1425 = vpack.c.bf16 %v1414, %v1411
    %v1426 = vpack.c.bf16 %v1422, %v1420
    %1429 = vrot.lane.b32.xlu0 %v1425, 96
    %v1430 = vpop.permute.xlu0 %1429
    %1431 = vrot.lane.b32.xlu0 %v1426, 96
    %v1432 = vpop.permute.xlu0 %1431
    %v1434 = vsel %vm700, %v1425, 0
    %v1437 = vsel %vm700, %v1426, 0
    %v1440 = vsel %vm700, %v1430, 0
    %v1443 = vsel %vm700, %v1432, 0
    %1445 = vmatprep.subr.bf16.mxu0 0
    %1446 = vmatpush1.bf16.xpose.msra.mxu0 %v1440
    %1447 = vmatprep.subr.bf16.mxu0 0
    %1448 = vmatpush1.bf16.xpose.msra.mxu0 %v1443
    %1449 = vmatprep.subr.bf16.mxu0 0
    %1450 = vmatpush1.bf16.xpose.msra.mxu0 0
    %1451 = vmatprep.subr.bf16.mxu0 0
    %1452 = vmatpush1.bf16.xpose.msra.mxu0 0
    %1453 = vmatprep.subr.bf16.mxu0 0
    %1454 = vmatpush1.bf16.xpose.msra.mxu0 0
    %1455 = vmatprep.subr.bf16.mxu0 0
    %1456 = vmatpush1.bf16.xpose.msra.mxu0 0
    %1457 = vmatprep.subr.bf16.mxu0 0
    %1458 = vmatpush1.bf16.xpose.msra.mxu0 0
    %1459 = vmatprep.subr.bf16.mxu0 0
    %1460 = vmatpush1.bf16.xpose.msra.mxu0 0
    %1461 = vmatprep.subr.bf16.mxu0 0
    %1462 = vmatpush1.bf16.xpose.msra.mxu0 0
    %1463 = vmatprep.subr.bf16.mxu0 0
    %1464 = vmatpush1.bf16.xpose.msra.mxu0 0
    %1465 = vmatprep.subr.bf16.mxu0 0
    %1466 = vmatpush1.bf16.xpose.msra.mxu0 0
    %1467 = vmatprep.subr.bf16.mxu0 0
    %1468 = vmatpush1.bf16.xpose.msra.mxu0 0
    %1469 = vmatprep.subr.bf16.mxu0 0
    %1470 = vmatpush1.bf16.xpose.msra.mxu0 0
    %1471 = vmatprep.subr.bf16.mxu0 0
    %1472 = vmatpush1.bf16.xpose.msra.mxu0 0
    %1473 = vmatprep.subr.bf16.mxu0 0
    %1474 = vmatpush1.bf16.xpose.msra.mxu0 0
    %1475 = vmatprep.subr.bf16.mxu0 0
    %1476 = vmatpush1.bf16.xpose.msra.mxu0 0
    %1477 = vmatprep.mubr.bf16.mxu0 0
    %1478 = vmatmul.mubr.bf16.gmra.mrb[0].mxu0 %v1434
    %v1479 = vpop.f32.mrb[0].mxu0
    %v1480 = vadd.f32 0.0, %v1479
    %v1481 = vpop.f32.mrb[0].mxu0
    %v1482 = vpop.f32.mrb[0].mxu0
    %v1483 = vadd.f32 0.0, %v1482
    %v1484 = vpop.f32.mrb[0].mxu0
    %1485 = vmatprep.mubr.bf16.mxu0 0
    %1486 = vmatmul.mubr.bf16.gmra.mrb[0].mxu0 %v1437
    %v1487 = vpop.f32.mrb[0].mxu0
    %v1488 = vadd.f32 0.0, %v1487
    %v1489 = vpop.f32.mrb[0].mxu0
    %v1490 = vpop.f32.mrb[0].mxu0
    %v1491 = vadd.f32 0.0, %v1490
    %v1492 = vpop.f32.mrb[0].mxu0
    %1493 = vdwg.mxu0
    %v1494 = vmul.f32 %v1480, 0.25
    %v1495 = vmul.f32 %v1483, 0.25
    %v1496 = vmul.f32 %v1488, 0.25
    %v1497 = vmul.f32 %v1491, 0.25
    %v1498 = vadd.f32 %v1494, %v524
    %v1499 = vadd.f32 %v1495, %v525
    %v1500 = vadd.f32 %v1496, %v526
    %v1501 = vadd.f32 %v1497, %v527
    %v1502 = vsel %vm770, %v1498, -inf
    %1503 = vmax.xlane.f32.xlu0 %v1502
    %v1504 = vpop.xlane.xlu0 %1503
    %v1505 = vsel %vm770, %v1499, -inf
    %1506 = vmax.xlane.f32.xlu0 %v1505
    %v1507 = vpop.xlane.xlu0 %1506
    %v1508 = vsel %vm770, %v1500, -inf
    %1509 = vmax.xlane.f32.xlu0 %v1508
    %v1510 = vpop.xlane.xlu0 %1509
    %v1511 = vsel %vm770, %v1501, -inf
    %1512 = vmax.xlane.f32.xlu0 %v1511
    %v1513 = vpop.xlane.xlu0 %1512
    %v1514 = vsub.f32 %v1498, %v1504
    %v1515 = vsub.f32 %v1499, %v1507
    %v1516 = vsub.f32 %v1500, %v1510
    %v1517 = vsub.f32 %v1501, %v1513
    %v1518 = vmul.f32 %v1514, 1.442695
    %v1519 = vpow.pop %v1518
    %v1520 = vmul.f32 %v1515, 1.442695
    %v1521 = vpow.pop %v1520
    %v1522 = vmul.f32 %v1516, 1.442695
    %v1523 = vpow.pop %v1522
    %v1524 = vmul.f32 %v1517, 1.442695
    %v1525 = vpow.pop %v1524
    %v1526 = vsel %vm770, %v1519, 0.0
    %1527 = vadd.xlane.f32.xlu0 %v1526
    %v1528 = vpop.xlane.xlu0 %1527
    %v1529 = vsel %vm770, %v1521, 0.0
    %1530 = vadd.xlane.f32.xlu0 %v1529
    %v1531 = vpop.xlane.xlu0 %1530
    %v1532 = vsel %vm770, %v1523, 0.0
    %1533 = vadd.xlane.f32.xlu0 %v1532
    %v1534 = vpop.xlane.xlu0 %1533
    %v1535 = vsel %vm770, %v1525, 0.0
    %1536 = vadd.xlane.f32.xlu0 %v1535
    %v1537 = vpop.xlane.xlu0 %1536
    %v1538 = vrcp.pop %v1528
    %v1539 = vrcp.pop %v1531
    %v1540 = vrcp.pop %v1534
    %v1541 = vrcp.pop %v1537
    %v1542 = vmul.f32 %v1519, %v1538
    %v1543 = vmul.f32 %v1521, %v1539
    %v1544 = vmul.f32 %v1523, %v1540
    %v1545 = vmul.f32 %v1525, %v1541
    %v1546 = vpack.c.bf16 %v1543, %v1542
    %v1547 = vpack.c.bf16 %v1545, %v1544
    %1548 = vrot.lane.b32.xlu0 %v1425, 64
    %v1549 = vpop.permute.xlu0 %1548
    %1550 = vrot.lane.b32.xlu0 %v1426, 64
    %v1551 = vpop.permute.xlu0 %1550
    %v1555 = vsel %vm770, %v1546, 0
    %v1558 = vsel %vm770, %v1547, 0
    %1560 = vmatprep.subr.bf16.mxu0 0
    %1561 = vmatpush1.bf16.msra.mxu0 %v1549
    %1562 = vmatprep.subr.bf16.mxu0 0
    %1563 = vmatpush1.bf16.msra.mxu0 %v1551
    %1564 = vmatprep.subr.bf16.mxu0 0
    %1565 = vmatpush1.bf16.msra.mxu0 0
    %1566 = vmatprep.subr.bf16.mxu0 0
    %1567 = vmatpush1.bf16.msra.mxu0 0
    %1568 = vmatprep.subr.bf16.mxu0 0
    %1569 = vmatpush1.bf16.msra.mxu0 0
    %1570 = vmatprep.subr.bf16.mxu0 0
    %1571 = vmatpush1.bf16.msra.mxu0 0
    %1572 = vmatprep.subr.bf16.mxu0 0
    %1573 = vmatpush1.bf16.msra.mxu0 0
    %1574 = vmatprep.subr.bf16.mxu0 0
    %1575 = vmatpush1.bf16.msra.mxu0 0
    %1576 = vmatprep.subr.bf16.mxu0 0
    %1577 = vmatpush1.bf16.msra.mxu0 0
    %1578 = vmatprep.subr.bf16.mxu0 0
    %1579 = vmatpush1.bf16.msra.mxu0 0
    %1580 = vmatprep.subr.bf16.mxu0 0
    %1581 = vmatpush1.bf16.msra.mxu0 0
    %1582 = vmatprep.subr.bf16.mxu0 0
    %1583 = vmatpush1.bf16.msra.mxu0 0
    %1584 = vmatprep.subr.bf16.mxu0 0
    %1585 = vmatpush1.bf16.msra.mxu0 0
    %1586 = vmatprep.subr.bf16.mxu0 0
    %1587 = vmatpush1.bf16.msra.mxu0 0
    %1588 = vmatprep.subr.bf16.mxu0 0
    %1589 = vmatpush1.bf16.msra.mxu0 0
    %1590 = vmatprep.subr.bf16.mxu0 0
    %1591 = vmatpush1.bf16.msra.mxu0 0
    %1592 = vmatprep.mubr.bf16.mxu0 0
    %1593 = vmatmul.mubr.bf16.gmra.mrb[0].mxu0 %v1555
    %v1594 = vpop.f32.mrb[0].mxu0
    %v1595 = vadd.f32 0.0, %v1594
    %v1596 = vpop.f32.mrb[0].mxu0
    %v1597 = vpop.f32.mrb[0].mxu0
    %v1598 = vadd.f32 0.0, %v1597
    %v1599 = vpop.f32.mrb[0].mxu0
    %1600 = vmatprep.mubr.bf16.mxu0 0
    %1601 = vmatmul.mubr.bf16.gmra.mrb[0].mxu0 %v1558
    %v1602 = vpop.f32.mrb[0].mxu0
    %v1603 = vadd.f32 0.0, %v1602
    %v1604 = vpop.f32.mrb[0].mxu0
    %v1605 = vpop.f32.mrb[0].mxu0
    %v1606 = vadd.f32 0.0, %v1605
    %v1607 = vpop.f32.mrb[0].mxu0
    %1608 = vdwg.mxu0
    %1611 = vrot.lane.b32.xlu0 %v1603, 16
    %v1612 = vpop.permute.xlu0 %1611
    %1613 = vrot.lane.b32.xlu0 %v1606, 16
    %v1614 = vpop.permute.xlu0 %1613
    %v1617 = vsel %vm700, %v1595, %v1612
    %v1618 = vsel %vm700, %v1598, %v1614
    %v1619 = vpack.c.bf16 %v1618, %v1617
    %v1621 = vlaneseq
    %v1622 = vshrl.u32 %v1621, 7
    %v1623 = vsub.s32 0, %v1622
    %v1624 = vrot.slane %v1274, %v1623
    %v1630 = vunpack.c.l.b16 %v1269
    %v1631 = vunpack.c.l.b16 %v1270
    %v1632 = vunpack.c.l.b16 %v1271
    %v1633 = vunpack.c.l.b16 %v1272
    %v1634 = vpack.c.b16 %v1631, %v1630
    %v1635 = vpack.c.b16 %v1633, %v1632
    %v1639 = vsel %vm770, %v1619, 0
    %1641 = vmatprep.subr.bf16.mxu0 0
    %1642 = vmatpush1.bf16.msra.mxu0 %v1634
    %1643 = vmatprep.subr.bf16.mxu0 0
    %1644 = vmatpush1.bf16.msra.mxu0 %v1635
    %1645 = vmatprep.subr.bf16.mxu0 0
    %1646 = vmatpush1.bf16.msra.mxu0 0
    %1647 = vmatprep.subr.bf16.mxu0 0
    %1648 = vmatpush1.bf16.msra.mxu0 0
    %1649 = vmatprep.subr.bf16.mxu0 0
    %1650 = vmatpush1.bf16.msra.mxu0 0
    %1651 = vmatprep.subr.bf16.mxu0 0
    %1652 = vmatpush1.bf16.msra.mxu0 0
    %1653 = vmatprep.subr.bf16.mxu0 0
    %1654 = vmatpush1.bf16.msra.mxu0 0
    %1655 = vmatprep.subr.bf16.mxu0 0
    %1656 = vmatpush1.bf16.msra.mxu0 0
    %1657 = vmatprep.subr.bf16.mxu0 0
    %1658 = vmatpush1.bf16.msra.mxu0 0
    %1659 = vmatprep.subr.bf16.mxu0 0
    %1660 = vmatpush1.bf16.msra.mxu0 0
    %1661 = vmatprep.subr.bf16.mxu0 0
    %1662 = vmatpush1.bf16.msra.mxu0 0
    %1663 = vmatprep.subr.bf16.mxu0 0
    %1664 = vmatpush1.bf16.msra.mxu0 0
    %1665 = vmatprep.subr.bf16.mxu0 0
    %1666 = vmatpush1.bf16.msra.mxu0 0
    %1667 = vmatprep.subr.bf16.mxu0 0
    %1668 = vmatpush1.bf16.msra.mxu0 0
    %1669 = vmatprep.subr.bf16.mxu0 0
    %1670 = vmatpush1.bf16.msra.mxu0 0
    %1671 = vmatprep.subr.bf16.mxu0 0
    %1672 = vmatpush1.bf16.msra.mxu0 0
    %1673 = vmatprep.mubr.bf16.mxu0 0
    %1674 = vmatmul.mubr.bf16.gmra.mrb[0].mxu0 %v1639
    %v1675 = vpop.f32.mrb[0].mxu0
    %v1676 = vadd.f32 %v1624, %v1675
    %v1677 = vpop.f32.mrb[0].mxu0
    %v1678 = vpop.f32.mrb[0].mxu0
    %v1679 = vadd.f32 %v1624, %v1678
    %v1680 = vpop.f32.mrb[0].mxu0
    %1681 = vdwg.mxu0
    %v1682 = vadd.f32 %v1247, %v1676
    %v1683 = vadd.f32 %v1248, %v1679
    %1684 = vadd.xlane.f32.xlu0 %v1682
    %v1685 = vpop.xlane.xlu0 %1684
    %1686 = vadd.xlane.f32.xlu0 %v1683
    %v1687 = vpop.xlane.xlu0 %1686
    %v1688 = vmul.f32 %v1685, 0.03125
    %v1689 = vmul.f32 %v1687, 0.03125
    %v1690 = vmul.f32 %v1682, %v1682
    %v1691 = vmul.f32 %v1683, %v1683
    %1692 = vadd.xlane.f32.xlu0 %v1690
    %v1693 = vpop.xlane.xlu0 %1692
    %1694 = vadd.xlane.f32.xlu0 %v1691
    %v1695 = vpop.xlane.xlu0 %1694
    %v1696 = vmul.f32 %v1693, 0.03125
    %v1697 = vmul.f32 %v1695, 0.03125
    %v1698 = vmul.f32 %v1688, %v1688
    %v1699 = vmul.f32 %v1689, %v1689
    %v1700 = vsub.f32 %v1696, %v1698
    %v1701 = vsub.f32 %v1697, %v1699
    %v1702 = vsub.f32 %v1682, %v1688
    %v1703 = vsub.f32 %v1683, %v1689
    %v1704 = vadd.f32 %v1700, 1e-12
    %v1705 = vadd.f32 %v1701, 1e-12
    %v1706 = vrsqrt.pop %v1704
    %v1707 = vrsqrt.pop %v1705
    %v1708 = vmul.f32 %v1702, %v1706
    %v1709 = vmul.f32 %v1703, %v1707
    %v1711 = vlaneseq
    %v1712 = vshrl.u32 %v1711, 7
    %v1713 = vsub.s32 0, %v1712
    %v1714 = vrot.slane %v1276, %v1713
    %v1716 = vmul.f32 %v1708, %v1714
    %v1717 = vmul.f32 %v1709, %v1714
    %v1719 = vlaneseq
    %v1720 = vshrl.u32 %v1719, 7
    %v1721 = vsub.s32 0, %v1720
    %v1722 = vrot.slane %v1278, %v1721
    %v1724 = vadd.f32 %v1716, %v1722
    %v1725 = vadd.f32 %v1717, %v1722
    %v1726 = vpack.c.bf16 %v1725, %v1724
    %v1728 = vlaneseq
    %v1729 = vshrl.u32 %v1728, 7
    %v1730 = vsub.s32 0, %v1729
    %v1731 = vrot.slane %v1297, %v1730
    %v1749 = vunpack.c.l.b16 %v1280
    %v1750 = vunpack.c.l.b16 %v1281
    %v1751 = vunpack.c.l.b16 %v1282
    %v1752 = vunpack.c.l.b16 %v1283
    %v1753 = vunpack.c.l.b16 %v1284
    %v1754 = vunpack.c.l.b16 %v1285
    %v1755 = vunpack.c.l.b16 %v1286
    %v1756 = vunpack.c.l.b16 %v1287
    %v1757 = vunpack.c.l.b16 %v1288
    %v1758 = vunpack.c.l.b16 %v1289
    %v1759 = vunpack.c.l.b16 %v1290
    %v1760 = vunpack.c.l.b16 %v1291
    %v1761 = vunpack.c.l.b16 %v1292
    %v1762 = vunpack.c.l.b16 %v1293
    %v1763 = vunpack.c.l.b16 %v1294
    %v1764 = vunpack.c.l.b16 %v1295
    %v1765 = vpack.c.b16 %v1750, %v1749
    %v1766 = vpack.c.b16 %v1752, %v1751
    %v1767 = vpack.c.b16 %v1754, %v1753
    %v1768 = vpack.c.b16 %v1756, %v1755
    %v1769 = vpack.c.b16 %v1758, %v1757
    %v1770 = vpack.c.b16 %v1760, %v1759
    %v1771 = vpack.c.b16 %v1762, %v1761
    %v1772 = vpack.c.b16 %v1764, %v1763
    %1781 = vmatprep.subr.bf16.mxu0 0
    %1782 = vmatpush1.bf16.msra.mxu0 %v1765
    %1783 = vmatprep.subr.bf16.mxu0 0
    %1784 = vmatpush1.bf16.msra.mxu0 %v1766
    %1785 = vmatprep.subr.bf16.mxu0 0
    %1786 = vmatpush1.bf16.msra.mxu0 %v1767
    %1787 = vmatprep.subr.bf16.mxu0 0
    %1788 = vmatpush1.bf16.msra.mxu0 %v1768
    %1789 = vmatprep.subr.bf16.mxu0 0
    %1790 = vmatpush1.bf16.msra.mxu0 %v1769
    %1791 = vmatprep.subr.bf16.mxu0 0
    %1792 = vmatpush1.bf16.msra.mxu0 %v1770
    %1793 = vmatprep.subr.bf16.mxu0 0
    %1794 = vmatpush1.bf16.msra.mxu0 %v1771
    %1795 = vmatprep.subr.bf16.mxu0 0
    %1796 = vmatpush1.bf16.msra.mxu0 %v1772
    %1797 = vmatprep.subr.bf16.mxu0 0
    %1798 = vmatpush1.bf16.msra.mxu0 0
    %1799 = vmatprep.subr.bf16.mxu0 0
    %1800 = vmatpush1.bf16.msra.mxu0 0
    %1801 = vmatprep.subr.bf16.mxu0 0
    %1802 = vmatpush1.bf16.msra.mxu0 0
    %1803 = vmatprep.subr.bf16.mxu0 0
    %1804 = vmatpush1.bf16.msra.mxu0 0
    %1805 = vmatprep.subr.bf16.mxu0 0
    %1806 = vmatpush1.bf16.msra.mxu0 0
    %1807 = vmatprep.subr.bf16.mxu0 0
    %1808 = vmatpush1.bf16.msra.mxu0 0
    %1809 = vmatprep.subr.bf16.mxu0 0
    %1810 = vmatpush1.bf16.msra.mxu0 0
    %1811 = vmatprep.subr.bf16.mxu0 0
    %1812 = vmatpush1.bf16.msra.mxu0 0
    %1813 = vmatprep.mubr.bf16.mxu0 0
    %1814 = vmatmul.mubr.bf16.gmra.mrb[0].mxu0 %v1726
    %v1815 = vpop.f32.mrb[0].mxu0
    %v1816 = vadd.f32 %v1731, %v1815
    %v1817 = vpop.f32.mrb[0].mxu0
    %v1818 = vpop.f32.mrb[0].mxu0
    %v1819 = vadd.f32 %v1731, %v1818
    %v1820 = vpop.f32.mrb[0].mxu0
    %1821 = vdwg.mxu0
    %v1822 = vmul.f32 %v1816, 0.5
    %v1823 = vmul.f32 %v1819, 0.5
    %v1824 = vmul.f32 %v1816, 0.044715
    %v1825 = vmul.f32 %v1819, 0.044715
    %v1826 = vmul.f32 %v1824, %v1816
    %v1827 = vmul.f32 %v1825, %v1819
    %v1828 = vmul.f32 %v1826, %v1816
    %v1829 = vmul.f32 %v1827, %v1819
    %v1830 = vadd.f32 %v1816, %v1828
    %v1831 = vadd.f32 %v1819, %v1829
    %v1832 = vmul.f32 %v1830, 0.7978846
    %v1833 = vmul.f32 %v1831, 0.7978846
    %v1834 = vtanh.pop %v1832
    %v1835 = vtanh.pop %v1833
    %v1836 = vadd.f32 %v1834, 1.0
    %v1837 = vadd.f32 %v1835, 1.0
    %v1838 = vmul.f32 %v1822, %v1836
    %v1839 = vmul.f32 %v1823, %v1837
    %v1840 = vpack.c.bf16 %v1839, %v1838
    %v1842 = vlaneseq
    %v1843 = vshrl.u32 %v1842, 7
    %v1844 = vsub.s32 0, %v1843
    %v1845 = vrot.slane %v1316, %v1844
    %v1863 = vunpack.c.l.b16 %v1299
    %v1864 = vunpack.c.l.b16 %v1300
    %v1865 = vunpack.c.l.b16 %v1301
    %v1866 = vunpack.c.l.b16 %v1302
    %v1867 = vunpack.c.l.b16 %v1303
    %v1868 = vunpack.c.l.b16 %v1304
    %v1869 = vunpack.c.l.b16 %v1305
    %v1870 = vunpack.c.l.b16 %v1306
    %v1871 = vunpack.c.l.b16 %v1307
    %v1872 = vunpack.c.l.b16 %v1308
    %v1873 = vunpack.c.l.b16 %v1309
    %v1874 = vunpack.c.l.b16 %v1310
    %v1875 = vunpack.c.l.b16 %v1311
    %v1876 = vunpack.c.l.b16 %v1312
    %v1877 = vunpack.c.l.b16 %v1313
    %v1878 = vunpack.c.l.b16 %v1314
    %v1879 = vpack.c.b16 %v1864, %v1863
    %v1880 = vpack.c.b16 %v1866, %v1865
    %v1881 = vpack.c.b16 %v1868, %v1867
    %v1882 = vpack.c.b16 %v1870, %v1869
    %v1883 = vpack.c.b16 %v1872, %v1871
    %v1884 = vpack.c.b16 %v1874, %v1873
    %v1885 = vpack.c.b16 %v1876, %v1875
    %v1886 = vpack.c.b16 %v1878, %v1877
    %1895 = vmatprep.subr.bf16.mxu0 0
    %1896 = vmatpush1.bf16.msra.mxu0 %v1879
    %1897 = vmatprep.subr.bf16.mxu0 0
    %1898 = vmatpush1.bf16.msra.mxu0 %v1880
    %1899 = vmatprep.subr.bf16.mxu0 0
    %1900 = vmatpush1.bf16.msra.mxu0 %v1881
    %1901 = vmatprep.subr.bf16.mxu0 0
    %1902 = vmatpush1.bf16.msra.mxu0 %v1882
    %1903 = vmatprep.subr.bf16.mxu0 0
    %1904 = vmatpush1.bf16.msra.mxu0 %v1883
    %1905 = vmatprep.subr.bf16.mxu0 0
    %1906 = vmatpush1.bf16.msra.mxu0 %v1884
    %1907 = vmatprep.subr.bf16.mxu0 0
    %1908 = vmatpush1.bf16.msra.mxu0 %v1885
    %1909 = vmatprep.subr.bf16.mxu0 0
    %1910 = vmatpush1.bf16.msra.mxu0 %v1886
    %1911 = vmatprep.subr.bf16.mxu0 0
    %1912 = vmatpush1.bf16.msra.mxu0 0
    %1913 = vmatprep.subr.bf16.mxu0 0
    %1914 = vmatpush1.bf16.msra.mxu0 0
    %1915 = vmatprep.subr.bf16.mxu0 0
    %1916 = vmatpush1.bf16.msra.mxu0 0
    %1917 = vmatprep.subr.bf16.mxu0 0
    %1918 = vmatpush1.bf16.msra.mxu0 0
    %1919 = vmatprep.subr.bf16.mxu0 0
    %1920 = vmatpush1.bf16.msra.mxu0 0
    %1921 = vmatprep.subr.bf16.mxu0 0
    %1922 = vmatpush1.bf16.msra.mxu0 0
    %1923 = vmatprep.subr.bf16.mxu0 0
    %1924 = vmatpush1.bf16.msra.mxu0 0
    %1925 = vmatprep.subr.bf16.mxu0 0
    %1926 = vmatpush1.bf16.msra.mxu0 0
    %1927 = vmatprep.mubr.bf16.mxu0 0
    %1928 = vmatmul.mubr.bf16.gmra.mrb[0].mxu0 %v1840
    %v1929 = vpop.f32.mrb[0].mxu0
    %v1930 = vadd.f32 %v1845, %v1929
    %v1931 = vpop.f32.mrb[0].mxu0
    %v1932 = vpop.f32.mrb[0].mxu0
    %v1933 = vadd.f32 %v1845, %v1932
    %v1934 = vpop.f32.mrb[0].mxu0
    %1935 = vdwg.mxu0
    %v1936 = vadd.f32 %v1724, %v1930
    %v1937 = vadd.f32 %v1725, %v1933
    %1938 = vadd.xlane.f32.xlu0 %v1936
    %v1939 = vpop.xlane.xlu0 %1938
    %1940 = vadd.xlane.f32.xlu0 %v1937
    %v1941 = vpop.xlane.xlu0 %1940
    %v1942 = vmul.f32 %v1939, 0.03125
    %v1943 = vmul.f32 %v1941, 0.03125
    %v1944 = vmul.f32 %v1936, %v1936
    %v1945 = vmul.f32 %v1937, %v1937
    %1946 = vadd.xlane.f32.xlu0 %v1944
    %v1947 = vpop.xlane.xlu0 %1946
    %1948 = vadd.xlane.f32.xlu0 %v1945
    %v1949 = vpop.xlane.xlu0 %1948
    %v1950 = vmul.f32 %v1947, 0.03125
    %v1951 = vmul.f32 %v1949, 0.03125
    %v1952 = vmul.f32 %v1942, %v1942
    %v1953 = vmul.f32 %v1943, %v1943
    %v1954 = vsub.f32 %v1950, %v1952
    %v1955 = vsub.f32 %v1951, %v1953
    %v1956 = vsub.f32 %v1936, %v1942
    %v1957 = vsub.f32 %v1937, %v1943
    %v1958 = vadd.f32 %v1954, 1e-12
    %v1959 = vadd.f32 %v1955, 1e-12
    %v1960 = vrsqrt.pop %v1958
    %v1961 = vrsqrt.pop %v1959
    %v1962 = vmul.f32 %v1956, %v1960
    %v1963 = vmul.f32 %v1957, %v1961
    %v1965 = vlaneseq
    %v1966 = vshrl.u32 %v1965, 7
    %v1967 = vsub.s32 0, %v1966
    %v1968 = vrot.slane %v1318, %v1967
    %v1970 = vmul.f32 %v1962, %v1968
    %v1971 = vmul.f32 %v1963, %v1968
    %v1973 = vlaneseq
    %v1974 = vshrl.u32 %v1973, 7
    %v1975 = vsub.s32 0, %v1974
    %v1976 = vrot.slane %v1320, %v1975
    %v1978 = vadd.f32 %v1970, %v1976
    %v1979 = vadd.f32 %v1971, %v1976
    %v1981 = vrot.slane %v1979, 7
    %vm1983 = vcmask 1040384
    %v1984 = vsel %vm1983, %v1978, %v1981
    %v1985 = vpack.c.bf16 %v1984, %v1984
    %v1986 = vld [vmem:[%s33] sm:$0xf]
    %v1987 = vld [vmem:[%s33 + $0x4] sm:$0xf]
    %v1988 = vld [vmem:[%s33 + $0x8] sm:$0xf]
    %v1989 = vld [vmem:[%s33 + $0xc] sm:$0xf]
    %v1990 = vld [vmem:[%s33 + $0x10] sm:$0xf]
    %v1991 = vld [vmem:[%s33 + $0x14] sm:$0xf]
    %v1992 = vld [vmem:[%s33 + $0x18] sm:$0xf]
    %v1993 = vld [vmem:[%s33 + $0x1c] sm:$0xf]
    %v1994 = vld [vmem:[%s33 + $0x20] sm:$0xf]
    %v1995 = vld [vmem:[%s33 + $0x24] sm:$0xf]
    %v1996 = vld [vmem:[%s33 + $0x28] sm:$0xf]
    %v1997 = vld [vmem:[%s33 + $0x2c] sm:$0xf]
    %v1998 = vld [vmem:[%s33 + $0x30] sm:$0xf]
    %v1999 = vld [vmem:[%s33 + $0x34] sm:$0xf]
    %v2000 = vld [vmem:[%s33 + $0x38] sm:$0xf]
    %v2001 = vld [vmem:[%s33 + $0x3c] sm:$0xf]
    %v2002 = vld [vmem:[#allocation19] sm:$0x1]
    %v2004 = vlaneseq
    %v2005 = vshrl.u32 %v2004, 7
    %v2006 = vsub.s32 0, %v2005
    %v2007 = vrot.slane %v2002, %v2006
    %v2025 = vunpack.c.l.b16 %v1986
    %v2026 = vunpack.c.l.b16 %v1987
    %v2027 = vunpack.c.l.b16 %v1988
    %v2028 = vunpack.c.l.b16 %v1989
    %v2029 = vunpack.c.l.b16 %v1990
    %v2030 = vunpack.c.l.b16 %v1991
    %v2031 = vunpack.c.l.b16 %v1992
    %v2032 = vunpack.c.l.b16 %v1993
    %v2033 = vunpack.c.l.b16 %v1994
    %v2034 = vunpack.c.l.b16 %v1995
    %v2035 = vunpack.c.l.b16 %v1996
    %v2036 = vunpack.c.l.b16 %v1997
    %v2037 = vunpack.c.l.b16 %v1998
    %v2038 = vunpack.c.l.b16 %v1999
    %v2039 = vunpack.c.l.b16 %v2000
    %v2040 = vunpack.c.l.b16 %v2001
    %v2041 = vpack.c.b16 %v2026, %v2025
    %v2042 = vpack.c.b16 %v2028, %v2027
    %v2043 = vpack.c.b16 %v2030, %v2029
    %v2044 = vpack.c.b16 %v2032, %v2031
    %v2045 = vpack.c.b16 %v2034, %v2033
    %v2046 = vpack.c.b16 %v2036, %v2035
    %v2047 = vpack.c.b16 %v2038, %v2037
    %v2048 = vpack.c.b16 %v2040, %v2039
    %2057 = vmatprep.subr.bf16.mxu0 0
    %2058 = vmatpush1.bf16.msra.mxu0 %v2041
    %2059 = vmatprep.subr.bf16.mxu0 0
    %2060 = vmatpush1.bf16.msra.mxu0 %v2042
    %2061 = vmatprep.subr.bf16.mxu0 0
    %2062 = vmatpush1.bf16.msra.mxu0 %v2043
    %2063 = vmatprep.subr.bf16.mxu0 0
    %2064 = vmatpush1.bf16.msra.mxu0 %v2044
    %2065 = vmatprep.subr.bf16.mxu0 0
    %2066 = vmatpush1.bf16.msra.mxu0 %v2045
    %2067 = vmatprep.subr.bf16.mxu0 0
    %2068 = vmatpush1.bf16.msra.mxu0 %v2046
    %2069 = vmatprep.subr.bf16.mxu0 0
    %2070 = vmatpush1.bf16.msra.mxu0 %v2047
    %2071 = vmatprep.subr.bf16.mxu0 0
    %2072 = vmatpush1.bf16.msra.mxu0 %v2048
    %2073 = vmatprep.subr.bf16.mxu0 0
    %2074 = vmatpush1.bf16.msra.mxu0 0
    %2075 = vmatprep.subr.bf16.mxu0 0
    %2076 = vmatpush1.bf16.msra.mxu0 0
    %2077 = vmatprep.subr.bf16.mxu0 0
    %2078 = vmatpush1.bf16.msra.mxu0 0
    %2079 = vmatprep.subr.bf16.mxu0 0
    %2080 = vmatpush1.bf16.msra.mxu0 0
    %2081 = vmatprep.subr.bf16.mxu0 0
    %2082 = vmatpush1.bf16.msra.mxu0 0
    %2083 = vmatprep.subr.bf16.mxu0 0
    %2084 = vmatpush1.bf16.msra.mxu0 0
    %2085 = vmatprep.subr.bf16.mxu0 0
    %2086 = vmatpush1.bf16.msra.mxu0 0
    %2087 = vmatprep.subr.bf16.mxu0 0
    %2088 = vmatpush1.bf16.msra.mxu0 0
    %2089 = vmatprep.mubr.bf16.mxu0 0
    %2090 = vmatmul.mubr.bf16.gmra.mrb[0].mxu0 %v1985
    %v2091 = vpop.f32.mrb[0].mxu0
    %v2092 = vadd.f32 %v2007, %v2091
    %v2093 = vpop.f32.mrb[0].mxu0
    %v2094 = vpop.f32.mrb[0].mxu0
    %v2095 = vpop.f32.mrb[0].mxu0
    %2096 = vdwg.mxu0
    %v2097 = vtanh.pop %v2092
    %v2098 = vld [vmem:[%s37] sm:$0xff]
    %v2099 = vld [vmem:[%s37 + $0x8] sm:$0xff]
    %v2100 = vld [vmem:[%s39] sm:$0xf]
    %v2101 = vld [vmem:[%s39 + $0x4] sm:$0xf]
    %v2102 = vld [vmem:[%s39 + $0x8] sm:$0xf]
    %v2103 = vld [vmem:[%s39 + $0xc] sm:$0xf]
    %v2104 = vld [vmem:[%s39 + $0x10] sm:$0xf]
    %v2105 = vld [vmem:[%s39 + $0x14] sm:$0xf]
    %v2106 = vld [vmem:[%s39 + $0x18] sm:$0xf]
    %v2107 = vld [vmem:[%s39 + $0x1c] sm:$0xf]
    %v2108 = vld [vmem:[%s39 + $0x20] sm:$0xf]
    %v2109 = vld [vmem:[%s39 + $0x24] sm:$0xf]
    %v2110 = vld [vmem:[%s39 + $0x28] sm:$0xf]
    %v2111 = vld [vmem:[%s39 + $0x2c] sm:$0xf]
    %v2112 = vld [vmem:[%s39 + $0x30] sm:$0xf]
    %v2113 = vld [vmem:[%s39 + $0x34] sm:$0xf]
    %v2114 = vld [vmem:[%s39 + $0x38] sm:$0xf]
    %v2115 = vld [vmem:[%s39 + $0x3c] sm:$0xf]
    %v2116 = vld [vmem:[%s39 + $0x40] sm:$0xf]
    %v2117 = vld [vmem:[%s39 + $0x44] sm:$0xf]
    %v2118 = vld [vmem:[%s39 + $0x48] sm:$0xf]
    %v2119 = vld [vmem:[%s39 + $0x4c] sm:$0xf]
    %v2120 = vld [vmem:[%s39 + $0x50] sm:$0xf]
    %v2121 = vld [vmem:[%s39 + $0x54] sm:$0xf]
    %v2122 = vld [vmem:[%s39 + $0x58] sm:$0xf]
    %v2123 = vld [vmem:[%s39 + $0x5c] sm:$0xf]
    %v2124 = vld [vmem:[%s39 + $0x60] sm:$0xf]
    %v2125 = vld [vmem:[%s39 + $0x64] sm:$0xf]
    %v2126 = vld [vmem:[%s39 + $0x68] sm:$0xf]
    %v2127 = vld [vmem:[%s39 + $0x6c] sm:$0xf]
    %v2128 = vld [vmem:[%s39 + $0x70] sm:$0xf]
    %v2129 = vld [vmem:[%s39 + $0x74] sm:$0xf]
    %v2130 = vld [vmem:[%s39 + $0x78] sm:$0xf]
    %v2131 = vld [vmem:[%s39 + $0x7c] sm:$0xf]
    %v2132 = vld [vmem:[%s41] sm:$0xff]
    %v2133 = vld [vmem:[%s41 + $0x8] sm:$0xff]
    %v2136 = vunpack.c.l.b16 %v2098
    %v2137 = vunpack.c.h.b16 %v2098
    %v2138 = vunpack.c.l.b16 %v2099
    %v2139 = vunpack.c.h.b16 %v2099
    %v2140 = vpack.c.b16 %v2138, %v2136
    %v2141 = vpack.c.b16 %v2139, %v2137
    %v2176 = vunpack.c.l.b16 %v2100
    %v2177 = vunpack.c.l.b16 %v2101
    %v2178 = vunpack.c.l.b16 %v2102
    %v2179 = vunpack.c.l.b16 %v2103
    %v2180 = vunpack.c.l.b16 %v2104
    %v2181 = vunpack.c.l.b16 %v2105
    %v2182 = vunpack.c.l.b16 %v2106
    %v2183 = vunpack.c.l.b16 %v2107
    %v2184 = vunpack.c.l.b16 %v2108
    %v2185 = vunpack.c.l.b16 %v2109
    %v2186 = vunpack.c.l.b16 %v2110
    %v2187 = vunpack.c.l.b16 %v2111
    %v2188 = vunpack.c.l.b16 %v2112
    %v2189 = vunpack.c.l.b16 %v2113
    %v2190 = vunpack.c.l.b16 %v2114
    %v2191 = vunpack.c.l.b16 %v2115
    %v2192 = vunpack.c.l.b16 %v2116
    %v2193 = vunpack.c.l.b16 %v2117
    %v2194 = vunpack.c.l.b16 %v2118
    %v2195 = vunpack.c.l.b16 %v2119
    %v2196 = vunpack.c.l.b16 %v2120
    %v2197 = vunpack.c.l.b16 %v2121
    %v2198 = vunpack.c.l.b16 %v2122
    %v2199 = vunpack.c.l.b16 %v2123
    %v2200 = vunpack.c.l.b16 %v2124
    %v2201 = vunpack.c.l.b16 %v2125
    %v2202 = vunpack.c.l.b16 %v2126
    %v2203 = vunpack.c.l.b16 %v2127
    %v2204 = vunpack.c.l.b16 %v2128
    %v2205 = vunpack.c.l.b16 %v2129
    %v2206 = vunpack.c.l.b16 %v2130
    %v2207 = vunpack.c.l.b16 %v2131
    %v2208 = vpack.c.b16 %v2177, %v2176
    %v2209 = vpack.c.b16 %v2179, %v2178
    %v2210 = vpack.c.b16 %v2181, %v2180
    %v2211 = vpack.c.b16 %v2183, %v2182
    %v2212 = vpack.c.b16 %v2185, %v2184
    %v2213 = vpack.c.b16 %v2187, %v2186
    %v2214 = vpack.c.b16 %v2189, %v2188
    %v2215 = vpack.c.b16 %v2191, %v2190
    %v2216 = vpack.c.b16 %v2193, %v2192
    %v2217 = vpack.c.b16 %v2195, %v2194
    %v2218 = vpack.c.b16 %v2197, %v2196
    %v2219 = vpack.c.b16 %v2199, %v2198
    %v2220 = vpack.c.b16 %v2201, %v2200
    %v2221 = vpack.c.b16 %v2203, %v2202
    %v2222 = vpack.c.b16 %v2205, %v2204
    %v2223 = vpack.c.b16 %v2207, %v2206
    %2240 = vmatprep.subr.bf16.mxu0 0
    %2241 = vmatpush1.bf16.msra.mxu0 %v2208
    %2242 = vmatprep.subr.bf16.mxu0 0
    %2243 = vmatpush1.bf16.msra.mxu0 %v2209
    %2244 = vmatprep.subr.bf16.mxu0 0
    %2245 = vmatpush1.bf16.msra.mxu0 %v2210
    %2246 = vmatprep.subr.bf16.mxu0 0
    %2247 = vmatpush1.bf16.msra.mxu0 %v2211
    %2248 = vmatprep.subr.bf16.mxu0 0
    %2249 = vmatpush1.bf16.msra.mxu0 %v2212
    %2250 = vmatprep.subr.bf16.mxu0 0
    %2251 = vmatpush1.bf16.msra.mxu0 %v2213
    %2252 = vmatprep.subr.bf16.mxu0 0
    %2253 = vmatpush1.bf16.msra.mxu0 %v2214
    %2254 = vmatprep.subr.bf16.mxu0 0
    %2255 = vmatpush1.bf16.msra.mxu0 %v2215
    %2256 = vmatprep.subr.bf16.mxu0 0
    %2257 = vmatpush1.bf16.msra.mxu0 %v2216
    %2258 = vmatprep.subr.bf16.mxu0 0
    %2259 = vmatpush1.bf16.msra.mxu0 %v2217
    %2260 = vmatprep.subr.bf16.mxu0 0
    %2261 = vmatpush1.bf16.msra.mxu0 %v2218
    %2262 = vmatprep.subr.bf16.mxu0 0
    %2263 = vmatpush1.bf16.msra.mxu0 %v2219
    %2264 = vmatprep.subr.bf16.mxu0 0
    %2265 = vmatpush1.bf16.msra.mxu0 %v2220
    %2266 = vmatprep.subr.bf16.mxu0 0
    %2267 = vmatpush1.bf16.msra.mxu0 %v2221
    %2268 = vmatprep.subr.bf16.mxu0 0
    %2269 = vmatpush1.bf16.msra.mxu0 %v2222
    %2270 = vmatprep.subr.bf16.mxu0 0
    %2271 = vmatpush1.bf16.msra.mxu0 %v2223
    %2272 = vmatprep.mubr.bf16.mxu0 %v2141
    %2273 = vmatmul.mubr.bf16.gmra.mrb[0].mxu0 %v2140
    %v2274 = vpop.f32.mrb[0].mxu0
    %v2275 = vadd.f32 %v2132, %v2274
    %v2276 = vpop.f32.mrb[0].mxu0
    %v2277 = vpop.f32.mrb[0].mxu0
    %v2278 = vadd.f32 %v2133, %v2277
    %v2279 = vpop.f32.mrb[0].mxu0
    %2280 = vdwg.mxu0
    %v2281 = vld [vmem:[%s43] sm:$0xff]
    %v2282 = vld [vmem:[%s43 + $0x8] sm:$0xff]
    %v2283 = vld [vmem:[%s43 + $0x10] sm:$0xff]
    %v2284 = vld [vmem:[%s43 + $0x18] sm:$0xff]
    %v2285 = vld [vmem:[%s45] sm:$0xf]
    %v2286 = vld [vmem:[%s45 + $0x4] sm:$0xf]
    %v2287 = vld [vmem:[%s45 + $0x8] sm:$0xf]
    %v2288 = vld [vmem:[%s45 + $0xc] sm:$0xf]
    %v2289 = vld [vmem:[%s45 + $0x10] sm:$0xf]
    %v2290 = vld [vmem:[%s45 + $0x14] sm:$0xf]
    %v2291 = vld [vmem:[%s45 + $0x18] sm:$0xf]
    %v2292 = vld [vmem:[%s45 + $0x1c] sm:$0xf]
    %v2293 = vld [vmem:[%s45 + $0x20] sm:$0xf]
    %v2294 = vld [vmem:[%s45 + $0x24] sm:$0xf]
    %v2295 = vld [vmem:[%s45 + $0x28] sm:$0xf]
    %v2296 = vld [vmem:[%s45 + $0x2c] sm:$0xf]
    %v2297 = vld [vmem:[%s45 + $0x30] sm:$0xf]
    %v2298 = vld [vmem:[%s45 + $0x34] sm:$0xf]
    %v2299 = vld [vmem:[%s45 + $0x38] sm:$0xf]
    %v2300 = vld [vmem:[%s45 + $0x3c] sm:$0xf]
    %v2301 = vld [vmem:[#allocation20] sm:$0x1]
    %v2302 = vld [vmem:[#allocation22] sm:$0xf]
    %v2303 = vld [vmem:[#allocation22 + $0x4] sm:$0xf]
    %v2304 = vld [vmem:[#allocation22 + $0x8] sm:$0xf]
    %v2305 = vld [vmem:[#allocation22 + $0xc] sm:$0xf]
    %v2306 = vld [vmem:[#allocation23] sm:$0x1]
    %v2307 = vld [vmem:[#allocation25] sm:$0x1]
    %v2308 = vld [vmem:[#allocation26] sm:$0x1]
    %v2309 = vld [vmem:[%s57] sm:$0xf]
    %v2310 = vld [vmem:[%s57 + $0x4] sm:$0xf]
    %v2311 = vld [vmem:[%s57 + $0x8] sm:$0xf]
    %v2312 = vld [vmem:[%s57 + $0xc] sm:$0xf]
    %v2313 = vld [vmem:[%s57 + $0x10] sm:$0xf]
    %v2314 = vld [vmem:[%s57 + $0x14] sm:$0xf]
    %v2315 = vld [vmem:[%s57 + $0x18] sm:$0xf]
    %v2316 = vld [vmem:[%s57 + $0x1c] sm:$0xf]
    %v2317 = vld [vmem:[%s57 + $0x20] sm:$0xf]
    %v2318 = vld [vmem:[%s57 + $0x24] sm:$0xf]
    %v2319 = vld [vmem:[%s57 + $0x28] sm:$0xf]
    %v2320 = vld [vmem:[%s57 + $0x2c] sm:$0xf]
    %v2321 = vld [vmem:[%s57 + $0x30] sm:$0xf]
    %v2322 = vld [vmem:[%s57 + $0x34] sm:$0xf]
    %v2323 = vld [vmem:[%s57 + $0x38] sm:$0xf]
    %v2324 = vld [vmem:[%s57 + $0x3c] sm:$0xf]
    %v2325 = vld [vmem:[#allocation28] sm:$0x1]
    %v2326 = vld [vmem:[%s61] sm:$0xf]
    %v2327 = vld [vmem:[%s61 + $0x4] sm:$0xf]
    %v2328 = vld [vmem:[%s61 + $0x8] sm:$0xf]
    %v2329 = vld [vmem:[%s61 + $0xc] sm:$0xf]
    %v2330 = vld [vmem:[%s61 + $0x10] sm:$0xf]
    %v2331 = vld [vmem:[%s61 + $0x14] sm:$0xf]
    %v2332 = vld [vmem:[%s61 + $0x18] sm:$0xf]
    %v2333 = vld [vmem:[%s61 + $0x1c] sm:$0xf]
    %v2334 = vld [vmem:[%s61 + $0x20] sm:$0xf]
    %v2335 = vld [vmem:[%s61 + $0x24] sm:$0xf]
    %v2336 = vld [vmem:[%s61 + $0x28] sm:$0xf]
    %v2337 = vld [vmem:[%s61 + $0x2c] sm:$0xf]
    %v2338 = vld [vmem:[%s61 + $0x30] sm:$0xf]
    %v2339 = vld [vmem:[%s61 + $0x34] sm:$0xf]
    %v2340 = vld [vmem:[%s61 + $0x38] sm:$0xf]
    %v2341 = vld [vmem:[%s61 + $0x3c] sm:$0xf]
    %v2342 = vld [vmem:[#allocation29] sm:$0x1]
    %v2343 = vld [vmem:[#allocation31] sm:$0x1]
    %v2344 = vld [vmem:[#allocation32] sm:$0x1]
    %2345 = vadd.xlane.f32.xlu0 %v2275
    %v2346 = vpop.xlane.xlu0 %2345
    %2347 = vadd.xlane.f32.xlu0 %v2278
    %v2348 = vpop.xlane.xlu0 %2347
    %v2349 = vmul.f32 %v2346, 0.03125
    %v2350 = vmul.f32 %v2348, 0.03125
    %v2351 = vmul.f32 %v2275, %v2275
    %v2352 = vmul.f32 %v2278, %v2278
    %2353 = vadd.xlane.f32.xlu0 %v2351
    %v2354 = vpop.xlane.xlu0 %2353
    %2355 = vadd.xlane.f32.xlu0 %v2352
    %v2356 = vpop.xlane.xlu0 %2355
    %v2357 = vmul.f32 %v2354, 0.03125
    %v2358 = vmul.f32 %v2356, 0.03125
    %v2359 = vmul.f32 %v2349, %v2349
    %v2360 = vmul.f32 %v2350, %v2350
    %v2361 = vsub.f32 %v2357, %v2359
    %v2362 = vsub.f32 %v2358, %v2360
    %v2363 = vsub.f32 %v2275, %v2349
    %v2364 = vsub.f32 %v2278, %v2350
    %v2365 = vadd.f32 %v2361, 1e-12
    %v2366 = vadd.f32 %v2362, 1e-12
    %v2367 = vrsqrt.pop %v2365
    %v2368 = vrsqrt.pop %v2366
    %v2369 = vmul.f32 %v2363, %v2367
    %v2370 = vmul.f32 %v2364, %v2368
    %v2372 = vlaneseq
    %v2373 = vshrl.u32 %v2372, 7
    %v2374 = vsub.s32 0, %v2373
    %v2375 = vrot.slane %v2307, %v2374
    %v2377 = vmul.f32 %v2369, %v2375
    %v2378 = vmul.f32 %v2370, %v2375
    %v2380 = vlaneseq
    %v2381 = vshrl.u32 %v2380, 7
    %v2382 = vsub.s32 0, %v2381
    %v2383 = vrot.slane %v2308, %v2382
    %v2385 = vadd.f32 %v2377, %v2383
    %v2386 = vadd.f32 %v2378, %v2383
    %v2387 = vpack.c.bf16 %v2386, %v2385
    %v2389 = vlaneseq
    %v2390 = vshrl.u32 %v2389, 7
    %v2391 = vsub.s32 0, %v2390
    %v2392 = vrot.slane %v2301, %v2391
    %v2410 = vunpack.c.l.b16 %v2285
    %v2411 = vunpack.c.l.b16 %v2286
    %v2412 = vunpack.c.l.b16 %v2287
    %v2413 = vunpack.c.l.b16 %v2288
    %v2414 = vunpack.c.l.b16 %v2289
    %v2415 = vunpack.c.l.b16 %v2290
    %v2416 = vunpack.c.l.b16 %v2291
    %v2417 = vunpack.c.l.b16 %v2292
    %v2418 = vunpack.c.l.b16 %v2293
    %v2419 = vunpack.c.l.b16 %v2294
    %v2420 = vunpack.c.l.b16 %v2295
    %v2421 = vunpack.c.l.b16 %v2296
    %v2422 = vunpack.c.l.b16 %v2297
    %v2423 = vunpack.c.l.b16 %v2298
    %v2424 = vunpack.c.l.b16 %v2299
    %v2425 = vunpack.c.l.b16 %v2300
    %v2426 = vpack.c.b16 %v2411, %v2410
    %v2427 = vpack.c.b16 %v2413, %v2412
    %v2428 = vpack.c.b16 %v2415, %v2414
    %v2429 = vpack.c.b16 %v2417, %v2416
    %v2430 = vpack.c.b16 %v2419, %v2418
    %v2431 = vpack.c.b16 %v2421, %v2420
    %v2432 = vpack.c.b16 %v2423, %v2422
    %v2433 = vpack.c.b16 %v2425, %v2424
    %2442 = vmatprep.subr.bf16.mxu0 0
    %2443 = vmatpush1.bf16.msra.mxu0 %v2426
    %2444 = vmatprep.subr.bf16.mxu0 0
    %2445 = vmatpush1.bf16.msra.mxu0 %v2427
    %2446 = vmatprep.subr.bf16.mxu0 0
    %2447 = vmatpush1.bf16.msra.mxu0 %v2428
    %2448 = vmatprep.subr.bf16.mxu0 0
    %2449 = vmatpush1.bf16.msra.mxu0 %v2429
    %2450 = vmatprep.subr.bf16.mxu0 0
    %2451 = vmatpush1.bf16.msra.mxu0 %v2430
    %2452 = vmatprep.subr.bf16.mxu0 0
    %2453 = vmatpush1.bf16.msra.mxu0 %v2431
    %2454 = vmatprep.subr.bf16.mxu0 0
    %2455 = vmatpush1.bf16.msra.mxu0 %v2432
    %2456 = vmatprep.subr.bf16.mxu0 0
    %2457 = vmatpush1.bf16.msra.mxu0 %v2433
    %2458 = vmatprep.subr.bf16.mxu0 0
    %2459 = vmatpush1.bf16.msra.mxu0 0
    %2460 = vmatprep.subr.bf16.mxu0 0
    %2461 = vmatpush1.bf16.msra.mxu0 0
    %2462 = vmatprep.subr.bf16.mxu0 0
    %2463 = vmatpush1.bf16.msra.mxu0 0
    %2464 = vmatprep.subr.bf16.mxu0 0
    %2465 = vmatpush1.bf16.msra.mxu0 0
    %2466 = vmatprep.subr.bf16.mxu0 0
    %2467 = vmatpush1.bf16.msra.mxu0 0
    %2468 = vmatprep.subr.bf16.mxu0 0
    %2469 = vmatpush1.bf16.msra.mxu0 0
    %2470 = vmatprep.subr.bf16.mxu0 0
    %2471 = vmatpush1.bf16.msra.mxu0 0
    %2472 = vmatprep.subr.bf16.mxu0 0
    %2473 = vmatpush1.bf16.msra.mxu0 0
    %2474 = vmatprep.mubr.bf16.mxu0 0
    %2475 = vmatmul.mubr.bf16.gmra.mrb[0].mxu0 %v2387
    %v2476 = vpop.f32.mrb[0].mxu0
    %v2477 = vadd.f32 %v2392, %v2476
    %v2478 = vpop.f32.mrb[0].mxu0
    %v2479 = vpop.f32.mrb[0].mxu0
    %v2480 = vadd.f32 %v2392, %v2479
    %v2481 = vpop.f32.mrb[0].mxu0
    %2482 = vdwg.mxu0
    %2485 = vrot.lane.b32.xlu0 %v2477, 112
    %v2486 = vpop.permute.xlu0 %2485
    %2487 = vrot.lane.b32.xlu0 %v2480, 112
    %v2488 = vpop.permute.xlu0 %2487
    %v2491 = vpack.c.bf16 %v2480, %v2477
    %v2492 = vpack.c.bf16 %v2488, %v2486
    %2495 = vrot.lane.b32.xlu0 %v2491, 96
    %v2496 = vpop.permute.xlu0 %2495
    %2497 = vrot.lane.b32.xlu0 %v2492, 96
    %v2498 = vpop.permute.xlu0 %2497
    %v2500 = vsel %vm700, %v2491, 0
    %v2503 = vsel %vm700, %v2492, 0
    %v2506 = vsel %vm700, %v2496, 0
    %v2509 = vsel %vm700, %v2498, 0
    %2511 = vmatprep.subr.bf16.mxu0 0
    %2512 = vmatpush1.bf16.xpose.msra.mxu0 %v2506
    %2513 = vmatprep.subr.bf16.mxu0 0
    %2514 = vmatpush1.bf16.xpose.msra.mxu0 %v2509
    %2515 = vmatprep.subr.bf16.mxu0 0
    %2516 = vmatpush1.bf16.xpose.msra.mxu0 0
    %2517 = vmatprep.subr.bf16.mxu0 0
    %2518 = vmatpush1.bf16.xpose.msra.mxu0 0
    %2519 = vmatprep.subr.bf16.mxu0 0
    %2520 = vmatpush1.bf16.xpose.msra.mxu0 0
    %2521 = vmatprep.subr.bf16.mxu0 0
    %2522 = vmatpush1.bf16.xpose.msra.mxu0 0
    %2523 = vmatprep.subr.bf16.mxu0 0
    %2524 = vmatpush1.bf16.xpose.msra.mxu0 0
    %2525 = vmatprep.subr.bf16.mxu0 0
    %2526 = vmatpush1.bf16.xpose.msra.mxu0 0
    %2527 = vmatprep.subr.bf16.mxu0 0
    %2528 = vmatpush1.bf16.xpose.msra.mxu0 0
    %2529 = vmatprep.subr.bf16.mxu0 0
    %2530 = vmatpush1.bf16.xpose.msra.mxu0 0
    %2531 = vmatprep.subr.bf16.mxu0 0
    %2532 = vmatpush1.bf16.xpose.msra.mxu0 0
    %2533 = vmatprep.subr.bf16.mxu0 0
    %2534 = vmatpush1.bf16.xpose.msra.mxu0 0
    %2535 = vmatprep.subr.bf16.mxu0 0
    %2536 = vmatpush1.bf16.xpose.msra.mxu0 0
    %2537 = vmatprep.subr.bf16.mxu0 0
    %2538 = vmatpush1.bf16.xpose.msra.mxu0 0
    %2539 = vmatprep.subr.bf16.mxu0 0
    %2540 = vmatpush1.bf16.xpose.msra.mxu0 0
    %2541 = vmatprep.subr.bf16.mxu0 0
    %2542 = vmatpush1.bf16.xpose.msra.mxu0 0
    %2543 = vmatprep.mubr.bf16.mxu0 0
    %2544 = vmatmul.mubr.bf16.gmra.mrb[0].mxu0 %v2500
    %v2545 = vpop.f32.mrb[0].mxu0
    %v2546 = vadd.f32 0.0, %v2545
    %v2547 = vpop.f32.mrb[0].mxu0
    %v2548 = vpop.f32.mrb[0].mxu0
    %v2549 = vadd.f32 0.0, %v2548
    %v2550 = vpop.f32.mrb[0].mxu0
    %2551 = vmatprep.mubr.bf16.mxu0 0
    %2552 = vmatmul.mubr.bf16.gmra.mrb[0].mxu0 %v2503
    %v2553 = vpop.f32.mrb[0].mxu0
    %v2554 = vadd.f32 0.0, %v2553
    %v2555 = vpop.f32.mrb[0].mxu0
    %v2556 = vpop.f32.mrb[0].mxu0
    %v2557 = vadd.f32 0.0, %v2556
    %v2558 = vpop.f32.mrb[0].mxu0
    %2559 = vdwg.mxu0
    %v2560 = vmul.f32 %v2546, 0.25
    %v2561 = vmul.f32 %v2549, 0.25
    %v2562 = vmul.f32 %v2554, 0.25
    %v2563 = vmul.f32 %v2557, 0.25
    %v2564 = vadd.f32 %v2560, %v2281
    %v2565 = vadd.f32 %v2561, %v2282
    %v2566 = vadd.f32 %v2562, %v2283
    %v2567 = vadd.f32 %v2563, %v2284
    %v2568 = vsel %vm770, %v2564, -inf
    %2569 = vmax.xlane.f32.xlu0 %v2568
    %v2570 = vpop.xlane.xlu0 %2569
    %v2571 = vsel %vm770, %v2565, -inf
    %2572 = vmax.xlane.f32.xlu0 %v2571
    %v2573 = vpop.xlane.xlu0 %2572
    %v2574 = vsel %vm770, %v2566, -inf
    %2575 = vmax.xlane.f32.xlu0 %v2574
    %v2576 = vpop.xlane.xlu0 %2575
    %v2577 = vsel %vm770, %v2567, -inf
    %2578 = vmax.xlane.f32.xlu0 %v2577
    %v2579 = vpop.xlane.xlu0 %2578
    %v2580 = vsub.f32 %v2564, %v2570
    %v2581 = vsub.f32 %v2565, %v2573
    %v2582 = vsub.f32 %v2566, %v2576
    %v2583 = vsub.f32 %v2567, %v2579
    %v2584 = vmul.f32 %v2580, 1.442695
    %v2585 = vpow.pop %v2584
    %v2586 = vmul.f32 %v2581, 1.442695
    %v2587 = vpow.pop %v2586
    %v2588 = vmul.f32 %v2582, 1.442695
    %v2589 = vpow.pop %v2588
    %v2590 = vmul.f32 %v2583, 1.442695
    %v2591 = vpow.pop %v2590
    %v2592 = vsel %vm770, %v2585, 0.0
    %2593 = vadd.xlane.f32.xlu0 %v2592
    %v2594 = vpop.xlane.xlu0 %2593
    %v2595 = vsel %vm770, %v2587, 0.0
    %2596 = vadd.xlane.f32.xlu0 %v2595
    %v2597 = vpop.xlane.xlu0 %2596
    %v2598 = vsel %vm770, %v2589, 0.0
    %2599 = vadd.xlane.f32.xlu0 %v2598
    %v2600 = vpop.xlane.xlu0 %2599
    %v2601 = vsel %vm770, %v2591, 0.0
    %2602 = vadd.xlane.f32.xlu0 %v2601
    %v2603 = vpop.xlane.xlu0 %2602
    %v2604 = vrcp.pop %v2594
    %v2605 = vrcp.pop %v2597
    %v2606 = vrcp.pop %v2600
    %v2607 = vrcp.pop %v2603
    %v2608 = vmul.f32 %v2585, %v2604
    %v2609 = vmul.f32 %v2587, %v2605
    %v2610 = vmul.f32 %v2589, %v2606
    %v2611 = vmul.f32 %v2591, %v2607
    %v2612 = vpack.c.bf16 %v2609, %v2608
    %v2613 = vpack.c.bf16 %v2611, %v2610
    %2614 = vrot.lane.b32.xlu0 %v2491, 64
    %v2615 = vpop.permute.xlu0 %2614
    %2616 = vrot.lane.b32.xlu0 %v2492, 64
    %v2617 = vpop.permute.xlu0 %2616
    %v2621 = vsel %vm770, %v2612, 0
    %v2624 = vsel %vm770, %v2613, 0
    %2626 = vmatprep.subr.bf16.mxu0 0
    %2627 = vmatpush1.bf16.msra.mxu0 %v2615
    %2628 = vmatprep.subr.bf16.mxu0 0
    %2629 = vmatpush1.bf16.msra.mxu0 %v2617
    %2630 = vmatprep.subr.bf16.mxu0 0
    %2631 = vmatpush1.bf16.msra.mxu0 0
    %2632 = vmatprep.subr.bf16.mxu0 0
    %2633 = vmatpush1.bf16.msra.mxu0 0
    %2634 = vmatprep.subr.bf16.mxu0 0
    %2635 = vmatpush1.bf16.msra.mxu0 0
    %2636 = vmatprep.subr.bf16.mxu0 0
    %2637 = vmatpush1.bf16.msra.mxu0 0
    %2638 = vmatprep.subr.bf16.mxu0 0
    %2639 = vmatpush1.bf16.msra.mxu0 0
    %2640 = vmatprep.subr.bf16.mxu0 0
    %2641 = vmatpush1.bf16.msra.mxu0 0
    %2642 = vmatprep.subr.bf16.mxu0 0
    %2643 = vmatpush1.bf16.msra.mxu0 0
    %2644 = vmatprep.subr.bf16.mxu0 0
    %2645 = vmatpush1.bf16.msra.mxu0 0
    %2646 = vmatprep.subr.bf16.mxu0 0
    %2647 = vmatpush1.bf16.msra.mxu0 0
    %2648 = vmatprep.subr.bf16.mxu0 0
    %2649 = vmatpush1.bf16.msra.mxu0 0
    %2650 = vmatprep.subr.bf16.mxu0 0
    %2651 = vmatpush1.bf16.msra.mxu0 0
    %2652 = vmatprep.subr.bf16.mxu0 0
    %2653 = vmatpush1.bf16.msra.mxu0 0
    %2654 = vmatprep.subr.bf16.mxu0 0
    %2655 = vmatpush1.bf16.msra.mxu0 0
    %2656 = vmatprep.subr.bf16.mxu0 0
    %2657 = vmatpush1.bf16.msra.mxu0 0
    %2658 = vmatprep.mubr.bf16.mxu0 0
    %2659 = vmatmul.mubr.bf16.gmra.mrb[0].mxu0 %v2621
    %v2660 = vpop.f32.mrb[0].mxu0
    %v2661 = vadd.f32 0.0, %v2660
    %v2662 = vpop.f32.mrb[0].mxu0
    %v2663 = vpop.f32.mrb[0].mxu0
    %v2664 = vadd.f32 0.0, %v2663
    %v2665 = vpop.f32.mrb[0].mxu0
    %2666 = vmatprep.mubr.bf16.mxu0 0
    %2667 = vmatmul.mubr.bf16.gmra.mrb[0].mxu0 %v2624
    %v2668 = vpop.f32.mrb[0].mxu0
    %v2669 = vadd.f32 0.0, %v2668
    %v2670 = vpop.f32.mrb[0].mxu0
    %v2671 = vpop.f32.mrb[0].mxu0
    %v2672 = vadd.f32 0.0, %v2671
    %v2673 = vpop.f32.mrb[0].mxu0
    %2674 = vdwg.mxu0
    %2677 = vrot.lane.b32.xlu0 %v2669, 16
    %v2678 = vpop.permute.xlu0 %2677
    %2679 = vrot.lane.b32.xlu0 %v2672, 16
    %v2680 = vpop.permute.xlu0 %2679
    %v2683 = vsel %vm700, %v2661, %v2678
    %v2684 = vsel %vm700, %v2664, %v2680
    %v2685 = vpack.c.bf16 %v2684, %v2683
    %v2687 = vlaneseq
    %v2688 = vshrl.u32 %v2687, 7
    %v2689 = vsub.s32 0, %v2688
    %v2690 = vrot.slane %v2306, %v2689
    %v2696 = vunpack.c.l.b16 %v2302
    %v2697 = vunpack.c.l.b16 %v2303
    %v2698 = vunpack.c.l.b16 %v2304
    %v2699 = vunpack.c.l.b16 %v2305
    %v2700 = vpack.c.b16 %v2697, %v2696
    %v2701 = vpack.c.b16 %v2699, %v2698
    %v2705 = vsel %vm770, %v2685, 0
    %2707 = vmatprep.subr.bf16.mxu0 0
    %2708 = vmatpush1.bf16.msra.mxu0 %v2700
    %2709 = vmatprep.subr.bf16.mxu0 0
    %2710 = vmatpush1.bf16.msra.mxu0 %v2701
    %2711 = vmatprep.subr.bf16.mxu0 0
    %2712 = vmatpush1.bf16.msra.mxu0 0
    %2713 = vmatprep.subr.bf16.mxu0 0
    %2714 = vmatpush1.bf16.msra.mxu0 0
    %2715 = vmatprep.subr.bf16.mxu0 0
    %2716 = vmatpush1.bf16.msra.mxu0 0
    %2717 = vmatprep.subr.bf16.mxu0 0
    %2718 = vmatpush1.bf16.msra.mxu0 0
    %2719 = vmatprep.subr.bf16.mxu0 0
    %2720 = vmatpush1.bf16.msra.mxu0 0
    %2721 = vmatprep.subr.bf16.mxu0 0
    %2722 = vmatpush1.bf16.msra.mxu0 0
    %2723 = vmatprep.subr.bf16.mxu0 0
    %2724 = vmatpush1.bf16.msra.mxu0 0
    %2725 = vmatprep.subr.bf16.mxu0 0
    %2726 = vmatpush1.bf16.msra.mxu0 0
    %2727 = vmatprep.subr.bf16.mxu0 0
    %2728 = vmatpush1.bf16.msra.mxu0 0
    %2729 = vmatprep.subr.bf16.mxu0 0
    %2730 = vmatpush1.bf16.msra.mxu0 0
    %2731 = vmatprep.subr.bf16.mxu0 0
    %2732 = vmatpush1.bf16.msra.mxu0 0
    %2733 = vmatprep.subr.bf16.mxu0 0
    %2734 = vmatpush1.bf16.msra.mxu0 0
    %2735 = vmatprep.subr.bf16.mxu0 0
    %2736 = vmatpush1.bf16.msra.mxu0 0
    %2737 = vmatprep.subr.bf16.mxu0 0
    %2738 = vmatpush1.bf16.msra.mxu0 0
    %2739 = vmatprep.mubr.bf16.mxu0 0
    %2740 = vmatmul.mubr.bf16.gmra.mrb[0].mxu0 %v2705
    %v2741 = vpop.f32.mrb[0].mxu0
    %v2742 = vadd.f32 %v2690, %v2741
    %v2743 = vpop.f32.mrb[0].mxu0
    %v2744 = vpop.f32.mrb[0].mxu0
    %v2745 = vadd.f32 %v2690, %v2744
    %v2746 = vpop.f32.mrb[0].mxu0
    %2747 = vdwg.mxu0
    %v2748 = vadd.f32 %v2275, %v2742
    %v2749 = vadd.f32 %v2278, %v2745
    %2750 = vadd.xlane.f32.xlu0 %v2748
    %v2751 = vpop.xlane.xlu0 %2750
    %2752 = vadd.xlane.f32.xlu0 %v2749
    %v2753 = vpop.xlane.xlu0 %2752
    %v2754 = vmul.f32 %v2751, 0.03125
    %v2755 = vmul.f32 %v2753, 0.03125
    %v2756 = vmul.f32 %v2748, %v2748
    %v2757 = vmul.f32 %v2749, %v2749
    %2758 = vadd.xlane.f32.xlu0 %v2756
    %v2759 = vpop.xlane.xlu0 %2758
    %2760 = vadd.xlane.f32.xlu0 %v2757
    %v2761 = vpop.xlane.xlu0 %2760
    %v2762 = vmul.f32 %v2759, 0.03125
    %v2763 = vmul.f32 %v2761, 0.03125
    %v2764 = vmul.f32 %v2754, %v2754
    %v2765 = vmul.f32 %v2755, %v2755
    %v2766 = vsub.f32 %v2762, %v2764
    %v2767 = vsub.f32 %v2763, %v2765
    %v2768 = vsub.f32 %v2748, %v2754
    %v2769 = vsub.f32 %v2749, %v2755
    %v2770 = vadd.f32 %v2766, 1e-12
    %v2771 = vadd.f32 %v2767, 1e-12
    %v2772 = vrsqrt.pop %v2770
    %v2773 = vrsqrt.pop %v2771
    %v2774 = vmul.f32 %v2768, %v2772
    %v2775 = vmul.f32 %v2769, %v2773
    %v2777 = vlaneseq
    %v2778 = vshrl.u32 %v2777, 7
    %v2779 = vsub.s32 0, %v2778
    %v2780 = vrot.slane %v2343, %v2779
    %v2782 = vmul.f32 %v2774, %v2780
    %v2783 = vmul.f32 %v2775, %v2780
    %v2785 = vlaneseq
    %v2786 = vshrl.u32 %v2785, 7
    %v2787 = vsub.s32 0, %v2786
    %v2788 = vrot.slane %v2344, %v2787
    %v2790 = vadd.f32 %v2782, %v2788
    %v2791 = vadd.f32 %v2783, %v2788
    %v2792 = vpack.c.bf16 %v2791, %v2790
    %v2794 = vlaneseq
    %v2795 = vshrl.u32 %v2794, 7
    %v2796 = vsub.s32 0, %v2795
    %v2797 = vrot.slane %v2325, %v2796
    %v2815 = vunpack.c.l.b16 %v2309
    %v2816 = vunpack.c.l.b16 %v2310
    %v2817 = vunpack.c.l.b16 %v2311
    %v2818 = vunpack.c.l.b16 %v2312
    %v2819 = vunpack.c.l.b16 %v2313
    %v2820 = vunpack.c.l.b16 %v2314
    %v2821 = vunpack.c.l.b16 %v2315
    %v2822 = vunpack.c.l.b16 %v2316
    %v2823 = vunpack.c.l.b16 %v2317
    %v2824 = vunpack.c.l.b16 %v2318
    %v2825 = vunpack.c.l.b16 %v2319
    %v2826 = vunpack.c.l.b16 %v2320
    %v2827 = vunpack.c.l.b16 %v2321
    %v2828 = vunpack.c.l.b16 %v2322
    %v2829 = vunpack.c.l.b16 %v2323
    %v2830 = vunpack.c.l.b16 %v2324
    %v2831 = vpack.c.b16 %v2816, %v2815
    %v2832 = vpack.c.b16 %v2818, %v2817
    %v2833 = vpack.c.b16 %v2820, %v2819
    %v2834 = vpack.c.b16 %v2822, %v2821
    %v2835 = vpack.c.b16 %v2824, %v2823
    %v2836 = vpack.c.b16 %v2826, %v2825
    %v2837 = vpack.c.b16 %v2828, %v2827
    %v2838 = vpack.c.b16 %v2830, %v2829
    %2847 = vmatprep.subr.bf16.mxu0 0
    %2848 = vmatpush1.bf16.msra.mxu0 %v2831
    %2849 = vmatprep.subr.bf16.mxu0 0
    %2850 = vmatpush1.bf16.msra.mxu0 %v2832
    %2851 = vmatprep.subr.bf16.mxu0 0
    %2852 = vmatpush1.bf16.msra.mxu0 %v2833
    %2853 = vmatprep.subr.bf16.mxu0 0
    %2854 = vmatpush1.bf16.msra.mxu0 %v2834
    %2855 = vmatprep.subr.bf16.mxu0 0
    %2856 = vmatpush1.bf16.msra.mxu0 %v2835
    %2857 = vmatprep.subr.bf16.mxu0 0
    %2858 = vmatpush1.bf16.msra.mxu0 %v2836
    %2859 = vmatprep.subr.bf16.mxu0 0
    %2860 = vmatpush1.bf16.msra.mxu0 %v2837
    %2861 = vmatprep.subr.bf16.mxu0 0
    %2862 = vmatpush1.bf16.msra.mxu0 %v2838
    %2863 = vmatprep.subr.bf16.mxu0 0
    %2864 = vmatpush1.bf16.msra.mxu0 0
    %2865 = vmatprep.subr.bf16.mxu0 0
    %2866 = vmatpush1.bf16.msra.mxu0 0
    %2867 = vmatprep.subr.bf16.mxu0 0
    %2868 = vmatpush1.bf16.msra.mxu0 0
    %2869 = vmatprep.subr.bf16.mxu0 0
    %2870 = vmatpush1.bf16.msra.mxu0 0
    %2871 = vmatprep.subr.bf16.mxu0 0
    %2872 = vmatpush1.bf16.msra.mxu0 0
    %2873 = vmatprep.subr.bf16.mxu0 0
    %2874 = vmatpush1.bf16.msra.mxu0 0
    %2875 = vmatprep.subr.bf16.mxu0 0
    %2876 = vmatpush1.bf16.msra.mxu0 0
    %2877 = vmatprep.subr.bf16.mxu0 0
    %2878 = vmatpush1.bf16.msra.mxu0 0
    %2879 = vmatprep.mubr.bf16.mxu0 0
    %2880 = vmatmul.mubr.bf16.gmra.mrb[0].mxu0 %v2792
    %v2881 = vpop.f32.mrb[0].mxu0
    %v2882 = vadd.f32 %v2797, %v2881
    %v2883 = vpop.f32.mrb[0].mxu0
    %v2884 = vpop.f32.mrb[0].mxu0
    %v2885 = vadd.f32 %v2797, %v2884
    %v2886 = vpop.f32.mrb[0].mxu0
    %2887 = vdwg.mxu0
    %v2888 = vmul.f32 %v2882, 0.5
    %v2889 = vmul.f32 %v2885, 0.5
    %v2890 = vmul.f32 %v2882, 0.044715
    %v2891 = vmul.f32 %v2885, 0.044715
    %v2892 = vmul.f32 %v2890, %v2882
    %v2893 = vmul.f32 %v2891, %v2885
    %v2894 = vmul.f32 %v2892, %v2882
    %v2895 = vmul.f32 %v2893, %v2885
    %v2896 = vadd.f32 %v2882, %v2894
    %v2897 = vadd.f32 %v2885, %v2895
    %v2898 = vmul.f32 %v2896, 0.7978846
    %v2899 = vmul.f32 %v2897, 0.7978846
    %v2900 = vtanh.pop %v2898
    %v2901 = vtanh.pop %v2899
    %v2902 = vadd.f32 %v2900, 1.0
    %v2903 = vadd.f32 %v2901, 1.0
    %v2904 = vmul.f32 %v2888, %v2902
    %v2905 = vmul.f32 %v2889, %v2903
    %v2906 = vpack.c.bf16 %v2905, %v2904
    %v2908 = vlaneseq
    %v2909 = vshrl.u32 %v2908, 7
    %v2910 = vsub.s32 0, %v2909
    %v2911 = vrot.slane %v2342, %v2910
    %v2929 = vunpack.c.l.b16 %v2326
    %v2930 = vunpack.c.l.b16 %v2327
    %v2931 = vunpack.c.l.b16 %v2328
    %v2932 = vunpack.c.l.b16 %v2329
    %v2933 = vunpack.c.l.b16 %v2330
    %v2934 = vunpack.c.l.b16 %v2331
    %v2935 = vunpack.c.l.b16 %v2332
    %v2936 = vunpack.c.l.b16 %v2333
    %v2937 = vunpack.c.l.b16 %v2334
    %v2938 = vunpack.c.l.b16 %v2335
    %v2939 = vunpack.c.l.b16 %v2336
    %v2940 = vunpack.c.l.b16 %v2337
    %v2941 = vunpack.c.l.b16 %v2338
    %v2942 = vunpack.c.l.b16 %v2339
    %v2943 = vunpack.c.l.b16 %v2340
    %v2944 = vunpack.c.l.b16 %v2341
    %v2945 = vpack.c.b16 %v2930, %v2929
    %v2946 = vpack.c.b16 %v2932, %v2931
    %v2947 = vpack.c.b16 %v2934, %v2933
    %v2948 = vpack.c.b16 %v2936, %v2935
    %v2949 = vpack.c.b16 %v2938, %v2937
    %v2950 = vpack.c.b16 %v2940, %v2939
    %v2951 = vpack.c.b16 %v2942, %v2941
    %v2952 = vpack.c.b16 %v2944, %v2943
    %2961 = vmatprep.subr.bf16.mxu0 0
    %2962 = vmatpush1.bf16.msra.mxu0 %v2945
    %2963 = vmatprep.subr.bf16.mxu0 0
    %2964 = vmatpush1.bf16.msra.mxu0 %v2946
    %2965 = vmatprep.subr.bf16.mxu0 0
    %2966 = vmatpush1.bf16.msra.mxu0 %v2947
    %2967 = vmatprep.subr.bf16.mxu0 0
    %2968 = vmatpush1.bf16.msra.mxu0 %v2948
    %2969 = vmatprep.subr.bf16.mxu0 0
    %2970 = vmatpush1.bf16.msra.mxu0 %v2949
    %2971 = vmatprep.subr.bf16.mxu0 0
    %2972 = vmatpush1.bf16.msra.mxu0 %v2950
    %2973 = vmatprep.subr.bf16.mxu0 0
    %2974 = vmatpush1.bf16.msra.mxu0 %v2951
    %2975 = vmatprep.subr.bf16.mxu0 0
    %2976 = vmatpush1.bf16.msra.mxu0 %v2952
    %2977 = vmatprep.subr.bf16.mxu0 0
    %2978 = vmatpush1.bf16.msra.mxu0 0
    %2979 = vmatprep.subr.bf16.mxu0 0
    %2980 = vmatpush1.bf16.msra.mxu0 0
    %2981 = vmatprep.subr.bf16.mxu0 0
    %2982 = vmatpush1.bf16.msra.mxu0 0
    %2983 = vmatprep.subr.bf16.mxu0 0
    %2984 = vmatpush1.bf16.msra.mxu0 0
    %2985 = vmatprep.subr.bf16.mxu0 0
    %2986 = vmatpush1.bf16.msra.mxu0 0
    %2987 = vmatprep.subr.bf16.mxu0 0
    %2988 = vmatpush1.bf16.msra.mxu0 0
    %2989 = vmatprep.subr.bf16.mxu0 0
    %2990 = vmatpush1.bf16.msra.mxu0 0
    %2991 = vmatprep.subr.bf16.mxu0 0
    %2992 = vmatpush1.bf16.msra.mxu0 0
    %2993 = vmatprep.mubr.bf16.mxu0 0
    %2994 = vmatmul.mubr.bf16.gmra.mrb[0].mxu0 %v2906
    %v2995 = vpop.f32.mrb[0].mxu0
    %v2996 = vadd.f32 %v2911, %v2995
    %v2997 = vpop.f32.mrb[0].mxu0
    %v2998 = vpop.f32.mrb[0].mxu0
    %v2999 = vadd.f32 %v2911, %v2998
    %v3000 = vpop.f32.mrb[0].mxu0
    %3001 = vdwg.mxu0
    %v3002 = vadd.f32 %v2748, %v2996
    %v3003 = vadd.f32 %v2749, %v2999
    %s3004 = scalar_lea.vmem %s45, 64
    %v3005 = vld [vmem:[%s3004] sm:$0xf]
    %v3006 = vld [vmem:[%s3004 + $0x4] sm:$0xf]
    %v3007 = vld [vmem:[%s3004 + $0x8] sm:$0xf]
    %v3008 = vld [vmem:[%s3004 + $0xc] sm:$0xf]
    %v3009 = vld [vmem:[%s3004 + $0x10] sm:$0xf]
    %v3010 = vld [vmem:[%s3004 + $0x14] sm:$0xf]
    %v3011 = vld [vmem:[%s3004 + $0x18] sm:$0xf]
    %v3012 = vld [vmem:[%s3004 + $0x1c] sm:$0xf]
    %v3013 = vld [vmem:[%s3004 + $0x20] sm:$0xf]
    %v3014 = vld [vmem:[%s3004 + $0x24] sm:$0xf]
    %v3015 = vld [vmem:[%s3004 + $0x28] sm:$0xf]
    %v3016 = vld [vmem:[%s3004 + $0x2c] sm:$0xf]
    %v3017 = vld [vmem:[%s3004 + $0x30] sm:$0xf]
    %v3018 = vld [vmem:[%s3004 + $0x34] sm:$0xf]
    %v3019 = vld [vmem:[%s3004 + $0x38] sm:$0xf]
    %v3020 = vld [vmem:[%s3004 + $0x3c] sm:$0xf]
    %s3021 = scalar_lea.vmem [#allocation20], 1
    %v3022 = vld [vmem:[%s3021] sm:$0x1]
    %s3023 = scalar_lea.vmem [#allocation22], 16
    %v3024 = vld [vmem:[%s3023] sm:$0xf]
    %v3025 = vld [vmem:[%s3023 + $0x4] sm:$0xf]
    %v3026 = vld [vmem:[%s3023 + $0x8] sm:$0xf]
    %v3027 = vld [vmem:[%s3023 + $0xc] sm:$0xf]
    %s3028 = scalar_lea.vmem [#allocation23], 1
    %v3029 = vld [vmem:[%s3028] sm:$0x1]
    %s3030 = scalar_lea.vmem [#allocation25], 1
    %v3031 = vld [vmem:[%s3030] sm:$0x1]
    %s3032 = scalar_lea.vmem [#allocation26], 1
    %v3033 = vld [vmem:[%s3032] sm:$0x1]
    %s3034 = scalar_lea.vmem %s57, 64
    %v3035 = vld [vmem:[%s3034] sm:$0xf]
    %v3036 = vld [vmem:[%s3034 + $0x4] sm:$0xf]
    %v3037 = vld [vmem:[%s3034 + $0x8] sm:$0xf]
    %v3038 = vld [vmem:[%s3034 + $0xc] sm:$0xf]
    %v3039 = vld [vmem:[%s3034 + $0x10] sm:$0xf]
    %v3040 = vld [vmem:[%s3034 + $0x14] sm:$0xf]
    %v3041 = vld [vmem:[%s3034 + $0x18] sm:$0xf]
    %v3042 = vld [vmem:[%s3034 + $0x1c] sm:$0xf]
    %v3043 = vld [vmem:[%s3034 + $0x20] sm:$0xf]
    %v3044 = vld [vmem:[%s3034 + $0x24] sm:$0xf]
    %v3045 = vld [vmem:[%s3034 + $0x28] sm:$0xf]
    %v3046 = vld [vmem:[%s3034 + $0x2c] sm:$0xf]
    %v3047 = vld [vmem:[%s3034 + $0x30] sm:$0xf]
    %v3048 = vld [vmem:[%s3034 + $0x34] sm:$0xf]
    %v3049 = vld [vmem:[%s3034 + $0x38] sm:$0xf]
    %v3050 = vld [vmem:[%s3034 + $0x3c] sm:$0xf]
    %s3051 = scalar_lea.vmem [#allocation28], 1
    %v3052 = vld [vmem:[%s3051] sm:$0x1]
    %s3053 = scalar_lea.vmem %s61, 64
    %v3054 = vld [vmem:[%s3053] sm:$0xf]
    %v3055 = vld [vmem:[%s3053 + $0x4] sm:$0xf]
    %v3056 = vld [vmem:[%s3053 + $0x8] sm:$0xf]
    %v3057 = vld [vmem:[%s3053 + $0xc] sm:$0xf]
    %v3058 = vld [vmem:[%s3053 + $0x10] sm:$0xf]
    %v3059 = vld [vmem:[%s3053 + $0x14] sm:$0xf]
    %v3060 = vld [vmem:[%s3053 + $0x18] sm:$0xf]
    %v3061 = vld [vmem:[%s3053 + $0x1c] sm:$0xf]
    %v3062 = vld [vmem:[%s3053 + $0x20] sm:$0xf]
    %v3063 = vld [vmem:[%s3053 + $0x24] sm:$0xf]
    %v3064 = vld [vmem:[%s3053 + $0x28] sm:$0xf]
    %v3065 = vld [vmem:[%s3053 + $0x2c] sm:$0xf]
    %v3066 = vld [vmem:[%s3053 + $0x30] sm:$0xf]
    %v3067 = vld [vmem:[%s3053 + $0x34] sm:$0xf]
    %v3068 = vld [vmem:[%s3053 + $0x38] sm:$0xf]
    %v3069 = vld [vmem:[%s3053 + $0x3c] sm:$0xf]
    %s3070 = scalar_lea.vmem [#allocation29], 1
    %v3071 = vld [vmem:[%s3070] sm:$0x1]
    %s3072 = scalar_lea.vmem [#allocation31], 1
    %v3073 = vld [vmem:[%s3072] sm:$0x1]
    %s3074 = scalar_lea.vmem [#allocation32], 1
    %v3075 = vld [vmem:[%s3074] sm:$0x1]
    %3076 = vadd.xlane.f32.xlu0 %v3002
    %v3077 = vpop.xlane.xlu0 %3076
    %3078 = vadd.xlane.f32.xlu0 %v3003
    %v3079 = vpop.xlane.xlu0 %3078
    %v3080 = vmul.f32 %v3077, 0.03125
    %v3081 = vmul.f32 %v3079, 0.03125
    %v3082 = vmul.f32 %v3002, %v3002
    %v3083 = vmul.f32 %v3003, %v3003
    %3084 = vadd.xlane.f32.xlu0 %v3082
    %v3085 = vpop.xlane.xlu0 %3084
    %3086 = vadd.xlane.f32.xlu0 %v3083
    %v3087 = vpop.xlane.xlu0 %3086
    %v3088 = vmul.f32 %v3085, 0.03125
    %v3089 = vmul.f32 %v3087, 0.03125
    %v3090 = vmul.f32 %v3080, %v3080
    %v3091 = vmul.f32 %v3081, %v3081
    %v3092 = vsub.f32 %v3088, %v3090
    %v3093 = vsub.f32 %v3089, %v3091
    %v3094 = vsub.f32 %v3002, %v3080
    %v3095 = vsub.f32 %v3003, %v3081
    %v3096 = vadd.f32 %v3092, 1e-12
    %v3097 = vadd.f32 %v3093, 1e-12
    %v3098 = vrsqrt.pop %v3096
    %v3099 = vrsqrt.pop %v3097
    %v3100 = vmul.f32 %v3094, %v3098
    %v3101 = vmul.f32 %v3095, %v3099
    %v3103 = vlaneseq
    %v3104 = vshrl.u32 %v3103, 7
    %v3105 = vsub.s32 0, %v3104
    %v3106 = vrot.slane %v3031, %v3105
    %v3108 = vmul.f32 %v3100, %v3106
    %v3109 = vmul.f32 %v3101, %v3106
    %v3111 = vlaneseq
    %v3112 = vshrl.u32 %v3111, 7
    %v3113 = vsub.s32 0, %v3112
    %v3114 = vrot.slane %v3033, %v3113
    %v3116 = vadd.f32 %v3108, %v3114
    %v3117 = vadd.f32 %v3109, %v3114
    %v3118 = vpack.c.bf16 %v3117, %v3116
    %v3120 = vlaneseq
    %v3121 = vshrl.u32 %v3120, 7
    %v3122 = vsub.s32 0, %v3121
    %v3123 = vrot.slane %v3022, %v3122
    %v3141 = vunpack.c.l.b16 %v3005
    %v3142 = vunpack.c.l.b16 %v3006
    %v3143 = vunpack.c.l.b16 %v3007
    %v3144 = vunpack.c.l.b16 %v3008
    %v3145 = vunpack.c.l.b16 %v3009
    %v3146 = vunpack.c.l.b16 %v3010
    %v3147 = vunpack.c.l.b16 %v3011
    %v3148 = vunpack.c.l.b16 %v3012
    %v3149 = vunpack.c.l.b16 %v3013
    %v3150 = vunpack.c.l.b16 %v3014
    %v3151 = vunpack.c.l.b16 %v3015
    %v3152 = vunpack.c.l.b16 %v3016
    %v3153 = vunpack.c.l.b16 %v3017
    %v3154 = vunpack.c.l.b16 %v3018
    %v3155 = vunpack.c.l.b16 %v3019
    %v3156 = vunpack.c.l.b16 %v3020
    %v3157 = vpack.c.b16 %v3142, %v3141
    %v3158 = vpack.c.b16 %v3144, %v3143
    %v3159 = vpack.c.b16 %v3146, %v3145
    %v3160 = vpack.c.b16 %v3148, %v3147
    %v3161 = vpack.c.b16 %v3150, %v3149
    %v3162 = vpack.c.b16 %v3152, %v3151
    %v3163 = vpack.c.b16 %v3154, %v3153
    %v3164 = vpack.c.b16 %v3156, %v3155
    %3173 = vmatprep.subr.bf16.mxu0 0
    %3174 = vmatpush1.bf16.msra.mxu0 %v3157
    %3175 = vmatprep.subr.bf16.mxu0 0
    %3176 = vmatpush1.bf16.msra.mxu0 %v3158
    %3177 = vmatprep.subr.bf16.mxu0 0
    %3178 = vmatpush1.bf16.msra.mxu0 %v3159
    %3179 = vmatprep.subr.bf16.mxu0 0
    %3180 = vmatpush1.bf16.msra.mxu0 %v3160
    %3181 = vmatprep.subr.bf16.mxu0 0
    %3182 = vmatpush1.bf16.msra.mxu0 %v3161
    %3183 = vmatprep.subr.bf16.mxu0 0
    %3184 = vmatpush1.bf16.msra.mxu0 %v3162
    %3185 = vmatprep.subr.bf16.mxu0 0
    %3186 = vmatpush1.bf16.msra.mxu0 %v3163
    %3187 = vmatprep.subr.bf16.mxu0 0
    %3188 = vmatpush1.bf16.msra.mxu0 %v3164
    %3189 = vmatprep.subr.bf16.mxu0 0
    %3190 = vmatpush1.bf16.msra.mxu0 0
    %3191 = vmatprep.subr.bf16.mxu0 0
    %3192 = vmatpush1.bf16.msra.mxu0 0
    %3193 = vmatprep.subr.bf16.mxu0 0
    %3194 = vmatpush1.bf16.msra.mxu0 0
    %3195 = vmatprep.subr.bf16.mxu0 0
    %3196 = vmatpush1.bf16.msra.mxu0 0
    %3197 = vmatprep.subr.bf16.mxu0 0
    %3198 = vmatpush1.bf16.msra.mxu0 0
    %3199 = vmatprep.subr.bf16.mxu0 0
    %3200 = vmatpush1.bf16.msra.mxu0 0
    %3201 = vmatprep.subr.bf16.mxu0 0
    %3202 = vmatpush1.bf16.msra.mxu0 0
    %3203 = vmatprep.subr.bf16.mxu0 0
    %3204 = vmatpush1.bf16.msra.mxu0 0
    %3205 = vmatprep.mubr.bf16.mxu0 0
    %3206 = vmatmul.mubr.bf16.gmra.mrb[0].mxu0 %v3118
    %v3207 = vpop.f32.mrb[0].mxu0
    %v3208 = vadd.f32 %v3123, %v3207
    %v3209 = vpop.f32.mrb[0].mxu0
    %v3210 = vpop.f32.mrb[0].mxu0
    %v3211 = vadd.f32 %v3123, %v3210
    %v3212 = vpop.f32.mrb[0].mxu0
    %3213 = vdwg.mxu0
    %3216 = vrot.lane.b32.xlu0 %v3208, 112
    %v3217 = vpop.permute.xlu0 %3216
    %3218 = vrot.lane.b32.xlu0 %v3211, 112
    %v3219 = vpop.permute.xlu0 %3218
    %v3222 = vpack.c.bf16 %v3211, %v3208
    %v3223 = vpack.c.bf16 %v3219, %v3217
    %3226 = vrot.lane.b32.xlu0 %v3222, 96
    %v3227 = vpop.permute.xlu0 %3226
    %3228 = vrot.lane.b32.xlu0 %v3223, 96
    %v3229 = vpop.permute.xlu0 %3228
    %v3231 = vsel %vm700, %v3222, 0
    %v3234 = vsel %vm700, %v3223, 0
    %v3237 = vsel %vm700, %v3227, 0
    %v3240 = vsel %vm700, %v3229, 0
    %3242 = vmatprep.subr.bf16.mxu0 0
    %3243 = vmatpush1.bf16.xpose.msra.mxu0 %v3237
    %3244 = vmatprep.subr.bf16.mxu0 0
    %3245 = vmatpush1.bf16.xpose.msra.mxu0 %v3240
    %3246 = vmatprep.subr.bf16.mxu0 0
    %3247 = vmatpush1.bf16.xpose.msra.mxu0 0
    %3248 = vmatprep.subr.bf16.mxu0 0
    %3249 = vmatpush1.bf16.xpose.msra.mxu0 0
    %3250 = vmatprep.subr.bf16.mxu0 0
    %3251 = vmatpush1.bf16.xpose.msra.mxu0 0
    %3252 = vmatprep.subr.bf16.mxu0 0
    %3253 = vmatpush1.bf16.xpose.msra.mxu0 0
    %3254 = vmatprep.subr.bf16.mxu0 0
    %3255 = vmatpush1.bf16.xpose.msra.mxu0 0
    %3256 = vmatprep.subr.bf16.mxu0 0
    %3257 = vmatpush1.bf16.xpose.msra.mxu0 0
    %3258 = vmatprep.subr.bf16.mxu0 0
    %3259 = vmatpush1.bf16.xpose.msra.mxu0 0
    %3260 = vmatprep.subr.bf16.mxu0 0
    %3261 = vmatpush1.bf16.xpose.msra.mxu0 0
    %3262 = vmatprep.subr.bf16.mxu0 0
    %3263 = vmatpush1.bf16.xpose.msra.mxu0 0
    %3264 = vmatprep.subr.bf16.mxu0 0
    %3265 = vmatpush1.bf16.xpose.msra.mxu0 0
    %3266 = vmatprep.subr.bf16.mxu0 0
    %3267 = vmatpush1.bf16.xpose.msra.mxu0 0
    %3268 = vmatprep.subr.bf16.mxu0 0
    %3269 = vmatpush1.bf16.xpose.msra.mxu0 0
    %3270 = vmatprep.subr.bf16.mxu0 0
    %3271 = vmatpush1.bf16.xpose.msra.mxu0 0
    %3272 = vmatprep.subr.bf16.mxu0 0
    %3273 = vmatpush1.bf16.xpose.msra.mxu0 0
    %3274 = vmatprep.mubr.bf16.mxu0 0
    %3275 = vmatmul.mubr.bf16.gmra.mrb[0].mxu0 %v3231
    %v3276 = vpop.f32.mrb[0].mxu0
    %v3277 = vadd.f32 0.0, %v3276
    %v3278 = vpop.f32.mrb[0].mxu0
    %v3279 = vpop.f32.mrb[0].mxu0
    %v3280 = vadd.f32 0.0, %v3279
    %v3281 = vpop.f32.mrb[0].mxu0
    %3282 = vmatprep.mubr.bf16.mxu0 0
    %3283 = vmatmul.mubr.bf16.gmra.mrb[0].mxu0 %v3234
    %v3284 = vpop.f32.mrb[0].mxu0
    %v3285 = vadd.f32 0.0, %v3284
    %v3286 = vpop.f32.mrb[0].mxu0
    %v3287 = vpop.f32.mrb[0].mxu0
    %v3288 = vadd.f32 0.0, %v3287
    %v3289 = vpop.f32.mrb[0].mxu0
    %3290 = vdwg.mxu0
    %v3291 = vmul.f32 %v3277, 0.25
    %v3292 = vmul.f32 %v3280, 0.25
    %v3293 = vmul.f32 %v3285, 0.25
    %v3294 = vmul.f32 %v3288, 0.25
    %v3295 = vadd.f32 %v3291, %v2281
    %v3296 = vadd.f32 %v3292, %v2282
    %v3297 = vadd.f32 %v3293, %v2283
    %v3298 = vadd.f32 %v3294, %v2284
    %v3299 = vsel %vm770, %v3295, -inf
    %3300 = vmax.xlane.f32.xlu0 %v3299
    %v3301 = vpop.xlane.xlu0 %3300
    %v3302 = vsel %vm770, %v3296, -inf
    %3303 = vmax.xlane.f32.xlu0 %v3302
    %v3304 = vpop.xlane.xlu0 %3303
    %v3305 = vsel %vm770, %v3297, -inf
    %3306 = vmax.xlane.f32.xlu0 %v3305
    %v3307 = vpop.xlane.xlu0 %3306
    %v3308 = vsel %vm770, %v3298, -inf
    %3309 = vmax.xlane.f32.xlu0 %v3308
    %v3310 = vpop.xlane.xlu0 %3309
    %v3311 = vsub.f32 %v3295, %v3301
    %v3312 = vsub.f32 %v3296, %v3304
    %v3313 = vsub.f32 %v3297, %v3307
    %v3314 = vsub.f32 %v3298, %v3310
    %v3315 = vmul.f32 %v3311, 1.442695
    %v3316 = vpow.pop %v3315
    %v3317 = vmul.f32 %v3312, 1.442695
    %v3318 = vpow.pop %v3317
    %v3319 = vmul.f32 %v3313, 1.442695
    %v3320 = vpow.pop %v3319
    %v3321 = vmul.f32 %v3314, 1.442695
    %v3322 = vpow.pop %v3321
    %v3323 = vsel %vm770, %v3316, 0.0
    %3324 = vadd.xlane.f32.xlu0 %v3323
    %v3325 = vpop.xlane.xlu0 %3324
    %v3326 = vsel %vm770, %v3318, 0.0
    %3327 = vadd.xlane.f32.xlu0 %v3326
    %v3328 = vpop.xlane.xlu0 %3327
    %v3329 = vsel %vm770, %v3320, 0.0
    %3330 = vadd.xlane.f32.xlu0 %v3329
    %v3331 = vpop.xlane.xlu0 %3330
    %v3332 = vsel %vm770, %v3322, 0.0
    %3333 = vadd.xlane.f32.xlu0 %v3332
    %v3334 = vpop.xlane.xlu0 %3333
    %v3335 = vrcp.pop %v3325
    %v3336 = vrcp.pop %v3328
    %v3337 = vrcp.pop %v3331
    %v3338 = vrcp.pop %v3334
    %v3339 = vmul.f32 %v3316, %v3335
    %v3340 = vmul.f32 %v3318, %v3336
    %v3341 = vmul.f32 %v3320, %v3337
    %v3342 = vmul.f32 %v3322, %v3338
    %v3343 = vpack.c.bf16 %v3340, %v3339
    %v3344 = vpack.c.bf16 %v3342, %v3341
    %3345 = vrot.lane.b32.xlu0 %v3222, 64
    %v3346 = vpop.permute.xlu0 %3345
    %3347 = vrot.lane.b32.xlu0 %v3223, 64
    %v3348 = vpop.permute.xlu0 %3347
    %v3352 = vsel %vm770, %v3343, 0
    %v3355 = vsel %vm770, %v3344, 0
    %3357 = vmatprep.subr.bf16.mxu0 0
    %3358 = vmatpush1.bf16.msra.mxu0 %v3346
    %3359 = vmatprep.subr.bf16.mxu0 0
    %3360 = vmatpush1.bf16.msra.mxu0 %v3348
    %3361 = vmatprep.subr.bf16.mxu0 0
    %3362 = vmatpush1.bf16.msra.mxu0 0
    %3363 = vmatprep.subr.bf16.mxu0 0
    %3364 = vmatpush1.bf16.msra.mxu0 0
    %3365 = vmatprep.subr.bf16.mxu0 0
    %3366 = vmatpush1.bf16.msra.mxu0 0
    %3367 = vmatprep.subr.bf16.mxu0 0
    %3368 = vmatpush1.bf16.msra.mxu0 0
    %3369 = vmatprep.subr.bf16.mxu0 0
    %3370 = vmatpush1.bf16.msra.mxu0 0
    %3371 = vmatprep.subr.bf16.mxu0 0
    %3372 = vmatpush1.bf16.msra.mxu0 0
    %3373 = vmatprep.subr.bf16.mxu0 0
    %3374 = vmatpush1.bf16.msra.mxu0 0
    %3375 = vmatprep.subr.bf16.mxu0 0
    %3376 = vmatpush1.bf16.msra.mxu0 0
    %3377 = vmatprep.subr.bf16.mxu0 0
    %3378 = vmatpush1.bf16.msra.mxu0 0
    %3379 = vmatprep.subr.bf16.mxu0 0
    %3380 = vmatpush1.bf16.msra.mxu0 0
    %3381 = vmatprep.subr.bf16.mxu0 0
    %3382 = vmatpush1.bf16.msra.mxu0 0
    %3383 = vmatprep.subr.bf16.mxu0 0
    %3384 = vmatpush1.bf16.msra.mxu0 0
    %3385 = vmatprep.subr.bf16.mxu0 0
    %3386 = vmatpush1.bf16.msra.mxu0 0
    %3387 = vmatprep.subr.bf16.mxu0 0
    %3388 = vmatpush1.bf16.msra.mxu0 0
    %3389 = vmatprep.mubr.bf16.mxu0 0
    %3390 = vmatmul.mubr.bf16.gmra.mrb[0].mxu0 %v3352
    %v3391 = vpop.f32.mrb[0].mxu0
    %v3392 = vadd.f32 0.0, %v3391
    %v3393 = vpop.f32.mrb[0].mxu0
    %v3394 = vpop.f32.mrb[0].mxu0
    %v3395 = vadd.f32 0.0, %v3394
    %v3396 = vpop.f32.mrb[0].mxu0
    %3397 = vmatprep.mubr.bf16.mxu0 0
    %3398 = vmatmul.mubr.bf16.gmra.mrb[0].mxu0 %v3355
    %v3399 = vpop.f32.mrb[0].mxu0
    %v3400 = vadd.f32 0.0, %v3399
    %v3401 = vpop.f32.mrb[0].mxu0
    %v3402 = vpop.f32.mrb[0].mxu0
    %v3403 = vadd.f32 0.0, %v3402
    %v3404 = vpop.f32.mrb[0].mxu0
    %3405 = vdwg.mxu0
    %3408 = vrot.lane.b32.xlu0 %v3400, 16
    %v3409 = vpop.permute.xlu0 %3408
    %3410 = vrot.lane.b32.xlu0 %v3403, 16
    %v3411 = vpop.permute.xlu0 %3410
    %v3414 = vsel %vm700, %v3392, %v3409
    %v3415 = vsel %vm700, %v3395, %v3411
    %v3416 = vpack.c.bf16 %v3415, %v3414
    %v3418 = vlaneseq
    %v3419 = vshrl.u32 %v3418, 7
    %v3420 = vsub.s32 0, %v3419
    %v3421 = vrot.slane %v3029, %v3420
    %v3427 = vunpack.c.l.b16 %v3024
    %v3428 = vunpack.c.l.b16 %v3025
    %v3429 = vunpack.c.l.b16 %v3026
    %v3430 = vunpack.c.l.b16 %v3027
    %v3431 = vpack.c.b16 %v3428, %v3427
    %v3432 = vpack.c.b16 %v3430, %v3429
    %v3436 = vsel %vm770, %v3416, 0
    %3438 = vmatprep.subr.bf16.mxu0 0
    %3439 = vmatpush1.bf16.msra.mxu0 %v3431
    %3440 = vmatprep.subr.bf16.mxu0 0
    %3441 = vmatpush1.bf16.msra.mxu0 %v3432
    %3442 = vmatprep.subr.bf16.mxu0 0
    %3443 = vmatpush1.bf16.msra.mxu0 0
    %3444 = vmatprep.subr.bf16.mxu0 0
    %3445 = vmatpush1.bf16.msra.mxu0 0
    %3446 = vmatprep.subr.bf16.mxu0 0
    %3447 = vmatpush1.bf16.msra.mxu0 0
    %3448 = vmatprep.subr.bf16.mxu0 0
    %3449 = vmatpush1.bf16.msra.mxu0 0
    %3450 = vmatprep.subr.bf16.mxu0 0
    %3451 = vmatpush1.bf16.msra.mxu0 0
    %3452 = vmatprep.subr.bf16.mxu0 0
    %3453 = vmatpush1.bf16.msra.mxu0 0
    %3454 = vmatprep.subr.bf16.mxu0 0
    %3455 = vmatpush1.bf16.msra.mxu0 0
    %3456 = vmatprep.subr.bf16.mxu0 0
    %3457 = vmatpush1.bf16.msra.mxu0 0
    %3458 = vmatprep.subr.bf16.mxu0 0
    %3459 = vmatpush1.bf16.msra.mxu0 0
    %3460 = vmatprep.subr.bf16.mxu0 0
    %3461 = vmatpush1.bf16.msra.mxu0 0
    %3462 = vmatprep.subr.bf16.mxu0 0
    %3463 = vmatpush1.bf16.msra.mxu0 0
    %3464 = vmatprep.subr.bf16.mxu0 0
    %3465 = vmatpush1.bf16.msra.mxu0 0
    %3466 = vmatprep.subr.bf16.mxu0 0
    %3467 = vmatpush1.bf16.msra.mxu0 0
    %3468 = vmatprep.subr.bf16.mxu0 0
    %3469 = vmatpush1.bf16.msra.mxu0 0
    %3470 = vmatprep.mubr.bf16.mxu0 0
    %3471 = vmatmul.mubr.bf16.gmra.mrb[0].mxu0 %v3436
    %v3472 = vpop.f32.mrb[0].mxu0
    %v3473 = vadd.f32 %v3421, %v3472
    %v3474 = vpop.f32.mrb[0].mxu0
    %v3475 = vpop.f32.mrb[0].mxu0
    %v3476 = vadd.f32 %v3421, %v3475
    %v3477 = vpop.f32.mrb[0].mxu0
    %3478 = vdwg.mxu0
    %v3479 = vadd.f32 %v3002, %v3473
    %v3480 = vadd.f32 %v3003, %v3476
    %3481 = vadd.xlane.f32.xlu0 %v3479
    %v3482 = vpop.xlane.xlu0 %3481
    %3483 = vadd.xlane.f32.xlu0 %v3480
    %v3484 = vpop.xlane.xlu0 %3483
    %v3485 = vmul.f32 %v3482, 0.03125
    %v3486 = vmul.f32 %v3484, 0.03125
    %v3487 = vmul.f32 %v3479, %v3479
    %v3488 = vmul.f32 %v3480, %v3480
    %3489 = vadd.xlane.f32.xlu0 %v3487
    %v3490 = vpop.xlane.xlu0 %3489
    %3491 = vadd.xlane.f32.xlu0 %v3488
    %v3492 = vpop.xlane.xlu0 %3491
    %v3493 = vmul.f32 %v3490, 0.03125
    %v3494 = vmul.f32 %v3492, 0.03125
    %v3495 = vmul.f32 %v3485, %v3485
    %v3496 = vmul.f32 %v3486, %v3486
    %v3497 = vsub.f32 %v3493, %v3495
    %v3498 = vsub.f32 %v3494, %v3496
    %v3499 = vsub.f32 %v3479, %v3485
    %v3500 = vsub.f32 %v3480, %v3486
    %v3501 = vadd.f32 %v3497, 1e-12
    %v3502 = vadd.f32 %v3498, 1e-12
    %v3503 = vrsqrt.pop %v3501
    %v3504 = vrsqrt.pop %v3502
    %v3505 = vmul.f32 %v3499, %v3503
    %v3506 = vmul.f32 %v3500, %v3504
    %v3508 = vlaneseq
    %v3509 = vshrl.u32 %v3508, 7
    %v3510 = vsub.s32 0, %v3509
    %v3511 = vrot.slane %v3073, %v3510
    %v3513 = vmul.f32 %v3505, %v3511
    %v3514 = vmul.f32 %v3506, %v3511
    %v3516 = vlaneseq
    %v3517 = vshrl.u32 %v3516, 7
    %v3518 = vsub.s32 0, %v3517
    %v3519 = vrot.slane %v3075, %v3518
    %v3521 = vadd.f32 %v3513, %v3519
    %v3522 = vadd.f32 %v3514, %v3519
    %v3523 = vpack.c.bf16 %v3522, %v3521
    %v3525 = vlaneseq
    %v3526 = vshrl.u32 %v3525, 7
    %v3527 = vsub.s32 0, %v3526
    %v3528 = vrot.slane %v3052, %v3527
    %v3546 = vunpack.c.l.b16 %v3035
    %v3547 = vunpack.c.l.b16 %v3036
    %v3548 = vunpack.c.l.b16 %v3037
    %v3549 = vunpack.c.l.b16 %v3038
    %v3550 = vunpack.c.l.b16 %v3039
    %v3551 = vunpack.c.l.b16 %v3040
    %v3552 = vunpack.c.l.b16 %v3041
    %v3553 = vunpack.c.l.b16 %v3042
    %v3554 = vunpack.c.l.b16 %v3043
    %v3555 = vunpack.c.l.b16 %v3044
    %v3556 = vunpack.c.l.b16 %v3045
    %v3557 = vunpack.c.l.b16 %v3046
    %v3558 = vunpack.c.l.b16 %v3047
    %v3559 = vunpack.c.l.b16 %v3048
    %v3560 = vunpack.c.l.b16 %v3049
    %v3561 = vunpack.c.l.b16 %v3050
    %v3562 = vpack.c.b16 %v3547, %v3546
    %v3563 = vpack.c.b16 %v3549, %v3548
    %v3564 = vpack.c.b16 %v3551, %v3550
    %v3565 = vpack.c.b16 %v3553, %v3552
    %v3566 = vpack.c.b16 %v3555, %v3554
    %v3567 = vpack.c.b16 %v3557, %v3556
    %v3568 = vpack.c.b16 %v3559, %v3558
    %v3569 = vpack.c.b16 %v3561, %v3560
    %3578 = vmatprep.subr.bf16.mxu0 0
    %3579 = vmatpush1.bf16.msra.mxu0 %v3562
    %3580 = vmatprep.subr.bf16.mxu0 0
    %3581 = vmatpush1.bf16.msra.mxu0 %v3563
    %3582 = vmatprep.subr.bf16.mxu0 0
    %3583 = vmatpush1.bf16.msra.mxu0 %v3564
    %3584 = vmatprep.subr.bf16.mxu0 0
    %3585 = vmatpush1.bf16.msra.mxu0 %v3565
    %3586 = vmatprep.subr.bf16.mxu0 0
    %3587 = vmatpush1.bf16.msra.mxu0 %v3566
    %3588 = vmatprep.subr.bf16.mxu0 0
    %3589 = vmatpush1.bf16.msra.mxu0 %v3567
    %3590 = vmatprep.subr.bf16.mxu0 0
    %3591 = vmatpush1.bf16.msra.mxu0 %v3568
    %3592 = vmatprep.subr.bf16.mxu0 0
    %3593 = vmatpush1.bf16.msra.mxu0 %v3569
    %3594 = vmatprep.subr.bf16.mxu0 0
    %3595 = vmatpush1.bf16.msra.mxu0 0
    %3596 = vmatprep.subr.bf16.mxu0 0
    %3597 = vmatpush1.bf16.msra.mxu0 0
    %3598 = vmatprep.subr.bf16.mxu0 0
    %3599 = vmatpush1.bf16.msra.mxu0 0
    %3600 = vmatprep.subr.bf16.mxu0 0
    %3601 = vmatpush1.bf16.msra.mxu0 0
    %3602 = vmatprep.subr.bf16.mxu0 0
    %3603 = vmatpush1.bf16.msra.mxu0 0
    %3604 = vmatprep.subr.bf16.mxu0 0
    %3605 = vmatpush1.bf16.msra.mxu0 0
    %3606 = vmatprep.subr.bf16.mxu0 0
    %3607 = vmatpush1.bf16.msra.mxu0 0
    %3608 = vmatprep.subr.bf16.mxu0 0
    %3609 = vmatpush1.bf16.msra.mxu0 0
    %3610 = vmatprep.mubr.bf16.mxu0 0
    %3611 = vmatmul.mubr.bf16.gmra.mrb[0].mxu0 %v3523
    %v3612 = vpop.f32.mrb[0].mxu0
    %v3613 = vadd.f32 %v3528, %v3612
    %v3614 = vpop.f32.mrb[0].mxu0
    %v3615 = vpop.f32.mrb[0].mxu0
    %v3616 = vadd.f32 %v3528, %v3615
    %v3617 = vpop.f32.mrb[0].mxu0
    %3618 = vdwg.mxu0
    %v3619 = vmul.f32 %v3613, 0.5
    %v3620 = vmul.f32 %v3616, 0.5
    %v3621 = vmul.f32 %v3613, 0.044715
    %v3622 = vmul.f32 %v3616, 0.044715
    %v3623 = vmul.f32 %v3621, %v3613
    %v3624 = vmul.f32 %v3622, %v3616
    %v3625 = vmul.f32 %v3623, %v3613
    %v3626 = vmul.f32 %v3624, %v3616
    %v3627 = vadd.f32 %v3613, %v3625
    %v3628 = vadd.f32 %v3616, %v3626
    %v3629 = vmul.f32 %v3627, 0.7978846
    %v3630 = vmul.f32 %v3628, 0.7978846
    %v3631 = vtanh.pop %v3629
    %v3632 = vtanh.pop %v3630
    %v3633 = vadd.f32 %v3631, 1.0
    %v3634 = vadd.f32 %v3632, 1.0
    %v3635 = vmul.f32 %v3619, %v3633
    %v3636 = vmul.f32 %v3620, %v3634
    %v3637 = vpack.c.bf16 %v3636, %v3635
    %v3639 = vlaneseq
    %v3640 = vshrl.u32 %v3639, 7
    %v3641 = vsub.s32 0, %v3640
    %v3642 = vrot.slane %v3071, %v3641
    %v3660 = vunpack.c.l.b16 %v3054
    %v3661 = vunpack.c.l.b16 %v3055
    %v3662 = vunpack.c.l.b16 %v3056
    %v3663 = vunpack.c.l.b16 %v3057
    %v3664 = vunpack.c.l.b16 %v3058
    %v3665 = vunpack.c.l.b16 %v3059
    %v3666 = vunpack.c.l.b16 %v3060
    %v3667 = vunpack.c.l.b16 %v3061
    %v3668 = vunpack.c.l.b16 %v3062
    %v3669 = vunpack.c.l.b16 %v3063
    %v3670 = vunpack.c.l.b16 %v3064
    %v3671 = vunpack.c.l.b16 %v3065
    %v3672 = vunpack.c.l.b16 %v3066
    %v3673 = vunpack.c.l.b16 %v3067
    %v3674 = vunpack.c.l.b16 %v3068
    %v3675 = vunpack.c.l.b16 %v3069
    %v3676 = vpack.c.b16 %v3661, %v3660
    %v3677 = vpack.c.b16 %v3663, %v3662
    %v3678 = vpack.c.b16 %v3665, %v3664
    %v3679 = vpack.c.b16 %v3667, %v3666
    %v3680 = vpack.c.b16 %v3669, %v3668
    %v3681 = vpack.c.b16 %v3671, %v3670
    %v3682 = vpack.c.b16 %v3673, %v3672
    %v3683 = vpack.c.b16 %v3675, %v3674
    %3692 = vmatprep.subr.bf16.mxu0 0
    %3693 = vmatpush1.bf16.msra.mxu0 %v3676
    %3694 = vmatprep.subr.bf16.mxu0 0
    %3695 = vmatpush1.bf16.msra.mxu0 %v3677
    %3696 = vmatprep.subr.bf16.mxu0 0
    %3697 = vmatpush1.bf16.msra.mxu0 %v3678
    %3698 = vmatprep.subr.bf16.mxu0 0
    %3699 = vmatpush1.bf16.msra.mxu0 %v3679
    %3700 = vmatprep.subr.bf16.mxu0 0
    %3701 = vmatpush1.bf16.msra.mxu0 %v3680
    %3702 = vmatprep.subr.bf16.mxu0 0
    %3703 = vmatpush1.bf16.msra.mxu0 %v3681
    %3704 = vmatprep.subr.bf16.mxu0 0
    %3705 = vmatpush1.bf16.msra.mxu0 %v3682
    %3706 = vmatprep.subr.bf16.mxu0 0
    %3707 = vmatpush1.bf16.msra.mxu0 %v3683
    %3708 = vmatprep.subr.bf16.mxu0 0
    %3709 = vmatpush1.bf16.msra.mxu0 0
    %3710 = vmatprep.subr.bf16.mxu0 0
    %3711 = vmatpush1.bf16.msra.mxu0 0
    %3712 = vmatprep.subr.bf16.mxu0 0
    %3713 = vmatpush1.bf16.msra.mxu0 0
    %3714 = vmatprep.subr.bf16.mxu0 0
    %3715 = vmatpush1.bf16.msra.mxu0 0
    %3716 = vmatprep.subr.bf16.mxu0 0
    %3717 = vmatpush1.bf16.msra.mxu0 0
    %3718 = vmatprep.subr.bf16.mxu0 0
    %3719 = vmatpush1.bf16.msra.mxu0 0
    %3720 = vmatprep.subr.bf16.mxu0 0
    %3721 = vmatpush1.bf16.msra.mxu0 0
    %3722 = vmatprep.subr.bf16.mxu0 0
    %3723 = vmatpush1.bf16.msra.mxu0 0
    %3724 = vmatprep.mubr.bf16.mxu0 0
    %3725 = vmatmul.mubr.bf16.gmra.mrb[0].mxu0 %v3637
    %v3726 = vpop.f32.mrb[0].mxu0
    %v3727 = vadd.f32 %v3642, %v3726
    %v3728 = vpop.f32.mrb[0].mxu0
    %v3729 = vpop.f32.mrb[0].mxu0
    %v3730 = vadd.f32 %v3642, %v3729
    %v3731 = vpop.f32.mrb[0].mxu0
    %3732 = vdwg.mxu0
    %v3733 = vadd.f32 %v3479, %v3727
    %v3734 = vadd.f32 %v3480, %v3730
    %v3736 = vrot.slane %v3734, 7
    %v3738 = vsel %vm1983, %v3733, %v3736
    %v3739 = vld [vmem:[#allocation34] sm:$0x1]
    %v3740 = vld [vmem:[#allocation35] sm:$0x1]
    %vm3741 = vcmask 1041408
    %v3742 = vsel %vm3741, %v3738, 0.0
    %3743 = vadd.xlane.f32.xlu0 %v3742
    %v3744 = vpop.xlane.xlu0 %3743
    %v3745 = vmul.f32 %v3744, 0.03125
    %v3746 = vmul.f32 %v3738, %v3738
    %v3747 = vsel %vm3741, %v3746, 0.0
    %3748 = vadd.xlane.f32.xlu0 %v3747
    %v3749 = vpop.xlane.xlu0 %3748
    %v3750 = vmul.f32 %v3749, 0.03125
    %v3751 = vmul.f32 %v3745, %v3745
    %v3752 = vsub.f32 %v3750, %v3751
    %v3753 = vsub.f32 %v3738, %v3745
    %v3754 = vadd.f32 %v3752, 1e-12
    %v3755 = vrsqrt.pop %v3754
    %v3756 = vmul.f32 %v3753, %v3755
    %v3758 = vlaneseq
    %v3759 = vshrl.u32 %v3758, 7
    %v3760 = vsub.s32 0, %v3759
    %v3761 = vrot.slane %v3739, %v3760
    %v3763 = vmul.f32 %v3756, %v3761
    %v3765 = vlaneseq
    %v3766 = vshrl.u32 %v3765, 7
    %v3767 = vsub.s32 0, %v3766
    %v3768 = vrot.slane %v3740, %v3767
    %v3770 = vadd.f32 %v3763, %v3768
    %v3771 = vpack.c.bf16 %v3770, %v3770
    %v3772 = vld [vmem:[%s73] sm:$0xf]
    %v3773 = vld [vmem:[%s73 + $0x4] sm:$0xf]
    %v3774 = vld [vmem:[%s73 + $0x8] sm:$0xf]
    %v3775 = vld [vmem:[%s73 + $0xc] sm:$0xf]
    %v3776 = vld [vmem:[%s73 + $0x10] sm:$0xf]
    %v3777 = vld [vmem:[%s73 + $0x14] sm:$0xf]
    %v3778 = vld [vmem:[%s73 + $0x18] sm:$0xf]
    %v3779 = vld [vmem:[%s73 + $0x1c] sm:$0xf]
    %v3780 = vld [vmem:[%s73 + $0x20] sm:$0xf]
    %v3781 = vld [vmem:[%s73 + $0x24] sm:$0xf]
    %v3782 = vld [vmem:[%s73 + $0x28] sm:$0xf]
    %v3783 = vld [vmem:[%s73 + $0x2c] sm:$0xf]
    %v3784 = vld [vmem:[%s73 + $0x30] sm:$0xf]
    %v3785 = vld [vmem:[%s73 + $0x34] sm:$0xf]
    %v3786 = vld [vmem:[%s73 + $0x38] sm:$0xf]
    %v3787 = vld [vmem:[%s73 + $0x3c] sm:$0xf]
    %v3788 = vld [vmem:[%s75] sm:$0x1]
    %v3790 = vlaneseq
    %v3791 = vshrl.u32 %v3790, 7
    %v3792 = vsub.s32 0, %v3791
    %v3793 = vrot.slane %v3788, %v3792
    %v3811 = vunpack.c.l.b16 %v3772
    %v3812 = vunpack.c.l.b16 %v3773
    %v3813 = vunpack.c.l.b16 %v3774
    %v3814 = vunpack.c.l.b16 %v3775
    %v3815 = vunpack.c.l.b16 %v3776
    %v3816 = vunpack.c.l.b16 %v3777
    %v3817 = vunpack.c.l.b16 %v3778
    %v3818 = vunpack.c.l.b16 %v3779
    %v3819 = vunpack.c.l.b16 %v3780
    %v3820 = vunpack.c.l.b16 %v3781
    %v3821 = vunpack.c.l.b16 %v3782
    %v3822 = vunpack.c.l.b16 %v3783
    %v3823 = vunpack.c.l.b16 %v3784
    %v3824 = vunpack.c.l.b16 %v3785
    %v3825 = vunpack.c.l.b16 %v3786
    %v3826 = vunpack.c.l.b16 %v3787
    %v3827 = vpack.c.b16 %v3812, %v3811
    %v3828 = vpack.c.b16 %v3814, %v3813
    %v3829 = vpack.c.b16 %v3816, %v3815
    %v3830 = vpack.c.b16 %v3818, %v3817
    %v3831 = vpack.c.b16 %v3820, %v3819
    %v3832 = vpack.c.b16 %v3822, %v3821
    %v3833 = vpack.c.b16 %v3824, %v3823
    %v3834 = vpack.c.b16 %v3826, %v3825
    %3843 = vmatprep.subr.bf16.mxu0 0
    %3844 = vmatpush1.bf16.msra.mxu0 %v3827
    %3845 = vmatprep.subr.bf16.mxu0 0
    %3846 = vmatpush1.bf16.msra.mxu0 %v3828
    %3847 = vmatprep.subr.bf16.mxu0 0
    %3848 = vmatpush1.bf16.msra.mxu0 %v3829
    %3849 = vmatprep.subr.bf16.mxu0 0
    %3850 = vmatpush1.bf16.msra.mxu0 %v3830
    %3851 = vmatprep.subr.bf16.mxu0 0
    %3852 = vmatpush1.bf16.msra.mxu0 %v3831
    %3853 = vmatprep.subr.bf16.mxu0 0
    %3854 = vmatpush1.bf16.msra.mxu0 %v3832
    %3855 = vmatprep.subr.bf16.mxu0 0
    %3856 = vmatpush1.bf16.msra.mxu0 %v3833
    %3857 = vmatprep.subr.bf16.mxu0 0
    %3858 = vmatpush1.bf16.msra.mxu0 %v3834
    %3859 = vmatprep.subr.bf16.mxu0 0
    %3860 = vmatpush1.bf16.msra.mxu0 0
    %3861 = vmatprep.subr.bf16.mxu0 0
    %3862 = vmatpush1.bf16.msra.mxu0 0
    %3863 = vmatprep.subr.bf16.mxu0 0
    %3864 = vmatpush1.bf16.msra.mxu0 0
    %3865 = vmatprep.subr.bf16.mxu0 0
    %3866 = vmatpush1.bf16.msra.mxu0 0
    %3867 = vmatprep.subr.bf16.mxu0 0
    %3868 = vmatpush1.bf16.msra.mxu0 0
    %3869 = vmatprep.subr.bf16.mxu0 0
    %3870 = vmatpush1.bf16.msra.mxu0 0
    %3871 = vmatprep.subr.bf16.mxu0 0
    %3872 = vmatpush1.bf16.msra.mxu0 0
    %3873 = vmatprep.subr.bf16.mxu0 0
    %3874 = vmatpush1.bf16.msra.mxu0 0
    %3875 = vmatprep.mubr.bf16.mxu0 0
    %3876 = vmatmul.mubr.bf16.gmra.mrb[0].mxu0 %v3771
    %v3877 = vpop.f32.mrb[0].mxu0
    %v3878 = vadd.f32 %v3793, %v3877
    %v3879 = vpop.f32.mrb[0].mxu0
    %v3880 = vpop.f32.mrb[0].mxu0
    %v3881 = vpop.f32.mrb[0].mxu0
    %3882 = vdwg.mxu0
    %v3883 = vtanh.pop %v3878
    %v3884 = vpack.c.bf16 %v2097, %v2097
    %v3885 = vld [vmem:[%s77] sm:$0xf]
    %v3886 = vld [vmem:[%s77 + $0x4] sm:$0xf]
    %v3887 = vld [vmem:[%s77 + $0x8] sm:$0xf]
    %v3888 = vld [vmem:[%s77 + $0xc] sm:$0xf]
    %v3889 = vld [vmem:[%s77 + $0x10] sm:$0xf]
    %v3890 = vld [vmem:[%s77 + $0x14] sm:$0xf]
    %v3891 = vld [vmem:[%s77 + $0x18] sm:$0xf]
    %v3892 = vld [vmem:[%s77 + $0x1c] sm:$0xf]
    %v3893 = vld [vmem:[%s77 + $0x20] sm:$0xf]
    %v3894 = vld [vmem:[%s77 + $0x24] sm:$0xf]
    %v3895 = vld [vmem:[%s77 + $0x28] sm:$0xf]
    %v3896 = vld [vmem:[%s77 + $0x2c] sm:$0xf]
    %v3897 = vld [vmem:[%s77 + $0x30] sm:$0xf]
    %v3898 = vld [vmem:[%s77 + $0x34] sm:$0xf]
    %v3899 = vld [vmem:[%s77 + $0x38] sm:$0xf]
    %v3900 = vld [vmem:[%s77 + $0x3c] sm:$0xf]
    %v3901 = vpack.c.bf16 %v3883, %v3883
    %v3902 = vld [vmem:[%s79] sm:$0xf]
    %v3903 = vld [vmem:[%s79 + $0x4] sm:$0xf]
    %v3904 = vld [vmem:[%s79 + $0x8] sm:$0xf]
    %v3905 = vld [vmem:[%s79 + $0xc] sm:$0xf]
    %v3906 = vld [vmem:[%s79 + $0x10] sm:$0xf]
    %v3907 = vld [vmem:[%s79 + $0x14] sm:$0xf]
    %v3908 = vld [vmem:[%s79 + $0x18] sm:$0xf]
    %v3909 = vld [vmem:[%s79 + $0x1c] sm:$0xf]
    %v3910 = vld [vmem:[%s79 + $0x20] sm:$0xf]
    %v3911 = vld [vmem:[%s79 + $0x24] sm:$0xf]
    %v3912 = vld [vmem:[%s79 + $0x28] sm:$0xf]
    %v3913 = vld [vmem:[%s79 + $0x2c] sm:$0xf]
    %v3914 = vld [vmem:[%s79 + $0x30] sm:$0xf]
    %v3915 = vld [vmem:[%s79 + $0x34] sm:$0xf]
    %v3916 = vld [vmem:[%s79 + $0x38] sm:$0xf]
    %v3917 = vld [vmem:[%s79 + $0x3c] sm:$0xf]
    %v3934 = vunpack.c.l.b16 %v3902
    %v3935 = vunpack.c.l.b16 %v3903
    %v3936 = vunpack.c.l.b16 %v3904
    %v3937 = vunpack.c.l.b16 %v3905
    %v3938 = vunpack.c.l.b16 %v3906
    %v3939 = vunpack.c.l.b16 %v3907
    %v3940 = vunpack.c.l.b16 %v3908
    %v3941 = vunpack.c.l.b16 %v3909
    %v3942 = vunpack.c.l.b16 %v3910
    %v3943 = vunpack.c.l.b16 %v3911
    %v3944 = vunpack.c.l.b16 %v3912
    %v3945 = vunpack.c.l.b16 %v3913
    %v3946 = vunpack.c.l.b16 %v3914
    %v3947 = vunpack.c.l.b16 %v3915
    %v3948 = vunpack.c.l.b16 %v3916
    %v3949 = vunpack.c.l.b16 %v3917
    %v3950 = vpack.c.b16 %v3935, %v3934
    %v3951 = vpack.c.b16 %v3937, %v3936
    %v3952 = vpack.c.b16 %v3939, %v3938
    %v3953 = vpack.c.b16 %v3941, %v3940
    %v3954 = vpack.c.b16 %v3943, %v3942
    %v3955 = vpack.c.b16 %v3945, %v3944
    %v3956 = vpack.c.b16 %v3947, %v3946
    %v3957 = vpack.c.b16 %v3949, %v3948
    %3966 = vmatprep.subr.bf16.mxu0 0
    %3967 = vmatpush1.bf16.msra.mxu0 %v3950
    %3968 = vmatprep.subr.bf16.mxu0 0
    %3969 = vmatpush1.bf16.msra.mxu0 %v3951
    %3970 = vmatprep.subr.bf16.mxu0 0
    %3971 = vmatpush1.bf16.msra.mxu0 %v3952
    %3972 = vmatprep.subr.bf16.mxu0 0
    %3973 = vmatpush1.bf16.msra.mxu0 %v3953
    %3974 = vmatprep.subr.bf16.mxu0 0
    %3975 = vmatpush1.bf16.msra.mxu0 %v3954
    %3976 = vmatprep.subr.bf16.mxu0 0
    %3977 = vmatpush1.bf16.msra.mxu0 %v3955
    %3978 = vmatprep.subr.bf16.mxu0 0
    %3979 = vmatpush1.bf16.msra.mxu0 %v3956
    %3980 = vmatprep.subr.bf16.mxu0 0
    %3981 = vmatpush1.bf16.msra.mxu0 %v3957
    %3982 = vmatprep.subr.bf16.mxu0 0
    %3983 = vmatpush1.bf16.msra.mxu0 0
    %3984 = vmatprep.subr.bf16.mxu0 0
    %3985 = vmatpush1.bf16.msra.mxu0 0
    %3986 = vmatprep.subr.bf16.mxu0 0
    %3987 = vmatpush1.bf16.msra.mxu0 0
    %3988 = vmatprep.subr.bf16.mxu0 0
    %3989 = vmatpush1.bf16.msra.mxu0 0
    %3990 = vmatprep.subr.bf16.mxu0 0
    %3991 = vmatpush1.bf16.msra.mxu0 0
    %3992 = vmatprep.subr.bf16.mxu0 0
    %3993 = vmatpush1.bf16.msra.mxu0 0
    %3994 = vmatprep.subr.bf16.mxu0 0
    %3995 = vmatpush1.bf16.msra.mxu0 0
    %3996 = vmatprep.subr.bf16.mxu0 0
    %3997 = vmatpush1.bf16.msra.mxu0 0
    %3998 = vmatprep.mubr.bf16.mxu0 0
    %3999 = vmatmul.mubr.bf16.gmra.mrb[0].mxu0 %v3901
    %v4000 = vpop.f32.mrb[0].mxu0
    %v4001 = vadd.f32 0.0, %v4000
    %v4002 = vpop.f32.mrb[0].mxu0
    %v4003 = vpop.f32.mrb[0].mxu0
    %v4004 = vpop.f32.mrb[0].mxu0
    %4005 = vdwg.mxu0
    %v4022 = vunpack.c.l.b16 %v3885
    %v4023 = vunpack.c.l.b16 %v3886
    %v4024 = vunpack.c.l.b16 %v3887
    %v4025 = vunpack.c.l.b16 %v3888
    %v4026 = vunpack.c.l.b16 %v3889
    %v4027 = vunpack.c.l.b16 %v3890
    %v4028 = vunpack.c.l.b16 %v3891
    %v4029 = vunpack.c.l.b16 %v3892
    %v4030 = vunpack.c.l.b16 %v3893
    %v4031 = vunpack.c.l.b16 %v3894
    %v4032 = vunpack.c.l.b16 %v3895
    %v4033 = vunpack.c.l.b16 %v3896
    %v4034 = vunpack.c.l.b16 %v3897
    %v4035 = vunpack.c.l.b16 %v3898
    %v4036 = vunpack.c.l.b16 %v3899
    %v4037 = vunpack.c.l.b16 %v3900
    %v4038 = vpack.c.b16 %v4023, %v4022
    %v4039 = vpack.c.b16 %v4025, %v4024
    %v4040 = vpack.c.b16 %v4027, %v4026
    %v4041 = vpack.c.b16 %v4029, %v4028
    %v4042 = vpack.c.b16 %v4031, %v4030
    %v4043 = vpack.c.b16 %v4033, %v4032
    %v4044 = vpack.c.b16 %v4035, %v4034
    %v4045 = vpack.c.b16 %v4037, %v4036
    %4054 = vmatprep.subr.bf16.mxu0 0
    %4055 = vmatpush1.bf16.msra.mxu0 %v4038
    %4056 = vmatprep.subr.bf16.mxu0 0
    %4057 = vmatpush1.bf16.msra.mxu0 %v4039
    %4058 = vmatprep.subr.bf16.mxu0 0
    %4059 = vmatpush1.bf16.msra.mxu0 %v4040
    %4060 = vmatprep.subr.bf16.mxu0 0
    %4061 = vmatpush1.bf16.msra.mxu0 %v4041
    %4062 = vmatprep.subr.bf16.mxu0 0
    %4063 = vmatpush1.bf16.msra.mxu0 %v4042
    %4064 = vmatprep.subr.bf16.mxu0 0
    %4065 = vmatpush1.bf16.msra.mxu0 %v4043
    %4066 = vmatprep.subr.bf16.mxu0 0
    %4067 = vmatpush1.bf16.msra.mxu0 %v4044
    %4068 = vmatprep.subr.bf16.mxu0 0
    %4069 = vmatpush1.bf16.msra.mxu0 %v4045
    %4070 = vmatprep.subr.bf16.mxu0 0
    %4071 = vmatpush1.bf16.msra.mxu0 0
    %4072 = vmatprep.subr.bf16.mxu0 0
    %4073 = vmatpush1.bf16.msra.mxu0 0
    %4074 = vmatprep.subr.bf16.mxu0 0
    %4075 = vmatpush1.bf16.msra.mxu0 0
    %4076 = vmatprep.subr.bf16.mxu0 0
    %4077 = vmatpush1.bf16.msra.mxu0 0
    %4078 = vmatprep.subr.bf16.mxu0 0
    %4079 = vmatpush1.bf16.msra.mxu0 0
    %4080 = vmatprep.subr.bf16.mxu0 0
    %4081 = vmatpush1.bf16.msra.mxu0 0
    %4082 = vmatprep.subr.bf16.mxu0 0
    %4083 = vmatpush1.bf16.msra.mxu0 0
    %4084 = vmatprep.subr.bf16.mxu0 0
    %4085 = vmatpush1.bf16.msra.mxu0 0
    %4086 = vmatprep.mubr.bf16.mxu0 0
    %4087 = vmatmul.mubr.bf16.gmra.mrb[0].mxu0 %v3884
    %v4088 = vpop.f32.mrb[0].mxu0
    %v4089 = vadd.f32 %v4001, %v4088
    %v4090 = vpop.f32.mrb[0].mxu0
    %v4091 = vpop.f32.mrb[0].mxu0
    %v4092 = vpop.f32.mrb[0].mxu0
    %4093 = vdwg.mxu0
    %v4094 = vld [vmem:[#allocation37] sm:$0x1]
    %v4096 = vlaneseq
    %v4097 = vshrl.u32 %v4096, 7
    %v4098 = vsub.s32 0, %v4097
    %v4099 = vrot.slane %v4094, %v4098
    %v4101 = vadd.f32 %v4089, %v4099
    %4102 = vst [vmem:[#allocation38] sm:$0x3] %v4101
    %4103 = vst [vmem:[%s85] sm:$0x3] %v2097
    %4104 = vst [vmem:[%s87] sm:$0x3] %v3883
    // Predicated region
    $region258: #{_lambda_.1} parent=1 // pred_check
      _
    $region259: #{_lambda_.1} parent=1 // pred_check_branch
      %4106 = sbr.rel (0) target = $region261
    $region260: #{_lambda_.1} parent=1 // pred_region
      %s4108 = ssub.s32 32, 32
      %4109 = vsyncadd [#allocation4], %s4108
      %s4111 = sshll.u32 [#allocation38], 4
      %s4112 = int_to_ptr.vmem [resolvable:$true] %s4111
      %4114 = dma.vmem_to_hbm [thread:$0]  %s4112, 32, %s83, [#allocation4]
    $region261: #{_lambda_.1} parent=1 // pred_fallthru
      _
    // Predicated region
    $region262: #{_lambda_.1} parent=1 // pred_check
      _
    $region263: #{_lambda_.1} parent=1 // pred_check_branch
      %4116 = sbr.rel (0) target = $region265
    $region264: #{_lambda_.1} parent=1 // pred_region
      _
    $region265: #{_lambda_.1} parent=1 // pred_fallthru
      _
    // Predicated region
    $region266: #{_lambda_.1} parent=1 // pred_check
      _
    $region267: #{_lambda_.1} parent=1 // pred_check_branch
      %4118 = sbr.rel (0) target = $region269
    $region268: #{_lambda_.1} parent=1 // pred_region
      _
    $region269: #{_lambda_.1} parent=1 // pred_fallthru
      _
    // Predicated region
    $region270: #{_lambda_.1} parent=1 // pred_check
      _
    $region271: #{_lambda_.1} parent=1 // pred_check_branch
      %4120 = sbr.rel (0) target = $region273
    $region272: #{_lambda_.1} parent=1 // pred_region
      %4121 = dma.done [#allocation4], 32
    $region273: #{_lambda_.1} parent=1 // pred_fallthru
      _
    // Predicated region
    $region274: #{_lambda_.1} parent=1 // pred_check
      _
    $region275: #{_lambda_.1} parent=1 // pred_check_branch
      %4123 = sbr.rel (0) target = $region277
    $region276: #{_lambda_.1} parent=1 // pred_region
      _
    $region277: #{_lambda_.1} parent=1 // pred_fallthru
      _
    // Predicated region
    $region278: #{_lambda_.1} parent=1 // pred_check
      _
    $region279: #{_lambda_.1} parent=1 // pred_check_branch
      %4125 = sbr.rel (0) target = $region281
    $region280: #{_lambda_.1} parent=1 // pred_region
      _
    $region281: #{_lambda_.1} parent=1 // pred_fallthru
      _
    %4126 = vsyncpa [#allocation3], 1
    %4127 = vsyncpa [#allocation6], 1
    %4128 = vsyncpa [#allocation9], 1
    %4129 = vsyncpa [#allocation12], 1
    %4130 = vsyncpa [#allocation15], 1
    %4131 = vsyncpa [#allocation18], 1
    %4132 = vsyncpa [#allocation21], 1
    %4133 = vsyncpa [#allocation24], 1
    %4134 = vsyncpa [#allocation27], 1
    %4135 = vsyncpa [#allocation30], 1
    %4136 = vsyncpa [#allocation33], 1
    %4137 = vsyncpa [#allocation36], 1
    %4138 = vsyncpa [#allocation4], 1

</llo_original>
